<compile_context>
chip_gen: v7x
topology: tpu7x:2x2x1
jax: 0.10.0
libtpu: 0.0.40
codegen_flags: <defaults>
</compile_context>

<pallas_src>
import functools

import jax
import jax.numpy as jnp
from jax.experimental import pallas as pl
from jax.experimental.pallas import tpu as pltpu

F32 = jnp.float32
BF16 = jnp.bfloat16

# Model hyper-parameters (module defaults).
INPUT_SIZE = 20            # L0
OUTPUT_SIZE = 200
DENSESIZE = 512
L0, L1, L2 = 20, 10, 4     # lengths after pool1 (k2 s2) and pool2 (k4 s2)
C1, C2, C3 = 128, 96, 32
FLAT = C3 * L2             # 128
D1, D2 = DENSESIZE * 2, DENSESIZE    # 1024, 512
OUT_PAD = 256              # fc output lane-padded to a multiple of 128
XCOLS = L0 + 4             # [left pad | x0..x19 | right pad | ones | zero]


def yang21_kernel(x_ref, w1p_ref, w2_ref, b2_ref, w3_ref, b3_ref, lmask_ref,
                  wd1_ref, bd1_ref, wd2_ref, bd2_ref, wfc_ref, bfc_ref,
                  o_ref, *, tb):
    x = x_ref[0]                                          # (tb, 24) f32, lane-dense

    # conv1 (Cin=1, k3, p1) + ReLU + MaxPool1d(2,2), fused.  Pool output j is
    # one tiny MXU matmul: lanes 0:128 hold the conv at position 2j and lanes
    # 128:256 the conv at 2j+1; the bias rides on the ones column of x.
    # relu/max commute, so pooling before the ReLU is exact.
    chunks = []
    for j in range(L1):
        y = jnp.dot(x, w1p_ref[j], preferred_element_type=F32)     # (tb, 256)
        chunks.append(
            jnp.maximum(jnp.maximum(y[:, :C1], y[:, C1:]), 0.0).astype(BF16))

    zc = jnp.zeros((tb, C1), BF16)

    # conv2 (128 -> 96, zero-padded to 128, k3, p1) + ReLU.  l-major bf16 slab
    # with one zero boundary chunk each side; the 3 taps are 3 accumulated
    # K=128 matmuls on shifted sublane slices (good on v5e/v6e/v7x alike; no
    # 384-lane concat is materialized).
    h1p = jnp.concatenate([zc] + chunks + [zc], axis=0)            # (12*tb, 128)
    h2 = (jnp.dot(h1p[0:L1 * tb], w2_ref[0], preferred_element_type=F32)
          + jnp.dot(h1p[tb:(L1 + 1) * tb], w2_ref[1], preferred_element_type=F32)
          + jnp.dot(h1p[2 * tb:(L1 + 2) * tb], w2_ref[2],
                    preferred_element_type=F32))
    h2 = jnp.maximum(h2 + b2_ref[...], 0.0)                        # (10*tb, 128) f32

    # MaxPool1d(4, 2): static chunk slices + maximum (VPU only).
    chunks2 = []
    for j in range(L2):
        m = h2[2 * j * tb:(2 * j + 1) * tb]
        for i in range(1, 4):
            m = jnp.maximum(m, h2[(2 * j + i) * tb:(2 * j + i + 1) * tb])
        chunks2.append(m.astype(BF16))

    # conv3 (96 -> 32, k3, p1) + ReLU, same 3-tap pattern.  Output channels are
    # replicated 4x (one copy per length position) so the flatten is mask+add.
    # TODO(synk): Dropout(p=0.2) is train-only; eval-mode forward implemented.
    h2p = jnp.concatenate([zc] + chunks2 + [zc], axis=0)           # (6*tb, 128)
    h3 = (jnp.dot(h2p[0:L2 * tb], w3_ref[0], preferred_element_type=F32)
          + jnp.dot(h2p[tb:(L2 + 1) * tb], w3_ref[1], preferred_element_type=F32)
          + jnp.dot(h2p[2 * tb:(L2 + 2) * tb], w3_ref[2],
                    preferred_element_type=F32))
    h3 = jnp.maximum(h3 + b3_ref[...], 0.0)                        # (4*tb, 128) f32

    # Flatten to (tb, 128): lane block l <- row chunk l via a precomputed
    # one-hot lane mask (no iota/compares inside the loop).
    feat = h3[0:tb] * lmask_ref[0:1]
    for l in range(1, L2):
        feat = feat + h3[l * tb:(l + 1) * tb] * lmask_ref[l:l + 1]

    # dense1 + dense2 + fc: bf16 operands, f32 accumulation, M = tb.
    d1 = jnp.maximum(jnp.dot(feat.astype(BF16), wd1_ref[...],
                             preferred_element_type=F32) + bd1_ref[...], 0.0)
    d2 = jnp.maximum(jnp.dot(d1.astype(BF16), wd2_ref[...],
                             preferred_element_type=F32) + bd2_ref[...], 0.0)
    o_ref[0] = (jnp.dot(d2.astype(BF16), wfc_ref[...],
                        preferred_element_type=F32) + bfc_ref[...])  # (tb, 256)


# --------------------------------------------------------------------------
# Parameters (PyTorch layout -> kernel layout) and wrapper.
# --------------------------------------------------------------------------
def init_torch_params(key):
    """PyTorch-layout params matching Yang21CNN.initialize_weights():
    xavier_uniform conv weights, N(0, 0.01) linear weights, zero biases."""
    k1, k2, k3, k4, k5, k6 = jax.random.split(key, 6)

    def xavier_uniform(k, cout, cin, ksz):
        bound = (6.0 / (cin * ksz + cout * ksz)) ** 0.5
        return jax.random.uniform(k, (cout, cin, ksz), F32, -bound, bound)

    w1 = xavier_uniform(k1, C1, 1, 3)
    w2 = xavier_uniform(k2, C2, C1, 3)
    w3 = xavier_uniform(k3, C3, C2, 3)
    wd1 = 0.01 * jax.random.normal(k4, (D1, FLAT), F32)
    wd2 = 0.01 * jax.random.normal(k5, (D2, D1), F32)
    wfc = 0.01 * jax.random.normal(k6, (OUTPUT_SIZE, D2), F32)
    zeros = lambda n: jnp.zeros((n,), F32)
    return (w1, zeros(C1), w2, zeros(C2), w3, zeros(C3),
            wd1, zeros(D1), wd2, zeros(D2), wfc, zeros(OUTPUT_SIZE))


def prepare_params(tparams):
    """PyTorch layout -> kernel layout (fused / padded / transposed, bf16 for
    the MXU-heavy weights)."""
    (w1_t, b1_t, w2_t, b2_t, w3_t, b3_t,
     wd1_t, bd1_t, wd2_t, bd2_t, wfc_t, bfc_t) = tparams

    # conv1 + pool1 fused weights: for pool output j, lanes 0:128 are the conv
    # at position 2j and lanes 128:256 the conv at 2j+1.  LHS columns are the
    # zero-padded input (col p+1 == position p) plus a ones column carrying
    # the bias and one spare zero column (sublane-friendly K=24).
    w1p = jnp.zeros((L1, XCOLS, 2 * C1), F32)
    for k in range(3):
        tap = w1_t[:, 0, k]                               # (128,)
        for j in range(L1):
            w1p = w1p.at[j, 2 * j + k, :C1].set(tap)      # conv position 2j
            w1p = w1p.at[j, 2 * j + 1 + k, C1:].set(tap)  # conv position 2j+1
    w1p = w1p.at[:, L0 + 2, :C1].set(b1_t)                # bias via ones column
    w1p = w1p.at[:, L0 + 2, C1:].set(b1_t)

    # conv2: per-tap (Cin=128, Cout 96 zero-padded to 128) matrices, bf16.
    w2 = jnp.zeros((3, C1, C1), F32)
    for k in range(3):
        w2 = w2.at[k, :, :C2].set(w2_t[:, :, k].T)
    b2 = jnp.zeros((1, C1), F32).at[0, :C2].set(b2_t)

    # conv3: Cin zero-padded 96->128 (rows); Cout replicated 4x (one copy per
    # length position) so the flatten is mask+add only.  bf16.
    w3 = jnp.zeros((3, C1, C3 * L2), F32)
    for k in range(3):
        w3 = w3.at[k, :C2, :].set(jnp.tile(w3_t[:, :, k].T, (1, L2)))
    b3 = jnp.tile(b3_t, (L2,)).reshape(1, C3 * L2)

    # Flatten selection mask: row l is one on lane block l.
    lmask = jnp.zeros((L2, FLAT), F32)
    for l in range(L2):
        lmask = lmask.at[l, l * C3:(l + 1) * C3].set(1.0)

    # dense1: PyTorch flatten index c*4 + l  ->  kernel feature index l*32 + c.
    wd1 = wd1_t.T.reshape(C3, L2, D1).transpose(1, 0, 2).reshape(FLAT, D1)
    bd1 = bd1_t.reshape(1, D1)
    wd2 = wd2_t.T
    bd2 = bd2_t.reshape(1, D2)
    # fc: pad output lanes 200 -> 256 for unmasked lane-dense stores.
    wfc = jnp.zeros((D2, OUT_PAD), F32).at[:, :OUTPUT_SIZE].set(wfc_t.T)
    bfc = jnp.zeros((1, OUT_PAD), F32).at[:, :OUTPUT_SIZE].set(bfc_t)

    return (w1p, w2.astype(BF16), b2, w3.astype(BF16), b3, lmask,
            wd1.astype(BF16), bd1, wd2.astype(BF16), bd2,
            wfc.astype(BF16), bfc)


def _round_up(n, m):
    return (n + m - 1) // m * m


def _default_tb_max():
    # v5e/v6e (128 MiB VMEM): fatter steps; v7x (64 MiB per TC): stay at 256.
    try:
        if pltpu.get_tpu_info().vmem_capacity_bytes >= 96 * 1024 * 1024:
            return 512
    except Exception:
        pass
    return 256


def _choose_tb(batch, tb_max):
    """Samples per grid step: multiple of 8, <= tb_max, and (when the batch
    allows) >= 2 grid steps so both v7x TensorCores get work, minimal pad."""
    if batch <= 8:
        return 8
    steps = max(2, -(-batch // tb_max))
    return max(8, min(tb_max, _round_up(-(-batch // steps), 8)))


@functools.partial(jax.jit, static_argnames=("tb_max",))
def _forward_jit(x_ncl, params, tb_max):
    B = x_ncl.shape[0]
    tb = _choose_tb(B, tb_max)
    b_pad = _round_up(B, tb)
    g = b_pad // tb

    # NCL -> lane-dense (g, tb, 24): [zero | x0..x19 | zero | ones | zero].
    x2d = x_ncl.astype(F32).reshape(B, L0)
    x2d = jnp.pad(x2d, ((0, b_pad - B), (1, 1)))
    x2d = jnp.concatenate(
        [x2d, jnp.ones((b_pad, 1), F32), jnp.zeros((b_pad, 1), F32)], axis=1)
    x_in = x2d.reshape(g, tb, XCOLS)

    def zmap(n):
        return lambda i: (0,) * n

    in_specs = [pl.BlockSpec((1, tb, XCOLS), lambda i: (i, 0, 0))]
    in_specs += [pl.BlockSpec(c.shape, zmap(c.ndim)) for c in params]

    out = pl.pallas_call(
        functools.partial(yang21_kernel, tb=tb),
        out_shape=jax.ShapeDtypeStruct((g, tb, OUT_PAD), F32),
        grid=(g,),
        in_specs=in_specs,
        out_specs=pl.BlockSpec((1, tb, OUT_PAD), lambda i: (i, 0, 0)),
        compiler_params=pltpu.CompilerParams(
            dimension_semantics=("parallel",),
            vmem_limit_bytes=48 * 1024 * 1024),
    )(x_in, *params)
    return out.reshape(b_pad, OUT_PAD)[:B, :OUTPUT_SIZE]


def yang21cnn_forward(x_ncl, params, tb_max=None):
    """x_ncl: (B, 1, 20) float32 (PyTorch NCL) -> (B, 200) float32."""
    if tb_max is None:
        tb_max = _default_tb_max()
    return _forward_jit(x_ncl, params, tb_max)


# --------------------------------------------------------------------------
# Pure-JAX reference (PyTorch layouts).  matmul_dtype=bf16 mimics the kernel's
# mixed precision (bf16 operands, f32 accumulation) for a sharp parity check.
# --------------------------------------------------------------------------
def reference_forward(x_ncl, tparams, matmul_dtype=jnp.float32):
    (w1, b1, w2, b2, w3, b3, wd1, bd1, wd2, bd2, wfc, bfc) = tparams
    md = matmul_dtype

    def conv1d_same(x, w, b, dt):                 # x: (B, Cin, L), w: (Cout, Cin, 3)
        L = x.shape[2]
        xp = jnp.pad(x, ((0, 0), (0, 0), (1, 1))).astype(dt)
        wc = w.astype(dt)
        y = sum(jnp.einsum('bcl,oc->bol', xp[:, :, k:k + L], wc[:, :, k],
                           preferred_element_type=jnp.float32)
                for k in range(3))
        return y + b[None, :, None]

    def maxpool1d(x, k, s):
        n = (x.shape[2] - k) // s + 1
        return jnp.stack([x[:, :, i * s:i * s + k].max(axis=2)
                          for i in range(n)], axis=2)

    def linear(x, w, b, dt):
        return jnp.dot(x.astype(dt), w.T.astype(dt),
                       preferred_element_type=jnp.float32) + b

    h = maxpool1d(jax.nn.relu(conv1d_same(x_ncl.astype(F32), w1, b1, F32)), 2, 2)
    h = maxpool1d(jax.nn.relu(conv1d_same(h, w2, b2, md)), 4, 2)
    h = jax.nn.relu(conv1d_same(h, w3, b3, md))
    f = h.reshape(h.shape[0], -1)                 # (B, C*L), index c*4 + l
    d = jax.nn.relu(linear(f, wd1, bd1, md))
    d = jax.nn.relu(linear(d, wd2, bd2, md))
    return linear(d, wfc, bfc, md)


if __name__ == "__main__":
    key = jax.random.PRNGKey(0)
    kx, kp = jax.random.split(key)
    tparams = init_torch_params(kp)
    kparams = prepare_params(tparams)

    def max_rel_err(y, y_ref):
        scale = jnp.maximum(jnp.max(jnp.abs(y_ref)), 1e-12)
        return float(jnp.max(jnp.abs(y - y_ref)) / scale)

    # Small smoke test (B=2) plus a multi-grid-step test (B=100) that exercises
    # the batched packing, batch padding and the "parallel" grid path.
    for B in (2, 100):
        x = jax.random.normal(jax.random.fold_in(kx, B), (B, 1, INPUT_SIZE), F32)
        y = yang21cnn_forward(x, kparams)
        jax.block_until_ready(y)
        assert y.shape == (B, OUTPUT_SIZE) and y.dtype == F32

        # Sharp check: reference using the same bf16-operand matmuls.
        e_bf16 = max_rel_err(y, reference_forward(x, tparams, jnp.bfloat16))
        # Sanity check vs. the pure-f32 reference (bf16 operand rounding only).
        e_f32 = max_rel_err(y, reference_forward(x, tparams, jnp.float32))
        assert e_bf16 < 0.05, (B, e_bf16)
        assert e_f32 < 0.25, (B, e_f32)

    print("KERNEL_OK")
</pallas_src>

<mosaic_0001>
module attributes {stable_mosaic.version = 11 : i64} {
  func.func @yang21_kernel(%arg0: i32, %arg1: memref<1x8x24xf32, #tpu.memory_space<vmem>>, %arg2: memref<10x24x256xf32, #tpu.memory_space<vmem>>, %arg3: memref<3x128x128xbf16, #tpu.memory_space<vmem>>, %arg4: memref<1x128xf32, #tpu.memory_space<vmem>>, %arg5: memref<3x128x128xbf16, #tpu.memory_space<vmem>>, %arg6: memref<1x128xf32, #tpu.memory_space<vmem>>, %arg7: memref<4x128xf32, #tpu.memory_space<vmem>>, %arg8: memref<128x1024xbf16, #tpu.memory_space<vmem>>, %arg9: memref<1x1024xf32, #tpu.memory_space<vmem>>, %arg10: memref<1024x512xbf16, #tpu.memory_space<vmem>>, %arg11: memref<1x512xf32, #tpu.memory_space<vmem>>, %arg12: memref<512x256xbf16, #tpu.memory_space<vmem>>, %arg13: memref<1x256xf32, #tpu.memory_space<vmem>>, %arg14: memref<1x8x256xf32, #tpu.memory_space<vmem>>) attributes {dimension_semantics = [#tpu.dimension_semantics<parallel>], iteration_bounds = array<i64: 1>, scalar_prefetch = 0 : i64, scratch_operands = 0 : i64, tpu.core_type = #tpu.core_type<tc>, window_params = [{transform_indices = @transform_0, window_bounds = array<i64: 1, 8, 24>}, {pipeline_mode = #tpu.pipeline_mode<synchronous>, transform_indices = @transform_1, window_bounds = array<i64: 10, 24, 256>}, {pipeline_mode = #tpu.pipeline_mode<synchronous>, transform_indices = @transform_2, window_bounds = array<i64: 3, 128, 128>}, {pipeline_mode = #tpu.pipeline_mode<synchronous>, transform_indices = @transform_3, window_bounds = array<i64: 1, 128>}, {pipeline_mode = #tpu.pipeline_mode<synchronous>, transform_indices = @transform_4, window_bounds = array<i64: 3, 128, 128>}, {pipeline_mode = #tpu.pipeline_mode<synchronous>, transform_indices = @transform_5, window_bounds = array<i64: 1, 128>}, {pipeline_mode = #tpu.pipeline_mode<synchronous>, transform_indices = @transform_6, window_bounds = array<i64: 4, 128>}, {pipeline_mode = #tpu.pipeline_mode<synchronous>, transform_indices = @transform_7, window_bounds = array<i64: 128, 1024>}, {pipeline_mode = #tpu.pipeline_mode<synchronous>, transform_indices = @transform_8, window_bounds = array<i64: 1, 1024>}, {pipeline_mode = #tpu.pipeline_mode<synchronous>, transform_indices = @transform_9, window_bounds = array<i64: 1024, 512>}, {pipeline_mode = #tpu.pipeline_mode<synchronous>, transform_indices = @transform_10, window_bounds = array<i64: 1, 512>}, {pipeline_mode = #tpu.pipeline_mode<synchronous>, transform_indices = @transform_11, window_bounds = array<i64: 512, 256>}, {pipeline_mode = #tpu.pipeline_mode<synchronous>, transform_indices = @transform_12, window_bounds = array<i64: 1, 256>}, {transform_indices = @transform_13, window_bounds = array<i64: 1, 8, 256>}]} {
    %c0 = arith.constant 0 : index
    %c0_0 = arith.constant 0 : index
    %c0_1 = arith.constant 0 : index
    %0 = vector.load %arg1[%c0, %c0_0, %c0_1] : memref<1x8x24xf32, #tpu.memory_space<vmem>>, vector<1x8x24xf32>
    %1 = vector.shape_cast %0 : vector<1x8x24xf32> to vector<8x24xf32>
    %c0_2 = arith.constant 0 : index
    %c0_3 = arith.constant 0 : index
    %c0_4 = arith.constant 0 : index
    %2 = vector.load %arg2[%c0_2, %c0_3, %c0_4] : memref<10x24x256xf32, #tpu.memory_space<vmem>>, vector<1x24x256xf32>
    %3 = vector.shape_cast %2 : vector<1x24x256xf32> to vector<24x256xf32>
    %cst = arith.constant dense<0.000000e+00> : vector<8x256xf32>
    %4 = tpu.matmul %1, %3, %cst {dimension_numbers = #tpu.dot_dimension_numbers<[1], [0], [0], [1], [0, 0, 1, 1], [], []>} : vector<8x24xf32>, vector<24x256xf32>, vector<8x256xf32> -> vector<8x256xf32>
    %5 = vector.extract_strided_slice %4 {offsets = [0, 0], sizes = [8, 128], strides = [1, 1]} : vector<8x256xf32> to vector<8x128xf32>
    %6 = vector.extract_strided_slice %4 {offsets = [0, 128], sizes = [8, 128], strides = [1, 1]} : vector<8x256xf32> to vector<8x128xf32>
    %7 = arith.maximumf %5, %6 : vector<8x128xf32>
    %cst_5 = arith.constant 0.000000e+00 : f32
    %8 = vector.broadcast %cst_5 : f32 to vector<8x128xf32>
    %9 = arith.maximumf %7, %8 : vector<8x128xf32>
    %10 = arith.truncf %9 : vector<8x128xf32> to vector<8x128xbf16>
    %c1 = arith.constant 1 : index
    %c0_6 = arith.constant 0 : index
    %c0_7 = arith.constant 0 : index
    %11 = vector.load %arg2[%c1, %c0_6, %c0_7] : memref<10x24x256xf32, #tpu.memory_space<vmem>>, vector<1x24x256xf32>
    %12 = vector.shape_cast %11 : vector<1x24x256xf32> to vector<24x256xf32>
    %cst_8 = arith.constant dense<0.000000e+00> : vector<8x256xf32>
    %13 = tpu.matmul %1, %12, %cst_8 {dimension_numbers = #tpu.dot_dimension_numbers<[1], [0], [0], [1], [0, 0, 1, 1], [], []>} : vector<8x24xf32>, vector<24x256xf32>, vector<8x256xf32> -> vector<8x256xf32>
    %14 = vector.extract_strided_slice %13 {offsets = [0, 0], sizes = [8, 128], strides = [1, 1]} : vector<8x256xf32> to vector<8x128xf32>
    %15 = vector.extract_strided_slice %13 {offsets = [0, 128], sizes = [8, 128], strides = [1, 1]} : vector<8x256xf32> to vector<8x128xf32>
    %16 = arith.maximumf %14, %15 : vector<8x128xf32>
    %cst_9 = arith.constant 0.000000e+00 : f32
    %17 = vector.broadcast %cst_9 : f32 to vector<8x128xf32>
    %18 = arith.maximumf %16, %17 : vector<8x128xf32>
    %19 = arith.truncf %18 : vector<8x128xf32> to vector<8x128xbf16>
    %c2 = arith.constant 2 : index
    %c0_10 = arith.constant 0 : index
    %c0_11 = arith.constant 0 : index
    %20 = vector.load %arg2[%c2, %c0_10, %c0_11] : memref<10x24x256xf32, #tpu.memory_space<vmem>>, vector<1x24x256xf32>
    %21 = vector.shape_cast %20 : vector<1x24x256xf32> to vector<24x256xf32>
    %cst_12 = arith.constant dense<0.000000e+00> : vector<8x256xf32>
    %22 = tpu.matmul %1, %21, %cst_12 {dimension_numbers = #tpu.dot_dimension_numbers<[1], [0], [0], [1], [0, 0, 1, 1], [], []>} : vector<8x24xf32>, vector<24x256xf32>, vector<8x256xf32> -> vector<8x256xf32>
    %23 = vector.extract_strided_slice %22 {offsets = [0, 0], sizes = [8, 128], strides = [1, 1]} : vector<8x256xf32> to vector<8x128xf32>
    %24 = vector.extract_strided_slice %22 {offsets = [0, 128], sizes = [8, 128], strides = [1, 1]} : vector<8x256xf32> to vector<8x128xf32>
    %25 = arith.maximumf %23, %24 : vector<8x128xf32>
    %cst_13 = arith.constant 0.000000e+00 : f32
    %26 = vector.broadcast %cst_13 : f32 to vector<8x128xf32>
    %27 = arith.maximumf %25, %26 : vector<8x128xf32>
    %28 = arith.truncf %27 : vector<8x128xf32> to vector<8x128xbf16>
    %c3 = arith.constant 3 : index
    %c0_14 = arith.constant 0 : index
    %c0_15 = arith.constant 0 : index
    %29 = vector.load %arg2[%c3, %c0_14, %c0_15] : memref<10x24x256xf32, #tpu.memory_space<vmem>>, vector<1x24x256xf32>
    %30 = vector.shape_cast %29 : vector<1x24x256xf32> to vector<24x256xf32>
    %cst_16 = arith.constant dense<0.000000e+00> : vector<8x256xf32>
    %31 = tpu.matmul %1, %30, %cst_16 {dimension_numbers = #tpu.dot_dimension_numbers<[1], [0], [0], [1], [0, 0, 1, 1], [], []>} : vector<8x24xf32>, vector<24x256xf32>, vector<8x256xf32> -> vector<8x256xf32>
    %32 = vector.extract_strided_slice %31 {offsets = [0, 0], sizes = [8, 128], strides = [1, 1]} : vector<8x256xf32> to vector<8x128xf32>
    %33 = vector.extract_strided_slice %31 {offsets = [0, 128], sizes = [8, 128], strides = [1, 1]} : vector<8x256xf32> to vector<8x128xf32>
    %34 = arith.maximumf %32, %33 : vector<8x128xf32>
    %cst_17 = arith.constant 0.000000e+00 : f32
    %35 = vector.broadcast %cst_17 : f32 to vector<8x128xf32>
    %36 = arith.maximumf %34, %35 : vector<8x128xf32>
    %37 = arith.truncf %36 : vector<8x128xf32> to vector<8x128xbf16>
    %c4 = arith.constant 4 : index
    %c0_18 = arith.constant 0 : index
    %c0_19 = arith.constant 0 : index
    %38 = vector.load %arg2[%c4, %c0_18, %c0_19] : memref<10x24x256xf32, #tpu.memory_space<vmem>>, vector<1x24x256xf32>
    %39 = vector.shape_cast %38 : vector<1x24x256xf32> to vector<24x256xf32>
    %cst_20 = arith.constant dense<0.000000e+00> : vector<8x256xf32>
    %40 = tpu.matmul %1, %39, %cst_20 {dimension_numbers = #tpu.dot_dimension_numbers<[1], [0], [0], [1], [0, 0, 1, 1], [], []>} : vector<8x24xf32>, vector<24x256xf32>, vector<8x256xf32> -> vector<8x256xf32>
    %41 = vector.extract_strided_slice %40 {offsets = [0, 0], sizes = [8, 128], strides = [1, 1]} : vector<8x256xf32> to vector<8x128xf32>
    %42 = vector.extract_strided_slice %40 {offsets = [0, 128], sizes = [8, 128], strides = [1, 1]} : vector<8x256xf32> to vector<8x128xf32>
    %43 = arith.maximumf %41, %42 : vector<8x128xf32>
    %cst_21 = arith.constant 0.000000e+00 : f32
    %44 = vector.broadcast %cst_21 : f32 to vector<8x128xf32>
    %45 = arith.maximumf %43, %44 : vector<8x128xf32>
    %46 = arith.truncf %45 : vector<8x128xf32> to vector<8x128xbf16>
    %c5 = arith.constant 5 : index
    %c0_22 = arith.constant 0 : index
    %c0_23 = arith.constant 0 : index
    %47 = vector.load %arg2[%c5, %c0_22, %c0_23] : memref<10x24x256xf32, #tpu.memory_space<vmem>>, vector<1x24x256xf32>
    %48 = vector.shape_cast %47 : vector<1x24x256xf32> to vector<24x256xf32>
    %cst_24 = arith.constant dense<0.000000e+00> : vector<8x256xf32>
    %49 = tpu.matmul %1, %48, %cst_24 {dimension_numbers = #tpu.dot_dimension_numbers<[1], [0], [0], [1], [0, 0, 1, 1], [], []>} : vector<8x24xf32>, vector<24x256xf32>, vector<8x256xf32> -> vector<8x256xf32>
    %50 = vector.extract_strided_slice %49 {offsets = [0, 0], sizes = [8, 128], strides = [1, 1]} : vector<8x256xf32> to vector<8x128xf32>
    %51 = vector.extract_strided_slice %49 {offsets = [0, 128], sizes = [8, 128], strides = [1, 1]} : vector<8x256xf32> to vector<8x128xf32>
    %52 = arith.maximumf %50, %51 : vector<8x128xf32>
    %cst_25 = arith.constant 0.000000e+00 : f32
    %53 = vector.broadcast %cst_25 : f32 to vector<8x128xf32>
    %54 = arith.maximumf %52, %53 : vector<8x128xf32>
    %55 = arith.truncf %54 : vector<8x128xf32> to vector<8x128xbf16>
    %c6 = arith.constant 6 : index
    %c0_26 = arith.constant 0 : index
    %c0_27 = arith.constant 0 : index
    %56 = vector.load %arg2[%c6, %c0_26, %c0_27] : memref<10x24x256xf32, #tpu.memory_space<vmem>>, vector<1x24x256xf32>
    %57 = vector.shape_cast %56 : vector<1x24x256xf32> to vector<24x256xf32>
    %cst_28 = arith.constant dense<0.000000e+00> : vector<8x256xf32>
    %58 = tpu.matmul %1, %57, %cst_28 {dimension_numbers = #tpu.dot_dimension_numbers<[1], [0], [0], [1], [0, 0, 1, 1], [], []>} : vector<8x24xf32>, vector<24x256xf32>, vector<8x256xf32> -> vector<8x256xf32>
    %59 = vector.extract_strided_slice %58 {offsets = [0, 0], sizes = [8, 128], strides = [1, 1]} : vector<8x256xf32> to vector<8x128xf32>
    %60 = vector.extract_strided_slice %58 {offsets = [0, 128], sizes = [8, 128], strides = [1, 1]} : vector<8x256xf32> to vector<8x128xf32>
    %61 = arith.maximumf %59, %60 : vector<8x128xf32>
    %cst_29 = arith.constant 0.000000e+00 : f32
    %62 = vector.broadcast %cst_29 : f32 to vector<8x128xf32>
    %63 = arith.maximumf %61, %62 : vector<8x128xf32>
    %64 = arith.truncf %63 : vector<8x128xf32> to vector<8x128xbf16>
    %c7 = arith.constant 7 : index
    %c0_30 = arith.constant 0 : index
    %c0_31 = arith.constant 0 : index
    %65 = vector.load %arg2[%c7, %c0_30, %c0_31] : memref<10x24x256xf32, #tpu.memory_space<vmem>>, vector<1x24x256xf32>
    %66 = vector.shape_cast %65 : vector<1x24x256xf32> to vector<24x256xf32>
    %cst_32 = arith.constant dense<0.000000e+00> : vector<8x256xf32>
    %67 = tpu.matmul %1, %66, %cst_32 {dimension_numbers = #tpu.dot_dimension_numbers<[1], [0], [0], [1], [0, 0, 1, 1], [], []>} : vector<8x24xf32>, vector<24x256xf32>, vector<8x256xf32> -> vector<8x256xf32>
    %68 = vector.extract_strided_slice %67 {offsets = [0, 0], sizes = [8, 128], strides = [1, 1]} : vector<8x256xf32> to vector<8x128xf32>
    %69 = vector.extract_strided_slice %67 {offsets = [0, 128], sizes = [8, 128], strides = [1, 1]} : vector<8x256xf32> to vector<8x128xf32>
    %70 = arith.maximumf %68, %69 : vector<8x128xf32>
    %cst_33 = arith.constant 0.000000e+00 : f32
    %71 = vector.broadcast %cst_33 : f32 to vector<8x128xf32>
    %72 = arith.maximumf %70, %71 : vector<8x128xf32>
    %73 = arith.truncf %72 : vector<8x128xf32> to vector<8x128xbf16>
    %c8 = arith.constant 8 : index
    %c0_34 = arith.constant 0 : index
    %c0_35 = arith.constant 0 : index
    %74 = vector.load %arg2[%c8, %c0_34, %c0_35] : memref<10x24x256xf32, #tpu.memory_space<vmem>>, vector<1x24x256xf32>
    %75 = vector.shape_cast %74 : vector<1x24x256xf32> to vector<24x256xf32>
    %cst_36 = arith.constant dense<0.000000e+00> : vector<8x256xf32>
    %76 = tpu.matmul %1, %75, %cst_36 {dimension_numbers = #tpu.dot_dimension_numbers<[1], [0], [0], [1], [0, 0, 1, 1], [], []>} : vector<8x24xf32>, vector<24x256xf32>, vector<8x256xf32> -> vector<8x256xf32>
    %77 = vector.extract_strided_slice %76 {offsets = [0, 0], sizes = [8, 128], strides = [1, 1]} : vector<8x256xf32> to vector<8x128xf32>
    %78 = vector.extract_strided_slice %76 {offsets = [0, 128], sizes = [8, 128], strides = [1, 1]} : vector<8x256xf32> to vector<8x128xf32>
    %79 = arith.maximumf %77, %78 : vector<8x128xf32>
    %cst_37 = arith.constant 0.000000e+00 : f32
    %80 = vector.broadcast %cst_37 : f32 to vector<8x128xf32>
    %81 = arith.maximumf %79, %80 : vector<8x128xf32>
    %82 = arith.truncf %81 : vector<8x128xf32> to vector<8x128xbf16>
    %c9 = arith.constant 9 : index
    %c0_38 = arith.constant 0 : index
    %c0_39 = arith.constant 0 : index
    %83 = vector.load %arg2[%c9, %c0_38, %c0_39] : memref<10x24x256xf32, #tpu.memory_space<vmem>>, vector<1x24x256xf32>
    %84 = vector.shape_cast %83 : vector<1x24x256xf32> to vector<24x256xf32>
    %cst_40 = arith.constant dense<0.000000e+00> : vector<8x256xf32>
    %85 = tpu.matmul %1, %84, %cst_40 {dimension_numbers = #tpu.dot_dimension_numbers<[1], [0], [0], [1], [0, 0, 1, 1], [], []>} : vector<8x24xf32>, vector<24x256xf32>, vector<8x256xf32> -> vector<8x256xf32>
    %86 = vector.extract_strided_slice %85 {offsets = [0, 0], sizes = [8, 128], strides = [1, 1]} : vector<8x256xf32> to vector<8x128xf32>
    %87 = vector.extract_strided_slice %85 {offsets = [0, 128], sizes = [8, 128], strides = [1, 1]} : vector<8x256xf32> to vector<8x128xf32>
    %88 = arith.maximumf %86, %87 : vector<8x128xf32>
    %cst_41 = arith.constant 0.000000e+00 : f32
    %89 = vector.broadcast %cst_41 : f32 to vector<8x128xf32>
    %90 = arith.maximumf %88, %89 : vector<8x128xf32>
    %91 = arith.truncf %90 : vector<8x128xf32> to vector<8x128xbf16>
    %cst_42 = arith.constant 0.000000e+00 : bf16
    %92 = vector.broadcast %cst_42 : bf16 to vector<8x128xbf16>
    %93 = tpu.concatenate %92, %10, %19, %28, %37, %46, %55, %64, %73, %82, %91, %92 in 0 : vector<8x128xbf16>, vector<8x128xbf16>, vector<8x128xbf16>, vector<8x128xbf16>, vector<8x128xbf16>, vector<8x128xbf16>, vector<8x128xbf16>, vector<8x128xbf16>, vector<8x128xbf16>, vector<8x128xbf16>, vector<8x128xbf16>, vector<8x128xbf16> -> vector<96x128xbf16>
    %94 = vector.extract_strided_slice %93 {offsets = [0, 0], sizes = [80, 128], strides = [1, 1]} : vector<96x128xbf16> to vector<80x128xbf16>
    %c0_43 = arith.constant 0 : index
    %c0_44 = arith.constant 0 : index
    %c0_45 = arith.constant 0 : index
    %95 = vector.load %arg3[%c0_43, %c0_44, %c0_45] : memref<3x128x128xbf16, #tpu.memory_space<vmem>>, vector<1x128x128xbf16>
    %96 = vector.shape_cast %95 : vector<1x128x128xbf16> to vector<128x128xbf16>
    %cst_46 = arith.constant dense<0.000000e+00> : vector<80x128xf32>
    %97 = tpu.matmul %94, %96, %cst_46 {dimension_numbers = #tpu.dot_dimension_numbers<[1], [0], [0], [1], [0, 0, 1, 1], [], []>} : vector<80x128xbf16>, vector<128x128xbf16>, vector<80x128xf32> -> vector<80x128xf32>
    %98 = vector.extract_strided_slice %93 {offsets = [8, 0], sizes = [80, 128], strides = [1, 1]} : vector<96x128xbf16> to vector<80x128xbf16>
    %c1_47 = arith.constant 1 : index
    %c0_48 = arith.constant 0 : index
    %c0_49 = arith.constant 0 : index
    %99 = vector.load %arg3[%c1_47, %c0_48, %c0_49] : memref<3x128x128xbf16, #tpu.memory_space<vmem>>, vector<1x128x128xbf16>
    %100 = vector.shape_cast %99 : vector<1x128x128xbf16> to vector<128x128xbf16>
    %cst_50 = arith.constant dense<0.000000e+00> : vector<80x128xf32>
    %101 = tpu.matmul %98, %100, %cst_50 {dimension_numbers = #tpu.dot_dimension_numbers<[1], [0], [0], [1], [0, 0, 1, 1], [], []>} : vector<80x128xbf16>, vector<128x128xbf16>, vector<80x128xf32> -> vector<80x128xf32>
    %102 = arith.addf %97, %101 : vector<80x128xf32>
    %103 = vector.extract_strided_slice %93 {offsets = [16, 0], sizes = [80, 128], strides = [1, 1]} : vector<96x128xbf16> to vector<80x128xbf16>
    %c2_51 = arith.constant 2 : index
    %c0_52 = arith.constant 0 : index
    %c0_53 = arith.constant 0 : index
    %104 = vector.load %arg3[%c2_51, %c0_52, %c0_53] : memref<3x128x128xbf16, #tpu.memory_space<vmem>>, vector<1x128x128xbf16>
    %105 = vector.shape_cast %104 : vector<1x128x128xbf16> to vector<128x128xbf16>
    %cst_54 = arith.constant dense<0.000000e+00> : vector<80x128xf32>
    %106 = tpu.matmul %103, %105, %cst_54 {dimension_numbers = #tpu.dot_dimension_numbers<[1], [0], [0], [1], [0, 0, 1, 1], [], []>} : vector<80x128xbf16>, vector<128x128xbf16>, vector<80x128xf32> -> vector<80x128xf32>
    %107 = arith.addf %102, %106 : vector<80x128xf32>
    %c0_55 = arith.constant 0 : index
    %c0_56 = arith.constant 0 : index
    %108 = vector.load %arg4[%c0_55, %c0_56] : memref<1x128xf32, #tpu.memory_space<vmem>>, vector<1x128xf32>
    %109 = vector.broadcast %108 : vector<1x128xf32> to vector<80x128xf32>
    %110 = arith.addf %107, %109 : vector<80x128xf32>
    %cst_57 = arith.constant 0.000000e+00 : f32
    %111 = vector.broadcast %cst_57 : f32 to vector<80x128xf32>
    %112 = arith.maximumf %110, %111 : vector<80x128xf32>
    %113 = vector.extract_strided_slice %112 {offsets = [0, 0], sizes = [8, 128], strides = [1, 1]} : vector<80x128xf32> to vector<8x128xf32>
    %114 = vector.extract_strided_slice %112 {offsets = [8, 0], sizes = [8, 128], strides = [1, 1]} : vector<80x128xf32> to vector<8x128xf32>
    %115 = arith.maximumf %113, %114 : vector<8x128xf32>
    %116 = vector.extract_strided_slice %112 {offsets = [16, 0], sizes = [8, 128], strides = [1, 1]} : vector<80x128xf32> to vector<8x128xf32>
    %117 = arith.maximumf %115, %116 : vector<8x128xf32>
    %118 = vector.extract_strided_slice %112 {offsets = [24, 0], sizes = [8, 128], strides = [1, 1]} : vector<80x128xf32> to vector<8x128xf32>
    %119 = arith.maximumf %117, %118 : vector<8x128xf32>
    %120 = arith.truncf %119 : vector<8x128xf32> to vector<8x128xbf16>
    %121 = vector.extract_strided_slice %112 {offsets = [16, 0], sizes = [8, 128], strides = [1, 1]} : vector<80x128xf32> to vector<8x128xf32>
    %122 = vector.extract_strided_slice %112 {offsets = [24, 0], sizes = [8, 128], strides = [1, 1]} : vector<80x128xf32> to vector<8x128xf32>
    %123 = arith.maximumf %121, %122 : vector<8x128xf32>
    %124 = vector.extract_strided_slice %112 {offsets = [32, 0], sizes = [8, 128], strides = [1, 1]} : vector<80x128xf32> to vector<8x128xf32>
    %125 = arith.maximumf %123, %124 : vector<8x128xf32>
    %126 = vector.extract_strided_slice %112 {offsets = [40, 0], sizes = [8, 128], strides = [1, 1]} : vector<80x128xf32> to vector<8x128xf32>
    %127 = arith.maximumf %125, %126 : vector<8x128xf32>
    %128 = arith.truncf %127 : vector<8x128xf32> to vector<8x128xbf16>
    %129 = vector.extract_strided_slice %112 {offsets = [32, 0], sizes = [8, 128], strides = [1, 1]} : vector<80x128xf32> to vector<8x128xf32>
    %130 = vector.extract_strided_slice %112 {offsets = [40, 0], sizes = [8, 128], strides = [1, 1]} : vector<80x128xf32> to vector<8x128xf32>
    %131 = arith.maximumf %129, %130 : vector<8x128xf32>
    %132 = vector.extract_strided_slice %112 {offsets = [48, 0], sizes = [8, 128], strides = [1, 1]} : vector<80x128xf32> to vector<8x128xf32>
    %133 = arith.maximumf %131, %132 : vector<8x128xf32>
    %134 = vector.extract_strided_slice %112 {offsets = [56, 0], sizes = [8, 128], strides = [1, 1]} : vector<80x128xf32> to vector<8x128xf32>
    %135 = arith.maximumf %133, %134 : vector<8x128xf32>
    %136 = arith.truncf %135 : vector<8x128xf32> to vector<8x128xbf16>
    %137 = vector.extract_strided_slice %112 {offsets = [48, 0], sizes = [8, 128], strides = [1, 1]} : vector<80x128xf32> to vector<8x128xf32>
    %138 = vector.extract_strided_slice %112 {offsets = [56, 0], sizes = [8, 128], strides = [1, 1]} : vector<80x128xf32> to vector<8x128xf32>
    %139 = arith.maximumf %137, %138 : vector<8x128xf32>
    %140 = vector.extract_strided_slice %112 {offsets = [64, 0], sizes = [8, 128], strides = [1, 1]} : vector<80x128xf32> to vector<8x128xf32>
    %141 = arith.maximumf %139, %140 : vector<8x128xf32>
    %142 = vector.extract_strided_slice %112 {offsets = [72, 0], sizes = [8, 128], strides = [1, 1]} : vector<80x128xf32> to vector<8x128xf32>
    %143 = arith.maximumf %141, %142 : vector<8x128xf32>
    %144 = arith.truncf %143 : vector<8x128xf32> to vector<8x128xbf16>
    %145 = tpu.concatenate %92, %120, %128, %136, %144, %92 in 0 : vector<8x128xbf16>, vector<8x128xbf16>, vector<8x128xbf16>, vector<8x128xbf16>, vector<8x128xbf16>, vector<8x128xbf16> -> vector<48x128xbf16>
    %146 = vector.extract_strided_slice %145 {offsets = [0, 0], sizes = [32, 128], strides = [1, 1]} : vector<48x128xbf16> to vector<32x128xbf16>
    %c0_58 = arith.constant 0 : index
    %c0_59 = arith.constant 0 : index
    %c0_60 = arith.constant 0 : index
    %147 = vector.load %arg5[%c0_58, %c0_59, %c0_60] : memref<3x128x128xbf16, #tpu.memory_space<vmem>>, vector<1x128x128xbf16>
    %148 = vector.shape_cast %147 : vector<1x128x128xbf16> to vector<128x128xbf16>
    %cst_61 = arith.constant dense<0.000000e+00> : vector<32x128xf32>
    %149 = tpu.matmul %146, %148, %cst_61 {dimension_numbers = #tpu.dot_dimension_numbers<[1], [0], [0], [1], [0, 0, 1, 1], [], []>} : vector<32x128xbf16>, vector<128x128xbf16>, vector<32x128xf32> -> vector<32x128xf32>
    %150 = vector.extract_strided_slice %145 {offsets = [8, 0], sizes = [32, 128], strides = [1, 1]} : vector<48x128xbf16> to vector<32x128xbf16>
    %c1_62 = arith.constant 1 : index
    %c0_63 = arith.constant 0 : index
    %c0_64 = arith.constant 0 : index
    %151 = vector.load %arg5[%c1_62, %c0_63, %c0_64] : memref<3x128x128xbf16, #tpu.memory_space<vmem>>, vector<1x128x128xbf16>
    %152 = vector.shape_cast %151 : vector<1x128x128xbf16> to vector<128x128xbf16>
    %cst_65 = arith.constant dense<0.000000e+00> : vector<32x128xf32>
    %153 = tpu.matmul %150, %152, %cst_65 {dimension_numbers = #tpu.dot_dimension_numbers<[1], [0], [0], [1], [0, 0, 1, 1], [], []>} : vector<32x128xbf16>, vector<128x128xbf16>, vector<32x128xf32> -> vector<32x128xf32>
    %154 = arith.addf %149, %153 : vector<32x128xf32>
    %155 = vector.extract_strided_slice %145 {offsets = [16, 0], sizes = [32, 128], strides = [1, 1]} : vector<48x128xbf16> to vector<32x128xbf16>
    %c2_66 = arith.constant 2 : index
    %c0_67 = arith.constant 0 : index
    %c0_68 = arith.constant 0 : index
    %156 = vector.load %arg5[%c2_66, %c0_67, %c0_68] : memref<3x128x128xbf16, #tpu.memory_space<vmem>>, vector<1x128x128xbf16>
    %157 = vector.shape_cast %156 : vector<1x128x128xbf16> to vector<128x128xbf16>
    %cst_69 = arith.constant dense<0.000000e+00> : vector<32x128xf32>
    %158 = tpu.matmul %155, %157, %cst_69 {dimension_numbers = #tpu.dot_dimension_numbers<[1], [0], [0], [1], [0, 0, 1, 1], [], []>} : vector<32x128xbf16>, vector<128x128xbf16>, vector<32x128xf32> -> vector<32x128xf32>
    %159 = arith.addf %154, %158 : vector<32x128xf32>
    %c0_70 = arith.constant 0 : index
    %c0_71 = arith.constant 0 : index
    %160 = vector.load %arg6[%c0_70, %c0_71] : memref<1x128xf32, #tpu.memory_space<vmem>>, vector<1x128xf32>
    %161 = vector.broadcast %160 : vector<1x128xf32> to vector<32x128xf32>
    %162 = arith.addf %159, %161 : vector<32x128xf32>
    %cst_72 = arith.constant 0.000000e+00 : f32
    %163 = vector.broadcast %cst_72 : f32 to vector<32x128xf32>
    %164 = arith.maximumf %162, %163 : vector<32x128xf32>
    %165 = vector.extract_strided_slice %164 {offsets = [0, 0], sizes = [8, 128], strides = [1, 1]} : vector<32x128xf32> to vector<8x128xf32>
    %c0_73 = arith.constant 0 : index
    %c0_74 = arith.constant 0 : index
    %166 = vector.load %arg7[%c0_73, %c0_74] : memref<4x128xf32, #tpu.memory_space<vmem>>, vector<1x128xf32>
    %167 = vector.broadcast %166 : vector<1x128xf32> to vector<8x128xf32>
    %168 = arith.mulf %165, %167 : vector<8x128xf32>
    %169 = vector.extract_strided_slice %164 {offsets = [8, 0], sizes = [8, 128], strides = [1, 1]} : vector<32x128xf32> to vector<8x128xf32>
    %c1_75 = arith.constant 1 : index
    %c0_76 = arith.constant 0 : index
    %170 = vector.load %arg7[%c1_75, %c0_76] : memref<4x128xf32, #tpu.memory_space<vmem>>, vector<1x128xf32>
    %171 = vector.broadcast %170 : vector<1x128xf32> to vector<8x128xf32>
    %172 = arith.mulf %169, %171 : vector<8x128xf32>
    %173 = arith.addf %168, %172 : vector<8x128xf32>
    %174 = vector.extract_strided_slice %164 {offsets = [16, 0], sizes = [8, 128], strides = [1, 1]} : vector<32x128xf32> to vector<8x128xf32>
    %c2_77 = arith.constant 2 : index
    %c0_78 = arith.constant 0 : index
    %175 = vector.load %arg7[%c2_77, %c0_78] : memref<4x128xf32, #tpu.memory_space<vmem>>, vector<1x128xf32>
    %176 = vector.broadcast %175 : vector<1x128xf32> to vector<8x128xf32>
    %177 = arith.mulf %174, %176 : vector<8x128xf32>
    %178 = arith.addf %173, %177 : vector<8x128xf32>
    %179 = vector.extract_strided_slice %164 {offsets = [24, 0], sizes = [8, 128], strides = [1, 1]} : vector<32x128xf32> to vector<8x128xf32>
    %c3_79 = arith.constant 3 : index
    %c0_80 = arith.constant 0 : index
    %180 = vector.load %arg7[%c3_79, %c0_80] : memref<4x128xf32, #tpu.memory_space<vmem>>, vector<1x128xf32>
    %181 = vector.broadcast %180 : vector<1x128xf32> to vector<8x128xf32>
    %182 = arith.mulf %179, %181 : vector<8x128xf32>
    %183 = arith.addf %178, %182 : vector<8x128xf32>
    %184 = arith.truncf %183 : vector<8x128xf32> to vector<8x128xbf16>
    %c0_81 = arith.constant 0 : index
    %c0_82 = arith.constant 0 : index
    %185 = vector.load %arg8[%c0_81, %c0_82] : memref<128x1024xbf16, #tpu.memory_space<vmem>>, vector<128x1024xbf16>
    %cst_83 = arith.constant dense<0.000000e+00> : vector<8x1024xf32>
    %186 = tpu.matmul %184, %185, %cst_83 {dimension_numbers = #tpu.dot_dimension_numbers<[1], [0], [0], [1], [0, 0, 1, 1], [], []>} : vector<8x128xbf16>, vector<128x1024xbf16>, vector<8x1024xf32> -> vector<8x1024xf32>
    %c0_84 = arith.constant 0 : index
    %c0_85 = arith.constant 0 : index
    %187 = vector.load %arg9[%c0_84, %c0_85] : memref<1x1024xf32, #tpu.memory_space<vmem>>, vector<1x1024xf32>
    %188 = vector.broadcast %187 : vector<1x1024xf32> to vector<8x1024xf32>
    %189 = arith.addf %186, %188 : vector<8x1024xf32>
    %cst_86 = arith.constant 0.000000e+00 : f32
    %190 = vector.broadcast %cst_86 : f32 to vector<8x1024xf32>
    %191 = arith.maximumf %189, %190 : vector<8x1024xf32>
    %192 = arith.truncf %191 : vector<8x1024xf32> to vector<8x1024xbf16>
    %c0_87 = arith.constant 0 : index
    %c0_88 = arith.constant 0 : index
    %193 = vector.load %arg10[%c0_87, %c0_88] : memref<1024x512xbf16, #tpu.memory_space<vmem>>, vector<1024x512xbf16>
    %cst_89 = arith.constant dense<0.000000e+00> : vector<8x512xf32>
    %194 = tpu.matmul %192, %193, %cst_89 {dimension_numbers = #tpu.dot_dimension_numbers<[1], [0], [0], [1], [0, 0, 1, 1], [], []>} : vector<8x1024xbf16>, vector<1024x512xbf16>, vector<8x512xf32> -> vector<8x512xf32>
    %c0_90 = arith.constant 0 : index
    %c0_91 = arith.constant 0 : index
    %195 = vector.load %arg11[%c0_90, %c0_91] : memref<1x512xf32, #tpu.memory_space<vmem>>, vector<1x512xf32>
    %196 = vector.broadcast %195 : vector<1x512xf32> to vector<8x512xf32>
    %197 = arith.addf %194, %196 : vector<8x512xf32>
    %cst_92 = arith.constant 0.000000e+00 : f32
    %198 = vector.broadcast %cst_92 : f32 to vector<8x512xf32>
    %199 = arith.maximumf %197, %198 : vector<8x512xf32>
    %200 = arith.truncf %199 : vector<8x512xf32> to vector<8x512xbf16>
    %c0_93 = arith.constant 0 : index
    %c0_94 = arith.constant 0 : index
    %201 = vector.load %arg12[%c0_93, %c0_94] : memref<512x256xbf16, #tpu.memory_space<vmem>>, vector<512x256xbf16>
    %cst_95 = arith.constant dense<0.000000e+00> : vector<8x256xf32>
    %202 = tpu.matmul %200, %201, %cst_95 {dimension_numbers = #tpu.dot_dimension_numbers<[1], [0], [0], [1], [0, 0, 1, 1], [], []>} : vector<8x512xbf16>, vector<512x256xbf16>, vector<8x256xf32> -> vector<8x256xf32>
    %c0_96 = arith.constant 0 : index
    %c0_97 = arith.constant 0 : index
    %203 = vector.load %arg13[%c0_96, %c0_97] : memref<1x256xf32, #tpu.memory_space<vmem>>, vector<1x256xf32>
    %204 = vector.broadcast %203 : vector<1x256xf32> to vector<8x256xf32>
    %205 = arith.addf %202, %204 : vector<8x256xf32>
    %c0_98 = arith.constant 0 : index
    %c0_99 = arith.constant 0 : index
    %c0_100 = arith.constant 0 : index
    %206 = vector.load %arg14[%c0_98, %c0_99, %c0_100] : memref<1x8x256xf32, #tpu.memory_space<vmem>>, vector<1x8x256xf32>
    %207 = vector.shape_cast %206 : vector<1x8x256xf32> to vector<8x256xf32>
    %208 = vector.shape_cast %205 : vector<8x256xf32> to vector<1x8x256xf32>
    tpu.vector_store %arg14[%c0_98, %c0_99, %c0_100], %208 {strides = array<i32>} : memref<1x8x256xf32, #tpu.memory_space<vmem>>, vector<1x8x256xf32>,
    return
  }
  func.func @transform_0(%arg0: i32) -> (i32, i32, i32) {
    %c0_i32 = arith.constant 0 : i32
    %c0_i32_0 = arith.constant 0 : i32
    %c0_i32_1 = arith.constant 0 : i32
    return %arg0, %c0_i32, %c0_i32_0 : i32, i32, i32
  }
  func.func @transform_1(%arg0: i32) -> (i32, i32, i32) {
    %c0_i32 = arith.constant 0 : i32
    %c0_i32_0 = arith.constant 0 : i32
    %c0_i32_1 = arith.constant 0 : i32
    %c0_i32_2 = arith.constant 0 : i32
    return %c0_i32, %c0_i32_0, %c0_i32_1 : i32, i32, i32
  }
  func.func @transform_2(%arg0: i32) -> (i32, i32, i32) {
    %c0_i32 = arith.constant 0 : i32
    %c0_i32_0 = arith.constant 0 : i32
    %c0_i32_1 = arith.constant 0 : i32
    %c0_i32_2 = arith.constant 0 : i32
    return %c0_i32, %c0_i32_0, %c0_i32_1 : i32, i32, i32
  }
  func.func @transform_3(%arg0: i32) -> (i32, i32) {
    %c0_i32 = arith.constant 0 : i32
    %c0_i32_0 = arith.constant 0 : i32
    %c0_i32_1 = arith.constant 0 : i32
    return %c0_i32, %c0_i32_0 : i32, i32
  }
  func.func @transform_4(%arg0: i32) -> (i32, i32, i32) {
    %c0_i32 = arith.constant 0 : i32
    %c0_i32_0 = arith.constant 0 : i32
    %c0_i32_1 = arith.constant 0 : i32
    %c0_i32_2 = arith.constant 0 : i32
    return %c0_i32, %c0_i32_0, %c0_i32_1 : i32, i32, i32
  }
  func.func @transform_5(%arg0: i32) -> (i32, i32) {
    %c0_i32 = arith.constant 0 : i32
    %c0_i32_0 = arith.constant 0 : i32
    %c0_i32_1 = arith.constant 0 : i32
    return %c0_i32, %c0_i32_0 : i32, i32
  }
  func.func @transform_6(%arg0: i32) -> (i32, i32) {
    %c0_i32 = arith.constant 0 : i32
    %c0_i32_0 = arith.constant 0 : i32
    %c0_i32_1 = arith.constant 0 : i32
    return %c0_i32, %c0_i32_0 : i32, i32
  }
  func.func @transform_7(%arg0: i32) -> (i32, i32) {
    %c0_i32 = arith.constant 0 : i32
    %c0_i32_0 = arith.constant 0 : i32
    %c0_i32_1 = arith.constant 0 : i32
    return %c0_i32, %c0_i32_0 : i32, i32
  }
  func.func @transform_8(%arg0: i32) -> (i32, i32) {
    %c0_i32 = arith.constant 0 : i32
    %c0_i32_0 = arith.constant 0 : i32
    %c0_i32_1 = arith.constant 0 : i32
    return %c0_i32, %c0_i32_0 : i32, i32
  }
  func.func @transform_9(%arg0: i32) -> (i32, i32) {
    %c0_i32 = arith.constant 0 : i32
    %c0_i32_0 = arith.constant 0 : i32
    %c0_i32_1 = arith.constant 0 : i32
    return %c0_i32, %c0_i32_0 : i32, i32
  }
  func.func @transform_10(%arg0: i32) -> (i32, i32) {
    %c0_i32 = arith.constant 0 : i32
    %c0_i32_0 = arith.constant 0 : i32
    %c0_i32_1 = arith.constant 0 : i32
    return %c0_i32, %c0_i32_0 : i32, i32
  }
  func.func @transform_11(%arg0: i32) -> (i32, i32) {
    %c0_i32 = arith.constant 0 : i32
    %c0_i32_0 = arith.constant 0 : i32
    %c0_i32_1 = arith.constant 0 : i32
    return %c0_i32, %c0_i32_0 : i32, i32
  }
  func.func @transform_12(%arg0: i32) -> (i32, i32) {
    %c0_i32 = arith.constant 0 : i32
    %c0_i32_0 = arith.constant 0 : i32
    %c0_i32_1 = arith.constant 0 : i32
    return %c0_i32, %c0_i32_0 : i32, i32
  }
  func.func @transform_13(%arg0: i32) -> (i32, i32, i32) {
    %c0_i32 = arith.constant 0 : i32
    %c0_i32_0 = arith.constant 0 : i32
    %c0_i32_1 = arith.constant 0 : i32
    return %arg0, %c0_i32, %c0_i32_0 : i32, i32, i32
  }
}

</mosaic_0001>

<llo_original>
// kernel: _forward_jit.1
$region0: #{_forward_jit.1}
  #allocation0 [shape = 'u32[]', space=smem, size = 0x4, offset = 0x4, fixed_abs, tag = 'smem constant byte address 0x4 - core index']
  #allocation1 [shape = 'u32[144,128]{1,0:T(1,128)}', space=vmem, size = 0x12000, scoped, tag = 'internal scratch']
  %s0 = inlined_call_operand.vmem [shape: f32[1,8,24], index: 0, kind: input, shape index: {}]
  %s1 = inlined_call_operand.hbm [shape: f32[10,24,256], index: 1, kind: input, shape index: {}]
  %s2 = inlined_call_operand.hbm [shape: bf16[3,128,128], index: 2, kind: input, shape index: {}]
  %s3 = inlined_call_operand.vmem [shape: f32[1,128], index: 3, kind: input, shape index: {}]
  %s4 = inlined_call_operand.hbm [shape: bf16[3,128,128], index: 4, kind: input, shape index: {}]
  %s5 = inlined_call_operand.vmem [shape: f32[1,128], index: 5, kind: input, shape index: {}]
  %s6 = inlined_call_operand.vmem [shape: f32[4,128], index: 6, kind: input, shape index: {}]
  %s7 = inlined_call_operand.hbm [shape: bf16[128,1024], index: 7, kind: input, shape index: {}]
  %s8 = inlined_call_operand.vmem [shape: f32[1,1024], index: 8, kind: input, shape index: {}]
  %s9 = inlined_call_operand.hbm [shape: bf16[1024,512], index: 9, kind: input, shape index: {}]
  %s10 = inlined_call_operand.vmem [shape: f32[1,512], index: 10, kind: input, shape index: {}]
  %s11 = inlined_call_operand.hbm [shape: bf16[512,256], index: 11, kind: input, shape index: {}]
  %s12 = inlined_call_operand.vmem [shape: f32[1,256], index: 12, kind: input, shape index: {}]
  %s13 = inlined_call_operand.vmem [shape: f32[1,8,256], index: 13, kind: output, shape index: {}]
  %s14 = sld [smem:[#allocation0]]
  $region86: #{_forward_jit.1} parent=0
    _
  %s16 = ssub.s32 1, %s14
  %s17 = scalar_select 0, %s16, %s14
  $region1: #{_forward_jit.1} parent=0
    #allocation2 [shape = 'u8[245760]{0}', space=vmem, size = 0x3c000, scoped, tag = 'input window, operand 1, single buffered']
    #allocation3 [shape = 's32[1]{0}', space=sflag, size = 0x4, scoped, tag = 'scoped memory for _forward_jit.1']
    #allocation4 [shape = 'u8[98304]{0}', space=vmem, size = 0x18000, scoped, tag = 'input window, operand 2, single buffered']
    #allocation5 [shape = 's32[1]{0}', space=sflag, size = 0x4, scoped, tag = 'scoped memory for _forward_jit.1']
    #allocation6 [shape = 'u8[98304]{0}', space=vmem, size = 0x18000, scoped, tag = 'input window, operand 4, single buffered']
    #allocation7 [shape = 'u8[262144]{0}', space=vmem, size = 0x40000, scoped, tag = 'input window, operand 7, single buffered']
    #allocation8 [shape = 's32[1]{0}', space=sflag, size = 0x4, scoped, tag = 'scoped memory for _forward_jit.1']
    #allocation9 [shape = 'u8[1048576]{0}', space=vmem, size = 0x100000, scoped, tag = 'input window, operand 9, single buffered']
    #allocation10 [shape = 'u8[262144]{0}', space=vmem, size = 0x40000, scoped, tag = 'input window, operand 11, single buffered']
    #allocation11 [shape = 's32[1]{0}', space=sflag, size = 0x4, scoped, tag = 'scoped memory for _forward_jit.1']
    %18 = vsyncpa [#allocation3], 0
    %19 = vsyncpa [#allocation5], 0
    %20 = vsyncpa [#allocation8], 0
    %21 = vsyncpa [#allocation11], 0
    // Predicated region
    $region2: #{_forward_jit.1} parent=1 // pred_check
      _
    $region3: #{_forward_jit.1} parent=1 // pred_check_branch
      %23 = sbr.rel (0) target = $region5
    $region4: #{_forward_jit.1} parent=1 // pred_region
      _
    $region5: #{_forward_jit.1} parent=1 // pred_fallthru
      _
    // Predicated region
    $region6: #{_forward_jit.1} parent=1 // pred_check
      _
    $region7: #{_forward_jit.1} parent=1 // pred_check_branch
      %25 = sbr.rel (0) target = $region9
    $region8: #{_forward_jit.1} parent=1 // pred_region
      %s27 = ssub.s32 7680, 7680
      %28 = vsyncadd [#allocation3], %s27
      %s29 = sshll.u32 [#allocation2], 4
      %s30 = int_to_ptr.vmem [resolvable:$true] %s29
      %35 = dma.hbm_to_vmem [thread:$0]  %s1, 7680, %s30, [#allocation3], 256, 256, 16
    $region9: #{_forward_jit.1} parent=1 // pred_fallthru
      _
    // Predicated region
    $region10: #{_forward_jit.1} parent=1 // pred_check
      _
    $region11: #{_forward_jit.1} parent=1 // pred_check_branch
      %37 = sbr.rel (0) target = $region13
    $region12: #{_forward_jit.1} parent=1 // pred_region
      %s39 = ssub.s32 3072, 3072
      %40 = vsyncadd [#allocation5], %s39
      %s41 = sshll.u32 [#allocation4], 4
      %s42 = int_to_ptr.vmem [resolvable:$true] %s41
      %47 = dma.hbm_to_vmem [thread:$0]  %s2, 3072, %s42, [#allocation5], 64, 64, 4
    $region13: #{_forward_jit.1} parent=1 // pred_fallthru
      _
    // Predicated region
    $region14: #{_forward_jit.1} parent=1 // pred_check
      _
    $region15: #{_forward_jit.1} parent=1 // pred_check_branch
      %49 = sbr.rel (0) target = $region17
    $region16: #{_forward_jit.1} parent=1 // pred_region
      _
    $region17: #{_forward_jit.1} parent=1 // pred_fallthru
      _
    // Predicated region
    $region18: #{_forward_jit.1} parent=1 // pred_check
      _
    $region19: #{_forward_jit.1} parent=1 // pred_check_branch
      %51 = sbr.rel (0) target = $region21
    $region20: #{_forward_jit.1} parent=1 // pred_region
      %s53 = ssub.s32 3072, 3072
      %54 = vsyncadd [#allocation5], %s53
      %s55 = sshll.u32 [#allocation6], 4
      %s56 = int_to_ptr.vmem [resolvable:$true] %s55
      %61 = dma.hbm_to_vmem [thread:$0]  %s4, 3072, %s56, [#allocation5], 64, 64, 4
    $region21: #{_forward_jit.1} parent=1 // pred_fallthru
      _
    // Predicated region
    $region22: #{_forward_jit.1} parent=1 // pred_check
      _
    $region23: #{_forward_jit.1} parent=1 // pred_check_branch
      %63 = sbr.rel (0) target = $region25
    $region24: #{_forward_jit.1} parent=1 // pred_region
      _
    $region25: #{_forward_jit.1} parent=1 // pred_fallthru
      _
    // Predicated region
    $region26: #{_forward_jit.1} parent=1 // pred_check
      _
    $region27: #{_forward_jit.1} parent=1 // pred_check_branch
      %65 = sbr.rel (0) target = $region29
    $region28: #{_forward_jit.1} parent=1 // pred_region
      _
    $region29: #{_forward_jit.1} parent=1 // pred_fallthru
      _
    // Predicated region
    $region30: #{_forward_jit.1} parent=1 // pred_check
      _
    $region31: #{_forward_jit.1} parent=1 // pred_check_branch
      %67 = sbr.rel (0) target = $region33
    $region32: #{_forward_jit.1} parent=1 // pred_region
      %s69 = ssub.s32 8192, 8192
      %70 = vsyncadd [#allocation8], %s69
      %s71 = sshll.u32 [#allocation7], 4
      %s72 = int_to_ptr.vmem [resolvable:$true] %s71
      %77 = dma.hbm_to_vmem [thread:$0]  %s7, 8192, %s72, [#allocation8], 512, 512, 32
    $region33: #{_forward_jit.1} parent=1 // pred_fallthru
      _
    // Predicated region
    $region34: #{_forward_jit.1} parent=1 // pred_check
      _
    $region35: #{_forward_jit.1} parent=1 // pred_check_branch
      %79 = sbr.rel (0) target = $region37
    $region36: #{_forward_jit.1} parent=1 // pred_region
      _
    $region37: #{_forward_jit.1} parent=1 // pred_fallthru
      _
    // Predicated region
    $region38: #{_forward_jit.1} parent=1 // pred_check
      _
    $region39: #{_forward_jit.1} parent=1 // pred_check_branch
      %81 = sbr.rel (0) target = $region41
    $region40: #{_forward_jit.1} parent=1 // pred_region
      %s83 = ssub.s32 32768, 32768
      %84 = vsyncadd [#allocation8], %s83
      %s85 = sshll.u32 [#allocation9], 4
      %s86 = int_to_ptr.vmem [resolvable:$true] %s85
      %91 = dma.hbm_to_vmem [thread:$0]  %s9, 32768, %s86, [#allocation8], 256, 256, 16
    $region41: #{_forward_jit.1} parent=1 // pred_fallthru
      _
    // Predicated region
    $region42: #{_forward_jit.1} parent=1 // pred_check
      _
    $region43: #{_forward_jit.1} parent=1 // pred_check_branch
      %93 = sbr.rel (0) target = $region45
    $region44: #{_forward_jit.1} parent=1 // pred_region
      _
    $region45: #{_forward_jit.1} parent=1 // pred_fallthru
      _
    // Predicated region
    $region46: #{_forward_jit.1} parent=1 // pred_check
      _
    $region47: #{_forward_jit.1} parent=1 // pred_check_branch
      %95 = sbr.rel (0) target = $region49
    $region48: #{_forward_jit.1} parent=1 // pred_region
      %s97 = ssub.s32 8192, 8192
      %98 = vsyncadd [#allocation11], %s97
      %s99 = sshll.u32 [#allocation10], 4
      %s100 = int_to_ptr.vmem [resolvable:$true] %s99
      %105 = dma.hbm_to_vmem [thread:$0]  %s11, 8192, %s100, [#allocation11], 128, 128, 8
    $region49: #{_forward_jit.1} parent=1 // pred_fallthru
      _
    // Predicated region
    $region50: #{_forward_jit.1} parent=1 // pred_check
      _
    $region51: #{_forward_jit.1} parent=1 // pred_check_branch
      %107 = sbr.rel (0) target = $region53
    $region52: #{_forward_jit.1} parent=1 // pred_region
      _
    $region53: #{_forward_jit.1} parent=1 // pred_fallthru
      _
    // Predicated region
    $region54: #{_forward_jit.1} parent=1 // pred_check
      _
    $region55: #{_forward_jit.1} parent=1 // pred_check_branch
      %109 = sbr.rel (0) target = $region57
    $region56: #{_forward_jit.1} parent=1 // pred_region
      %110 = dma.done [#allocation3], 7680
    $region57: #{_forward_jit.1} parent=1 // pred_fallthru
      _
    // Predicated region
    $region58: #{_forward_jit.1} parent=1 // pred_check
      _
    $region59: #{_forward_jit.1} parent=1 // pred_check_branch
      %112 = sbr.rel (0) target = $region61
    $region60: #{_forward_jit.1} parent=1 // pred_region
      %113 = dma.done [#allocation5], 3072
    $region61: #{_forward_jit.1} parent=1 // pred_fallthru
      _
    // Predicated region
    $region62: #{_forward_jit.1} parent=1 // pred_check
      _
    $region63: #{_forward_jit.1} parent=1 // pred_check_branch
      %115 = sbr.rel (0) target = $region65
    $region64: #{_forward_jit.1} parent=1 // pred_region
      %116 = dma.done [#allocation5], 3072
    $region65: #{_forward_jit.1} parent=1 // pred_fallthru
      _
    // Predicated region
    $region66: #{_forward_jit.1} parent=1 // pred_check
      _
    $region67: #{_forward_jit.1} parent=1 // pred_check_branch
      %118 = sbr.rel (0) target = $region69
    $region68: #{_forward_jit.1} parent=1 // pred_region
      %119 = dma.done [#allocation8], 8192
    $region69: #{_forward_jit.1} parent=1 // pred_fallthru
      _
    // Predicated region
    $region70: #{_forward_jit.1} parent=1 // pred_check
      _
    $region71: #{_forward_jit.1} parent=1 // pred_check_branch
      %121 = sbr.rel (0) target = $region73
    $region72: #{_forward_jit.1} parent=1 // pred_region
      %122 = dma.done [#allocation8], 32768
    $region73: #{_forward_jit.1} parent=1 // pred_fallthru
      _
    // Predicated region
    $region74: #{_forward_jit.1} parent=1 // pred_check
      _
    $region75: #{_forward_jit.1} parent=1 // pred_check_branch
      %124 = sbr.rel (0) target = $region77
    $region76: #{_forward_jit.1} parent=1 // pred_region
      %125 = dma.done [#allocation11], 8192
    $region77: #{_forward_jit.1} parent=1 // pred_fallthru
      _
    %v127 = vld [vmem:[%s0] sm:$0xff]
    %v128 = vld [vmem:[#allocation2] sm:$0xff]
    %v129 = vld [vmem:[#allocation2 + $0x8] sm:$0xff]
    %v130 = vld [vmem:[#allocation2 + $0x10] sm:$0xff]
    %v131 = vld [vmem:[#allocation2 + $0x18] sm:$0xff]
    %v132 = vld [vmem:[#allocation2 + $0x20] sm:$0xff]
    %v133 = vld [vmem:[#allocation2 + $0x28] sm:$0xff]
    %vm134 = vcmask 195584
    %v136 = vsel %vm134, %v127, 0
    %138 = vmatprep.subr.mxu0 %v129
    %139 = vmatpush1.msra.mxu0 %v128
    %140 = vmatprep.subr.mxu0 %v131
    %141 = vmatpush1.msra.mxu0 %v130
    %142 = vmatprep.subr.mxu0 %v133
    %143 = vmatpush1.msra.mxu0 %v132
    %144 = vmatprep.subr.mxu0 0.0
    %145 = vmatpush1.msra.mxu0 0.0
    %146 = vmatprep.subr.mxu0 0.0
    %147 = vmatpush1.msra.mxu0 0.0
    %148 = vmatprep.subr.mxu0 0.0
    %149 = vmatpush1.msra.mxu0 0.0
    %150 = vmatprep.subr.mxu0 0.0
    %151 = vmatpush1.msra.mxu0 0.0
    %152 = vmatprep.subr.mxu0 0.0
    %153 = vmatpush1.msra.mxu0 0.0
    %154 = vmatprep.subr.mxu0 0.0
    %155 = vmatpush1.msra.mxu0 0.0
    %156 = vmatprep.subr.mxu0 0.0
    %157 = vmatpush1.msra.mxu0 0.0
    %158 = vmatprep.subr.mxu0 0.0
    %159 = vmatpush1.msra.mxu0 0.0
    %160 = vmatprep.subr.mxu0 0.0
    %161 = vmatpush1.msra.mxu0 0.0
    %162 = vmatprep.subr.mxu0 0.0
    %163 = vmatpush1.msra.mxu0 0.0
    %164 = vmatprep.subr.mxu0 0.0
    %165 = vmatpush1.msra.mxu0 0.0
    %166 = vmatprep.subr.mxu0 0.0
    %167 = vmatpush1.msra.mxu0 0.0
    %168 = vmatprep.subr.mxu0 0.0
    %169 = vmatpush1.msra.mxu0 0.0
    %170 = vmatprep.subr.mxu0 0.0
    %171 = vmatpush1.msra.mxu0 0.0
    %172 = vmatprep.subr.mxu0 0.0
    %173 = vmatpush1.msra.mxu0 0.0
    %174 = vmatprep.subr.mxu0 0.0
    %175 = vmatpush1.msra.mxu0 0.0
    %176 = vmatprep.subr.mxu0 0.0
    %177 = vmatpush1.msra.mxu0 0.0
    %178 = vmatprep.subr.mxu0 0.0
    %179 = vmatpush1.msra.mxu0 0.0
    %180 = vmatprep.subr.mxu0 0.0
    %181 = vmatpush1.msra.mxu0 0.0
    %182 = vmatprep.subr.mxu0 0.0
    %183 = vmatpush1.msra.mxu0 0.0
    %184 = vmatprep.subr.mxu0 0.0
    %185 = vmatpush1.msra.mxu0 0.0
    %186 = vmatprep.subr.mxu0 0.0
    %187 = vmatpush1.msra.mxu0 0.0
    %188 = vmatprep.subr.mxu0 0.0
    %189 = vmatpush1.msra.mxu0 0.0
    %190 = vmatprep.subr.mxu0 0.0
    %191 = vmatpush1.msra.mxu0 0.0
    %192 = vmatprep.subr.mxu0 0.0
    %193 = vmatpush1.msra.mxu0 0.0
    %194 = vmatprep.subr.mxu0 0.0
    %195 = vmatpush1.msra.mxu0 0.0
    %196 = vmatprep.subr.mxu0 0.0
    %197 = vmatpush1.msra.mxu0 0.0
    %198 = vmatprep.subr.mxu0 0.0
    %199 = vmatpush1.msra.mxu0 0.0
    %200 = vmatprep.subr.mxu0 0.0
    %201 = vmatpush1.msra.mxu0 0.0
    %202 = vmatprep.mubr.f32.mxu0 0.0
    %203 = vmatmul.mubr.f32.gmra.mrb[0].mxu0 %v136
    %v204 = vpop.f32.mrb[0].mxu0
    %v205 = vadd.f32 0.0, %v204
    %v206 = vpop.f32.mrb[0].mxu0
    %v207 = vadd.f32 0.0, %v206
    %208 = vdwg.mxu0
    %v209 = vmax.f32 %v205, %v207
    %v210 = vmax.f32 %v209, 0.0
    %v211 = vpack.c.bf16 %v210, %v210
    %s212 = scalar_lea.vmem [#allocation2], 48
    %v213 = vld [vmem:[%s212] sm:$0xff]
    %v214 = vld [vmem:[%s212 + $0x8] sm:$0xff]
    %v215 = vld [vmem:[%s212 + $0x10] sm:$0xff]
    %v216 = vld [vmem:[%s212 + $0x18] sm:$0xff]
    %v217 = vld [vmem:[%s212 + $0x20] sm:$0xff]
    %v218 = vld [vmem:[%s212 + $0x28] sm:$0xff]
    %219 = vmatprep.subr.mxu0 %v214
    %220 = vmatpush1.msra.mxu0 %v213
    %221 = vmatprep.subr.mxu0 %v216
    %222 = vmatpush1.msra.mxu0 %v215
    %223 = vmatprep.subr.mxu0 %v218
    %224 = vmatpush1.msra.mxu0 %v217
    %225 = vmatprep.subr.mxu0 0.0
    %226 = vmatpush1.msra.mxu0 0.0
    %227 = vmatprep.subr.mxu0 0.0
    %228 = vmatpush1.msra.mxu0 0.0
    %229 = vmatprep.subr.mxu0 0.0
    %230 = vmatpush1.msra.mxu0 0.0
    %231 = vmatprep.subr.mxu0 0.0
    %232 = vmatpush1.msra.mxu0 0.0
    %233 = vmatprep.subr.mxu0 0.0
    %234 = vmatpush1.msra.mxu0 0.0
    %235 = vmatprep.subr.mxu0 0.0
    %236 = vmatpush1.msra.mxu0 0.0
    %237 = vmatprep.subr.mxu0 0.0
    %238 = vmatpush1.msra.mxu0 0.0
    %239 = vmatprep.subr.mxu0 0.0
    %240 = vmatpush1.msra.mxu0 0.0
    %241 = vmatprep.subr.mxu0 0.0
    %242 = vmatpush1.msra.mxu0 0.0
    %243 = vmatprep.subr.mxu0 0.0
    %244 = vmatpush1.msra.mxu0 0.0
    %245 = vmatprep.subr.mxu0 0.0
    %246 = vmatpush1.msra.mxu0 0.0
    %247 = vmatprep.subr.mxu0 0.0
    %248 = vmatpush1.msra.mxu0 0.0
    %249 = vmatprep.subr.mxu0 0.0
    %250 = vmatpush1.msra.mxu0 0.0
    %251 = vmatprep.subr.mxu0 0.0
    %252 = vmatpush1.msra.mxu0 0.0
    %253 = vmatprep.subr.mxu0 0.0
    %254 = vmatpush1.msra.mxu0 0.0
    %255 = vmatprep.subr.mxu0 0.0
    %256 = vmatpush1.msra.mxu0 0.0
    %257 = vmatprep.subr.mxu0 0.0
    %258 = vmatpush1.msra.mxu0 0.0
    %259 = vmatprep.subr.mxu0 0.0
    %260 = vmatpush1.msra.mxu0 0.0
    %261 = vmatprep.subr.mxu0 0.0
    %262 = vmatpush1.msra.mxu0 0.0
    %263 = vmatprep.subr.mxu0 0.0
    %264 = vmatpush1.msra.mxu0 0.0
    %265 = vmatprep.subr.mxu0 0.0
    %266 = vmatpush1.msra.mxu0 0.0
    %267 = vmatprep.subr.mxu0 0.0
    %268 = vmatpush1.msra.mxu0 0.0
    %269 = vmatprep.subr.mxu0 0.0
    %270 = vmatpush1.msra.mxu0 0.0
    %271 = vmatprep.subr.mxu0 0.0
    %272 = vmatpush1.msra.mxu0 0.0
    %273 = vmatprep.subr.mxu0 0.0
    %274 = vmatpush1.msra.mxu0 0.0
    %275 = vmatprep.subr.mxu0 0.0
    %276 = vmatpush1.msra.mxu0 0.0
    %277 = vmatprep.subr.mxu0 0.0
    %278 = vmatpush1.msra.mxu0 0.0
    %279 = vmatprep.subr.mxu0 0.0
    %280 = vmatpush1.msra.mxu0 0.0
    %281 = vmatprep.subr.mxu0 0.0
    %282 = vmatpush1.msra.mxu0 0.0
    %283 = vmatprep.mubr.f32.mxu0 0.0
    %284 = vmatmul.mubr.f32.gmra.mrb[0].mxu0 %v136
    %v285 = vpop.f32.mrb[0].mxu0
    %v286 = vadd.f32 0.0, %v285
    %v287 = vpop.f32.mrb[0].mxu0
    %v288 = vadd.f32 0.0, %v287
    %289 = vdwg.mxu0
    %v290 = vmax.f32 %v286, %v288
    %v291 = vmax.f32 %v290, 0.0
    %v292 = vpack.c.bf16 %v291, %v291
    %s293 = scalar_lea.vmem [#allocation2], 96
    %v294 = vld [vmem:[%s293] sm:$0xff]
    %v295 = vld [vmem:[%s293 + $0x8] sm:$0xff]
    %v296 = vld [vmem:[%s293 + $0x10] sm:$0xff]
    %v297 = vld [vmem:[%s293 + $0x18] sm:$0xff]
    %v298 = vld [vmem:[%s293 + $0x20] sm:$0xff]
    %v299 = vld [vmem:[%s293 + $0x28] sm:$0xff]
    %300 = vmatprep.subr.mxu0 %v295
    %301 = vmatpush1.msra.mxu0 %v294
    %302 = vmatprep.subr.mxu0 %v297
    %303 = vmatpush1.msra.mxu0 %v296
    %304 = vmatprep.subr.mxu0 %v299
    %305 = vmatpush1.msra.mxu0 %v298
    %306 = vmatprep.subr.mxu0 0.0
    %307 = vmatpush1.msra.mxu0 0.0
    %308 = vmatprep.subr.mxu0 0.0
    %309 = vmatpush1.msra.mxu0 0.0
    %310 = vmatprep.subr.mxu0 0.0
    %311 = vmatpush1.msra.mxu0 0.0
    %312 = vmatprep.subr.mxu0 0.0
    %313 = vmatpush1.msra.mxu0 0.0
    %314 = vmatprep.subr.mxu0 0.0
    %315 = vmatpush1.msra.mxu0 0.0
    %316 = vmatprep.subr.mxu0 0.0
    %317 = vmatpush1.msra.mxu0 0.0
    %318 = vmatprep.subr.mxu0 0.0
    %319 = vmatpush1.msra.mxu0 0.0
    %320 = vmatprep.subr.mxu0 0.0
    %321 = vmatpush1.msra.mxu0 0.0
    %322 = vmatprep.subr.mxu0 0.0
    %323 = vmatpush1.msra.mxu0 0.0
    %324 = vmatprep.subr.mxu0 0.0
    %325 = vmatpush1.msra.mxu0 0.0
    %326 = vmatprep.subr.mxu0 0.0
    %327 = vmatpush1.msra.mxu0 0.0
    %328 = vmatprep.subr.mxu0 0.0
    %329 = vmatpush1.msra.mxu0 0.0
    %330 = vmatprep.subr.mxu0 0.0
    %331 = vmatpush1.msra.mxu0 0.0
    %332 = vmatprep.subr.mxu0 0.0
    %333 = vmatpush1.msra.mxu0 0.0
    %334 = vmatprep.subr.mxu0 0.0
    %335 = vmatpush1.msra.mxu0 0.0
    %336 = vmatprep.subr.mxu0 0.0
    %337 = vmatpush1.msra.mxu0 0.0
    %338 = vmatprep.subr.mxu0 0.0
    %339 = vmatpush1.msra.mxu0 0.0
    %340 = vmatprep.subr.mxu0 0.0
    %341 = vmatpush1.msra.mxu0 0.0
    %342 = vmatprep.subr.mxu0 0.0
    %343 = vmatpush1.msra.mxu0 0.0
    %344 = vmatprep.subr.mxu0 0.0
    %345 = vmatpush1.msra.mxu0 0.0
    %346 = vmatprep.subr.mxu0 0.0
    %347 = vmatpush1.msra.mxu0 0.0
    %348 = vmatprep.subr.mxu0 0.0
    %349 = vmatpush1.msra.mxu0 0.0
    %350 = vmatprep.subr.mxu0 0.0
    %351 = vmatpush1.msra.mxu0 0.0
    %352 = vmatprep.subr.mxu0 0.0
    %353 = vmatpush1.msra.mxu0 0.0
    %354 = vmatprep.subr.mxu0 0.0
    %355 = vmatpush1.msra.mxu0 0.0
    %356 = vmatprep.subr.mxu0 0.0
    %357 = vmatpush1.msra.mxu0 0.0
    %358 = vmatprep.subr.mxu0 0.0
    %359 = vmatpush1.msra.mxu0 0.0
    %360 = vmatprep.subr.mxu0 0.0
    %361 = vmatpush1.msra.mxu0 0.0
    %362 = vmatprep.subr.mxu0 0.0
    %363 = vmatpush1.msra.mxu0 0.0
    %364 = vmatprep.mubr.f32.mxu0 0.0
    %365 = vmatmul.mubr.f32.gmra.mrb[0].mxu0 %v136
    %v366 = vpop.f32.mrb[0].mxu0
    %v367 = vadd.f32 0.0, %v366
    %v368 = vpop.f32.mrb[0].mxu0
    %v369 = vadd.f32 0.0, %v368
    %370 = vdwg.mxu0
    %v371 = vmax.f32 %v367, %v369
    %v372 = vmax.f32 %v371, 0.0
    %v373 = vpack.c.bf16 %v372, %v372
    %s374 = scalar_lea.vmem [#allocation2], 144
    %v375 = vld [vmem:[%s374] sm:$0xff]
    %v376 = vld [vmem:[%s374 + $0x8] sm:$0xff]
    %v377 = vld [vmem:[%s374 + $0x10] sm:$0xff]
    %v378 = vld [vmem:[%s374 + $0x18] sm:$0xff]
    %v379 = vld [vmem:[%s374 + $0x20] sm:$0xff]
    %v380 = vld [vmem:[%s374 + $0x28] sm:$0xff]
    %381 = vmatprep.subr.mxu0 %v376
    %382 = vmatpush1.msra.mxu0 %v375
    %383 = vmatprep.subr.mxu0 %v378
    %384 = vmatpush1.msra.mxu0 %v377
    %385 = vmatprep.subr.mxu0 %v380
    %386 = vmatpush1.msra.mxu0 %v379
    %387 = vmatprep.subr.mxu0 0.0
    %388 = vmatpush1.msra.mxu0 0.0
    %389 = vmatprep.subr.mxu0 0.0
    %390 = vmatpush1.msra.mxu0 0.0
    %391 = vmatprep.subr.mxu0 0.0
    %392 = vmatpush1.msra.mxu0 0.0
    %393 = vmatprep.subr.mxu0 0.0
    %394 = vmatpush1.msra.mxu0 0.0
    %395 = vmatprep.subr.mxu0 0.0
    %396 = vmatpush1.msra.mxu0 0.0
    %397 = vmatprep.subr.mxu0 0.0
    %398 = vmatpush1.msra.mxu0 0.0
    %399 = vmatprep.subr.mxu0 0.0
    %400 = vmatpush1.msra.mxu0 0.0
    %401 = vmatprep.subr.mxu0 0.0
    %402 = vmatpush1.msra.mxu0 0.0
    %403 = vmatprep.subr.mxu0 0.0
    %404 = vmatpush1.msra.mxu0 0.0
    %405 = vmatprep.subr.mxu0 0.0
    %406 = vmatpush1.msra.mxu0 0.0
    %407 = vmatprep.subr.mxu0 0.0
    %408 = vmatpush1.msra.mxu0 0.0
    %409 = vmatprep.subr.mxu0 0.0
    %410 = vmatpush1.msra.mxu0 0.0
    %411 = vmatprep.subr.mxu0 0.0
    %412 = vmatpush1.msra.mxu0 0.0
    %413 = vmatprep.subr.mxu0 0.0
    %414 = vmatpush1.msra.mxu0 0.0
    %415 = vmatprep.subr.mxu0 0.0
    %416 = vmatpush1.msra.mxu0 0.0
    %417 = vmatprep.subr.mxu0 0.0
    %418 = vmatpush1.msra.mxu0 0.0
    %419 = vmatprep.subr.mxu0 0.0
    %420 = vmatpush1.msra.mxu0 0.0
    %421 = vmatprep.subr.mxu0 0.0
    %422 = vmatpush1.msra.mxu0 0.0
    %423 = vmatprep.subr.mxu0 0.0
    %424 = vmatpush1.msra.mxu0 0.0
    %425 = vmatprep.subr.mxu0 0.0
    %426 = vmatpush1.msra.mxu0 0.0
    %427 = vmatprep.subr.mxu0 0.0
    %428 = vmatpush1.msra.mxu0 0.0
    %429 = vmatprep.subr.mxu0 0.0
    %430 = vmatpush1.msra.mxu0 0.0
    %431 = vmatprep.subr.mxu0 0.0
    %432 = vmatpush1.msra.mxu0 0.0
    %433 = vmatprep.subr.mxu0 0.0
    %434 = vmatpush1.msra.mxu0 0.0
    %435 = vmatprep.subr.mxu0 0.0
    %436 = vmatpush1.msra.mxu0 0.0
    %437 = vmatprep.subr.mxu0 0.0
    %438 = vmatpush1.msra.mxu0 0.0
    %439 = vmatprep.subr.mxu0 0.0
    %440 = vmatpush1.msra.mxu0 0.0
    %441 = vmatprep.subr.mxu0 0.0
    %442 = vmatpush1.msra.mxu0 0.0
    %443 = vmatprep.subr.mxu0 0.0
    %444 = vmatpush1.msra.mxu0 0.0
    %445 = vmatprep.mubr.f32.mxu0 0.0
    %446 = vmatmul.mubr.f32.gmra.mrb[0].mxu0 %v136
    %v447 = vpop.f32.mrb[0].mxu0
    %v448 = vadd.f32 0.0, %v447
    %v449 = vpop.f32.mrb[0].mxu0
    %v450 = vadd.f32 0.0, %v449
    %451 = vdwg.mxu0
    %v452 = vmax.f32 %v448, %v450
    %v453 = vmax.f32 %v452, 0.0
    %v454 = vpack.c.bf16 %v453, %v453
    %s455 = scalar_lea.vmem [#allocation2], 192
    %v456 = vld [vmem:[%s455] sm:$0xff]
    %v457 = vld [vmem:[%s455 + $0x8] sm:$0xff]
    %v458 = vld [vmem:[%s455 + $0x10] sm:$0xff]
    %v459 = vld [vmem:[%s455 + $0x18] sm:$0xff]
    %v460 = vld [vmem:[%s455 + $0x20] sm:$0xff]
    %v461 = vld [vmem:[%s455 + $0x28] sm:$0xff]
    %462 = vmatprep.subr.mxu0 %v457
    %463 = vmatpush1.msra.mxu0 %v456
    %464 = vmatprep.subr.mxu0 %v459
    %465 = vmatpush1.msra.mxu0 %v458
    %466 = vmatprep.subr.mxu0 %v461
    %467 = vmatpush1.msra.mxu0 %v460
    %468 = vmatprep.subr.mxu0 0.0
    %469 = vmatpush1.msra.mxu0 0.0
    %470 = vmatprep.subr.mxu0 0.0
    %471 = vmatpush1.msra.mxu0 0.0
    %472 = vmatprep.subr.mxu0 0.0
    %473 = vmatpush1.msra.mxu0 0.0
    %474 = vmatprep.subr.mxu0 0.0
    %475 = vmatpush1.msra.mxu0 0.0
    %476 = vmatprep.subr.mxu0 0.0
    %477 = vmatpush1.msra.mxu0 0.0
    %478 = vmatprep.subr.mxu0 0.0
    %479 = vmatpush1.msra.mxu0 0.0
    %480 = vmatprep.subr.mxu0 0.0
    %481 = vmatpush1.msra.mxu0 0.0
    %482 = vmatprep.subr.mxu0 0.0
    %483 = vmatpush1.msra.mxu0 0.0
    %484 = vmatprep.subr.mxu0 0.0
    %485 = vmatpush1.msra.mxu0 0.0
    %486 = vmatprep.subr.mxu0 0.0
    %487 = vmatpush1.msra.mxu0 0.0
    %488 = vmatprep.subr.mxu0 0.0
    %489 = vmatpush1.msra.mxu0 0.0
    %490 = vmatprep.subr.mxu0 0.0
    %491 = vmatpush1.msra.mxu0 0.0
    %492 = vmatprep.subr.mxu0 0.0
    %493 = vmatpush1.msra.mxu0 0.0
    %494 = vmatprep.subr.mxu0 0.0
    %495 = vmatpush1.msra.mxu0 0.0
    %496 = vmatprep.subr.mxu0 0.0
    %497 = vmatpush1.msra.mxu0 0.0
    %498 = vmatprep.subr.mxu0 0.0
    %499 = vmatpush1.msra.mxu0 0.0
    %500 = vmatprep.subr.mxu0 0.0
    %501 = vmatpush1.msra.mxu0 0.0
    %502 = vmatprep.subr.mxu0 0.0
    %503 = vmatpush1.msra.mxu0 0.0
    %504 = vmatprep.subr.mxu0 0.0
    %505 = vmatpush1.msra.mxu0 0.0
    %506 = vmatprep.subr.mxu0 0.0
    %507 = vmatpush1.msra.mxu0 0.0
    %508 = vmatprep.subr.mxu0 0.0
    %509 = vmatpush1.msra.mxu0 0.0
    %510 = vmatprep.subr.mxu0 0.0
    %511 = vmatpush1.msra.mxu0 0.0
    %512 = vmatprep.subr.mxu0 0.0
    %513 = vmatpush1.msra.mxu0 0.0
    %514 = vmatprep.subr.mxu0 0.0
    %515 = vmatpush1.msra.mxu0 0.0
    %516 = vmatprep.subr.mxu0 0.0
    %517 = vmatpush1.msra.mxu0 0.0
    %518 = vmatprep.subr.mxu0 0.0
    %519 = vmatpush1.msra.mxu0 0.0
    %520 = vmatprep.subr.mxu0 0.0
    %521 = vmatpush1.msra.mxu0 0.0
    %522 = vmatprep.subr.mxu0 0.0
    %523 = vmatpush1.msra.mxu0 0.0
    %524 = vmatprep.subr.mxu0 0.0
    %525 = vmatpush1.msra.mxu0 0.0
    %526 = vmatprep.mubr.f32.mxu0 0.0
    %527 = vmatmul.mubr.f32.gmra.mrb[0].mxu0 %v136
    %v528 = vpop.f32.mrb[0].mxu0
    %v529 = vadd.f32 0.0, %v528
    %v530 = vpop.f32.mrb[0].mxu0
    %v531 = vadd.f32 0.0, %v530
    %532 = vdwg.mxu0
    %v533 = vmax.f32 %v529, %v531
    %v534 = vmax.f32 %v533, 0.0
    %v535 = vpack.c.bf16 %v534, %v534
    %s536 = scalar_lea.vmem [#allocation2], 240
    %v537 = vld [vmem:[%s536] sm:$0xff]
    %v538 = vld [vmem:[%s536 + $0x8] sm:$0xff]
    %v539 = vld [vmem:[%s536 + $0x10] sm:$0xff]
    %v540 = vld [vmem:[%s536 + $0x18] sm:$0xff]
    %v541 = vld [vmem:[%s536 + $0x20] sm:$0xff]
    %v542 = vld [vmem:[%s536 + $0x28] sm:$0xff]
    %543 = vmatprep.subr.mxu0 %v538
    %544 = vmatpush1.msra.mxu0 %v537
    %545 = vmatprep.subr.mxu0 %v540
    %546 = vmatpush1.msra.mxu0 %v539
    %547 = vmatprep.subr.mxu0 %v542
    %548 = vmatpush1.msra.mxu0 %v541
    %549 = vmatprep.subr.mxu0 0.0
    %550 = vmatpush1.msra.mxu0 0.0
    %551 = vmatprep.subr.mxu0 0.0
    %552 = vmatpush1.msra.mxu0 0.0
    %553 = vmatprep.subr.mxu0 0.0
    %554 = vmatpush1.msra.mxu0 0.0
    %555 = vmatprep.subr.mxu0 0.0
    %556 = vmatpush1.msra.mxu0 0.0
    %557 = vmatprep.subr.mxu0 0.0
    %558 = vmatpush1.msra.mxu0 0.0
    %559 = vmatprep.subr.mxu0 0.0
    %560 = vmatpush1.msra.mxu0 0.0
    %561 = vmatprep.subr.mxu0 0.0
    %562 = vmatpush1.msra.mxu0 0.0
    %563 = vmatprep.subr.mxu0 0.0
    %564 = vmatpush1.msra.mxu0 0.0
    %565 = vmatprep.subr.mxu0 0.0
    %566 = vmatpush1.msra.mxu0 0.0
    %567 = vmatprep.subr.mxu0 0.0
    %568 = vmatpush1.msra.mxu0 0.0
    %569 = vmatprep.subr.mxu0 0.0
    %570 = vmatpush1.msra.mxu0 0.0
    %571 = vmatprep.subr.mxu0 0.0
    %572 = vmatpush1.msra.mxu0 0.0
    %573 = vmatprep.subr.mxu0 0.0
    %574 = vmatpush1.msra.mxu0 0.0
    %575 = vmatprep.subr.mxu0 0.0
    %576 = vmatpush1.msra.mxu0 0.0
    %577 = vmatprep.subr.mxu0 0.0
    %578 = vmatpush1.msra.mxu0 0.0
    %579 = vmatprep.subr.mxu0 0.0
    %580 = vmatpush1.msra.mxu0 0.0
    %581 = vmatprep.subr.mxu0 0.0
    %582 = vmatpush1.msra.mxu0 0.0
    %583 = vmatprep.subr.mxu0 0.0
    %584 = vmatpush1.msra.mxu0 0.0
    %585 = vmatprep.subr.mxu0 0.0
    %586 = vmatpush1.msra.mxu0 0.0
    %587 = vmatprep.subr.mxu0 0.0
    %588 = vmatpush1.msra.mxu0 0.0
    %589 = vmatprep.subr.mxu0 0.0
    %590 = vmatpush1.msra.mxu0 0.0
    %591 = vmatprep.subr.mxu0 0.0
    %592 = vmatpush1.msra.mxu0 0.0
    %593 = vmatprep.subr.mxu0 0.0
    %594 = vmatpush1.msra.mxu0 0.0
    %595 = vmatprep.subr.mxu0 0.0
    %596 = vmatpush1.msra.mxu0 0.0
    %597 = vmatprep.subr.mxu0 0.0
    %598 = vmatpush1.msra.mxu0 0.0
    %599 = vmatprep.subr.mxu0 0.0
    %600 = vmatpush1.msra.mxu0 0.0
    %601 = vmatprep.subr.mxu0 0.0
    %602 = vmatpush1.msra.mxu0 0.0
    %603 = vmatprep.subr.mxu0 0.0
    %604 = vmatpush1.msra.mxu0 0.0
    %605 = vmatprep.subr.mxu0 0.0
    %606 = vmatpush1.msra.mxu0 0.0
    %607 = vmatprep.mubr.f32.mxu0 0.0
    %608 = vmatmul.mubr.f32.gmra.mrb[0].mxu0 %v136
    %v609 = vpop.f32.mrb[0].mxu0
    %v610 = vadd.f32 0.0, %v609
    %v611 = vpop.f32.mrb[0].mxu0
    %v612 = vadd.f32 0.0, %v611
    %613 = vdwg.mxu0
    %v614 = vmax.f32 %v610, %v612
    %v615 = vmax.f32 %v614, 0.0
    %v616 = vpack.c.bf16 %v615, %v615
    %s617 = scalar_lea.vmem [#allocation2], 288
    %v618 = vld [vmem:[%s617] sm:$0xff]
    %v619 = vld [vmem:[%s617 + $0x8] sm:$0xff]
    %v620 = vld [vmem:[%s617 + $0x10] sm:$0xff]
    %v621 = vld [vmem:[%s617 + $0x18] sm:$0xff]
    %v622 = vld [vmem:[%s617 + $0x20] sm:$0xff]
    %v623 = vld [vmem:[%s617 + $0x28] sm:$0xff]
    %624 = vmatprep.subr.mxu0 %v619
    %625 = vmatpush1.msra.mxu0 %v618
    %626 = vmatprep.subr.mxu0 %v621
    %627 = vmatpush1.msra.mxu0 %v620
    %628 = vmatprep.subr.mxu0 %v623
    %629 = vmatpush1.msra.mxu0 %v622
    %630 = vmatprep.subr.mxu0 0.0
    %631 = vmatpush1.msra.mxu0 0.0
    %632 = vmatprep.subr.mxu0 0.0
    %633 = vmatpush1.msra.mxu0 0.0
    %634 = vmatprep.subr.mxu0 0.0
    %635 = vmatpush1.msra.mxu0 0.0
    %636 = vmatprep.subr.mxu0 0.0
    %637 = vmatpush1.msra.mxu0 0.0
    %638 = vmatprep.subr.mxu0 0.0
    %639 = vmatpush1.msra.mxu0 0.0
    %640 = vmatprep.subr.mxu0 0.0
    %641 = vmatpush1.msra.mxu0 0.0
    %642 = vmatprep.subr.mxu0 0.0
    %643 = vmatpush1.msra.mxu0 0.0
    %644 = vmatprep.subr.mxu0 0.0
    %645 = vmatpush1.msra.mxu0 0.0
    %646 = vmatprep.subr.mxu0 0.0
    %647 = vmatpush1.msra.mxu0 0.0
    %648 = vmatprep.subr.mxu0 0.0
    %649 = vmatpush1.msra.mxu0 0.0
    %650 = vmatprep.subr.mxu0 0.0
    %651 = vmatpush1.msra.mxu0 0.0
    %652 = vmatprep.subr.mxu0 0.0
    %653 = vmatpush1.msra.mxu0 0.0
    %654 = vmatprep.subr.mxu0 0.0
    %655 = vmatpush1.msra.mxu0 0.0
    %656 = vmatprep.subr.mxu0 0.0
    %657 = vmatpush1.msra.mxu0 0.0
    %658 = vmatprep.subr.mxu0 0.0
    %659 = vmatpush1.msra.mxu0 0.0
    %660 = vmatprep.subr.mxu0 0.0
    %661 = vmatpush1.msra.mxu0 0.0
    %662 = vmatprep.subr.mxu0 0.0
    %663 = vmatpush1.msra.mxu0 0.0
    %664 = vmatprep.subr.mxu0 0.0
    %665 = vmatpush1.msra.mxu0 0.0
    %666 = vmatprep.subr.mxu0 0.0
    %667 = vmatpush1.msra.mxu0 0.0
    %668 = vmatprep.subr.mxu0 0.0
    %669 = vmatpush1.msra.mxu0 0.0
    %670 = vmatprep.subr.mxu0 0.0
    %671 = vmatpush1.msra.mxu0 0.0
    %672 = vmatprep.subr.mxu0 0.0
    %673 = vmatpush1.msra.mxu0 0.0
    %674 = vmatprep.subr.mxu0 0.0
    %675 = vmatpush1.msra.mxu0 0.0
    %676 = vmatprep.subr.mxu0 0.0
    %677 = vmatpush1.msra.mxu0 0.0
    %678 = vmatprep.subr.mxu0 0.0
    %679 = vmatpush1.msra.mxu0 0.0
    %680 = vmatprep.subr.mxu0 0.0
    %681 = vmatpush1.msra.mxu0 0.0
    %682 = vmatprep.subr.mxu0 0.0
    %683 = vmatpush1.msra.mxu0 0.0
    %684 = vmatprep.subr.mxu0 0.0
    %685 = vmatpush1.msra.mxu0 0.0
    %686 = vmatprep.subr.mxu0 0.0
    %687 = vmatpush1.msra.mxu0 0.0
    %688 = vmatprep.mubr.f32.mxu0 0.0
    %689 = vmatmul.mubr.f32.gmra.mrb[0].mxu0 %v136
    %v690 = vpop.f32.mrb[0].mxu0
    %v691 = vadd.f32 0.0, %v690
    %v692 = vpop.f32.mrb[0].mxu0
    %v693 = vadd.f32 0.0, %v692
    %694 = vdwg.mxu0
    %v695 = vmax.f32 %v691, %v693
    %v696 = vmax.f32 %v695, 0.0
    %v697 = vpack.c.bf16 %v696, %v696
    %s698 = scalar_lea.vmem [#allocation2], 336
    %v699 = vld [vmem:[%s698] sm:$0xff]
    %v700 = vld [vmem:[%s698 + $0x8] sm:$0xff]
    %v701 = vld [vmem:[%s698 + $0x10] sm:$0xff]
    %v702 = vld [vmem:[%s698 + $0x18] sm:$0xff]
    %v703 = vld [vmem:[%s698 + $0x20] sm:$0xff]
    %v704 = vld [vmem:[%s698 + $0x28] sm:$0xff]
    %705 = vmatprep.subr.mxu0 %v700
    %706 = vmatpush1.msra.mxu0 %v699
    %707 = vmatprep.subr.mxu0 %v702
    %708 = vmatpush1.msra.mxu0 %v701
    %709 = vmatprep.subr.mxu0 %v704
    %710 = vmatpush1.msra.mxu0 %v703
    %711 = vmatprep.subr.mxu0 0.0
    %712 = vmatpush1.msra.mxu0 0.0
    %713 = vmatprep.subr.mxu0 0.0
    %714 = vmatpush1.msra.mxu0 0.0
    %715 = vmatprep.subr.mxu0 0.0
    %716 = vmatpush1.msra.mxu0 0.0
    %717 = vmatprep.subr.mxu0 0.0
    %718 = vmatpush1.msra.mxu0 0.0
    %719 = vmatprep.subr.mxu0 0.0
    %720 = vmatpush1.msra.mxu0 0.0
    %721 = vmatprep.subr.mxu0 0.0
    %722 = vmatpush1.msra.mxu0 0.0
    %723 = vmatprep.subr.mxu0 0.0
    %724 = vmatpush1.msra.mxu0 0.0
    %725 = vmatprep.subr.mxu0 0.0
    %726 = vmatpush1.msra.mxu0 0.0
    %727 = vmatprep.subr.mxu0 0.0
    %728 = vmatpush1.msra.mxu0 0.0
    %729 = vmatprep.subr.mxu0 0.0
    %730 = vmatpush1.msra.mxu0 0.0
    %731 = vmatprep.subr.mxu0 0.0
    %732 = vmatpush1.msra.mxu0 0.0
    %733 = vmatprep.subr.mxu0 0.0
    %734 = vmatpush1.msra.mxu0 0.0
    %735 = vmatprep.subr.mxu0 0.0
    %736 = vmatpush1.msra.mxu0 0.0
    %737 = vmatprep.subr.mxu0 0.0
    %738 = vmatpush1.msra.mxu0 0.0
    %739 = vmatprep.subr.mxu0 0.0
    %740 = vmatpush1.msra.mxu0 0.0
    %741 = vmatprep.subr.mxu0 0.0
    %742 = vmatpush1.msra.mxu0 0.0
    %743 = vmatprep.subr.mxu0 0.0
    %744 = vmatpush1.msra.mxu0 0.0
    %745 = vmatprep.subr.mxu0 0.0
    %746 = vmatpush1.msra.mxu0 0.0
    %747 = vmatprep.subr.mxu0 0.0
    %748 = vmatpush1.msra.mxu0 0.0
    %749 = vmatprep.subr.mxu0 0.0
    %750 = vmatpush1.msra.mxu0 0.0
    %751 = vmatprep.subr.mxu0 0.0
    %752 = vmatpush1.msra.mxu0 0.0
    %753 = vmatprep.subr.mxu0 0.0
    %754 = vmatpush1.msra.mxu0 0.0
    %755 = vmatprep.subr.mxu0 0.0
    %756 = vmatpush1.msra.mxu0 0.0
    %757 = vmatprep.subr.mxu0 0.0
    %758 = vmatpush1.msra.mxu0 0.0
    %759 = vmatprep.subr.mxu0 0.0
    %760 = vmatpush1.msra.mxu0 0.0
    %761 = vmatprep.subr.mxu0 0.0
    %762 = vmatpush1.msra.mxu0 0.0
    %763 = vmatprep.subr.mxu0 0.0
    %764 = vmatpush1.msra.mxu0 0.0
    %765 = vmatprep.subr.mxu0 0.0
    %766 = vmatpush1.msra.mxu0 0.0
    %767 = vmatprep.subr.mxu0 0.0
    %768 = vmatpush1.msra.mxu0 0.0
    %769 = vmatprep.mubr.f32.mxu0 0.0
    %770 = vmatmul.mubr.f32.gmra.mrb[0].mxu0 %v136
    %v771 = vpop.f32.mrb[0].mxu0
    %v772 = vadd.f32 0.0, %v771
    %v773 = vpop.f32.mrb[0].mxu0
    %v774 = vadd.f32 0.0, %v773
    %775 = vdwg.mxu0
    %v776 = vmax.f32 %v772, %v774
    %v777 = vmax.f32 %v776, 0.0
    %v778 = vpack.c.bf16 %v777, %v777
    %s779 = scalar_lea.vmem [#allocation2], 384
    %v780 = vld [vmem:[%s779] sm:$0xff]
    %v781 = vld [vmem:[%s779 + $0x8] sm:$0xff]
    %v782 = vld [vmem:[%s779 + $0x10] sm:$0xff]
    %v783 = vld [vmem:[%s779 + $0x18] sm:$0xff]
    %v784 = vld [vmem:[%s779 + $0x20] sm:$0xff]
    %v785 = vld [vmem:[%s779 + $0x28] sm:$0xff]
    %786 = vmatprep.subr.mxu0 %v781
    %787 = vmatpush1.msra.mxu0 %v780
    %788 = vmatprep.subr.mxu0 %v783
    %789 = vmatpush1.msra.mxu0 %v782
    %790 = vmatprep.subr.mxu0 %v785
    %791 = vmatpush1.msra.mxu0 %v784
    %792 = vmatprep.subr.mxu0 0.0
    %793 = vmatpush1.msra.mxu0 0.0
    %794 = vmatprep.subr.mxu0 0.0
    %795 = vmatpush1.msra.mxu0 0.0
    %796 = vmatprep.subr.mxu0 0.0
    %797 = vmatpush1.msra.mxu0 0.0
    %798 = vmatprep.subr.mxu0 0.0
    %799 = vmatpush1.msra.mxu0 0.0
    %800 = vmatprep.subr.mxu0 0.0
    %801 = vmatpush1.msra.mxu0 0.0
    %802 = vmatprep.subr.mxu0 0.0
    %803 = vmatpush1.msra.mxu0 0.0
    %804 = vmatprep.subr.mxu0 0.0
    %805 = vmatpush1.msra.mxu0 0.0
    %806 = vmatprep.subr.mxu0 0.0
    %807 = vmatpush1.msra.mxu0 0.0
    %808 = vmatprep.subr.mxu0 0.0
    %809 = vmatpush1.msra.mxu0 0.0
    %810 = vmatprep.subr.mxu0 0.0
    %811 = vmatpush1.msra.mxu0 0.0
    %812 = vmatprep.subr.mxu0 0.0
    %813 = vmatpush1.msra.mxu0 0.0
    %814 = vmatprep.subr.mxu0 0.0
    %815 = vmatpush1.msra.mxu0 0.0
    %816 = vmatprep.subr.mxu0 0.0
    %817 = vmatpush1.msra.mxu0 0.0
    %818 = vmatprep.subr.mxu0 0.0
    %819 = vmatpush1.msra.mxu0 0.0
    %820 = vmatprep.subr.mxu0 0.0
    %821 = vmatpush1.msra.mxu0 0.0
    %822 = vmatprep.subr.mxu0 0.0
    %823 = vmatpush1.msra.mxu0 0.0
    %824 = vmatprep.subr.mxu0 0.0
    %825 = vmatpush1.msra.mxu0 0.0
    %826 = vmatprep.subr.mxu0 0.0
    %827 = vmatpush1.msra.mxu0 0.0
    %828 = vmatprep.subr.mxu0 0.0
    %829 = vmatpush1.msra.mxu0 0.0
    %830 = vmatprep.subr.mxu0 0.0
    %831 = vmatpush1.msra.mxu0 0.0
    %832 = vmatprep.subr.mxu0 0.0
    %833 = vmatpush1.msra.mxu0 0.0
    %834 = vmatprep.subr.mxu0 0.0
    %835 = vmatpush1.msra.mxu0 0.0
    %836 = vmatprep.subr.mxu0 0.0
    %837 = vmatpush1.msra.mxu0 0.0
    %838 = vmatprep.subr.mxu0 0.0
    %839 = vmatpush1.msra.mxu0 0.0
    %840 = vmatprep.subr.mxu0 0.0
    %841 = vmatpush1.msra.mxu0 0.0
    %842 = vmatprep.subr.mxu0 0.0
    %843 = vmatpush1.msra.mxu0 0.0
    %844 = vmatprep.subr.mxu0 0.0
    %845 = vmatpush1.msra.mxu0 0.0
    %846 = vmatprep.subr.mxu0 0.0
    %847 = vmatpush1.msra.mxu0 0.0
    %848 = vmatprep.subr.mxu0 0.0
    %849 = vmatpush1.msra.mxu0 0.0
    %850 = vmatprep.mubr.f32.mxu0 0.0
    %851 = vmatmul.mubr.f32.gmra.mrb[0].mxu0 %v136
    %v852 = vpop.f32.mrb[0].mxu0
    %v853 = vadd.f32 0.0, %v852
    %v854 = vpop.f32.mrb[0].mxu0
    %v855 = vadd.f32 0.0, %v854
    %856 = vdwg.mxu0
    %v857 = vmax.f32 %v853, %v855
    %v858 = vmax.f32 %v857, 0.0
    %v859 = vpack.c.bf16 %v858, %v858
    %s860 = scalar_lea.vmem [#allocation2], 432
    %v861 = vld [vmem:[%s860] sm:$0xff]
    %v862 = vld [vmem:[%s860 + $0x8] sm:$0xff]
    %v863 = vld [vmem:[%s860 + $0x10] sm:$0xff]
    %v864 = vld [vmem:[%s860 + $0x18] sm:$0xff]
    %v865 = vld [vmem:[%s860 + $0x20] sm:$0xff]
    %v866 = vld [vmem:[%s860 + $0x28] sm:$0xff]
    %867 = vmatprep.subr.mxu0 %v862
    %868 = vmatpush1.msra.mxu0 %v861
    %869 = vmatprep.subr.mxu0 %v864
    %870 = vmatpush1.msra.mxu0 %v863
    %871 = vmatprep.subr.mxu0 %v866
    %872 = vmatpush1.msra.mxu0 %v865
    %873 = vmatprep.subr.mxu0 0.0
    %874 = vmatpush1.msra.mxu0 0.0
    %875 = vmatprep.subr.mxu0 0.0
    %876 = vmatpush1.msra.mxu0 0.0
    %877 = vmatprep.subr.mxu0 0.0
    %878 = vmatpush1.msra.mxu0 0.0
    %879 = vmatprep.subr.mxu0 0.0
    %880 = vmatpush1.msra.mxu0 0.0
    %881 = vmatprep.subr.mxu0 0.0
    %882 = vmatpush1.msra.mxu0 0.0
    %883 = vmatprep.subr.mxu0 0.0
    %884 = vmatpush1.msra.mxu0 0.0
    %885 = vmatprep.subr.mxu0 0.0
    %886 = vmatpush1.msra.mxu0 0.0
    %887 = vmatprep.subr.mxu0 0.0
    %888 = vmatpush1.msra.mxu0 0.0
    %889 = vmatprep.subr.mxu0 0.0
    %890 = vmatpush1.msra.mxu0 0.0
    %891 = vmatprep.subr.mxu0 0.0
    %892 = vmatpush1.msra.mxu0 0.0
    %893 = vmatprep.subr.mxu0 0.0
    %894 = vmatpush1.msra.mxu0 0.0
    %895 = vmatprep.subr.mxu0 0.0
    %896 = vmatpush1.msra.mxu0 0.0
    %897 = vmatprep.subr.mxu0 0.0
    %898 = vmatpush1.msra.mxu0 0.0
    %899 = vmatprep.subr.mxu0 0.0
    %900 = vmatpush1.msra.mxu0 0.0
    %901 = vmatprep.subr.mxu0 0.0
    %902 = vmatpush1.msra.mxu0 0.0
    %903 = vmatprep.subr.mxu0 0.0
    %904 = vmatpush1.msra.mxu0 0.0
    %905 = vmatprep.subr.mxu0 0.0
    %906 = vmatpush1.msra.mxu0 0.0
    %907 = vmatprep.subr.mxu0 0.0
    %908 = vmatpush1.msra.mxu0 0.0
    %909 = vmatprep.subr.mxu0 0.0
    %910 = vmatpush1.msra.mxu0 0.0
    %911 = vmatprep.subr.mxu0 0.0
    %912 = vmatpush1.msra.mxu0 0.0
    %913 = vmatprep.subr.mxu0 0.0
    %914 = vmatpush1.msra.mxu0 0.0
    %915 = vmatprep.subr.mxu0 0.0
    %916 = vmatpush1.msra.mxu0 0.0
    %917 = vmatprep.subr.mxu0 0.0
    %918 = vmatpush1.msra.mxu0 0.0
    %919 = vmatprep.subr.mxu0 0.0
    %920 = vmatpush1.msra.mxu0 0.0
    %921 = vmatprep.subr.mxu0 0.0
    %922 = vmatpush1.msra.mxu0 0.0
    %923 = vmatprep.subr.mxu0 0.0
    %924 = vmatpush1.msra.mxu0 0.0
    %925 = vmatprep.subr.mxu0 0.0
    %926 = vmatpush1.msra.mxu0 0.0
    %927 = vmatprep.subr.mxu0 0.0
    %928 = vmatpush1.msra.mxu0 0.0
    %929 = vmatprep.subr.mxu0 0.0
    %930 = vmatpush1.msra.mxu0 0.0
    %931 = vmatprep.mubr.f32.mxu0 0.0
    %932 = vmatmul.mubr.f32.gmra.mrb[0].mxu0 %v136
    %v933 = vpop.f32.mrb[0].mxu0
    %v934 = vadd.f32 0.0, %v933
    %v935 = vpop.f32.mrb[0].mxu0
    %v936 = vadd.f32 0.0, %v935
    %937 = vdwg.mxu0
    %v938 = vmax.f32 %v934, %v936
    %v939 = vmax.f32 %v938, 0.0
    %v940 = vpack.c.bf16 %v939, %v939
    %v942 = vrot.slane %v211, 4
    %v944 = vrot.slane %v373, 4
    %v946 = vrot.slane %v535, 4
    %v948 = vrot.slane %v697, 4
    %v950 = vrot.slane %v859, 4
    %vm951 = vcmask 1043456
    %v954 = vsel %vm951, 0, %v942
    %v958 = vsel %vm951, %v292, %v944
    %v962 = vsel %vm951, %v454, %v946
    %v966 = vsel %vm951, %v616, %v948
    %v970 = vsel %vm951, %v778, %v950
    %v973 = vsel %vm951, %v940, 0
    %v975 = vld [vmem:[#allocation4] sm:$0xf]
    %v976 = vld [vmem:[#allocation4 + $0x4] sm:$0xf]
    %v977 = vld [vmem:[#allocation4 + $0x8] sm:$0xf]
    %v978 = vld [vmem:[#allocation4 + $0xc] sm:$0xf]
    %v979 = vld [vmem:[#allocation4 + $0x10] sm:$0xf]
    %v980 = vld [vmem:[#allocation4 + $0x14] sm:$0xf]
    %v981 = vld [vmem:[#allocation4 + $0x18] sm:$0xf]
    %v982 = vld [vmem:[#allocation4 + $0x1c] sm:$0xf]
    %v983 = vld [vmem:[#allocation4 + $0x20] sm:$0xf]
    %v984 = vld [vmem:[#allocation4 + $0x24] sm:$0xf]
    %v985 = vld [vmem:[#allocation4 + $0x28] sm:$0xf]
    %v986 = vld [vmem:[#allocation4 + $0x2c] sm:$0xf]
    %v987 = vld [vmem:[#allocation4 + $0x30] sm:$0xf]
    %v988 = vld [vmem:[#allocation4 + $0x34] sm:$0xf]
    %v989 = vld [vmem:[#allocation4 + $0x38] sm:$0xf]
    %v990 = vld [vmem:[#allocation4 + $0x3c] sm:$0xf]
    %s991 = scalar_lea.vmem [#allocation4], 64
    %v992 = vld [vmem:[%s991] sm:$0xf]
    %v993 = vld [vmem:[%s991 + $0x4] sm:$0xf]
    %v994 = vld [vmem:[%s991 + $0x8] sm:$0xf]
    %v995 = vld [vmem:[%s991 + $0xc] sm:$0xf]
    %v996 = vld [vmem:[%s991 + $0x10] sm:$0xf]
    %v997 = vld [vmem:[%s991 + $0x14] sm:$0xf]
    %v998 = vld [vmem:[%s991 + $0x18] sm:$0xf]
    %v999 = vld [vmem:[%s991 + $0x1c] sm:$0xf]
    %v1000 = vld [vmem:[%s991 + $0x20] sm:$0xf]
    %v1001 = vld [vmem:[%s991 + $0x24] sm:$0xf]
    %v1002 = vld [vmem:[%s991 + $0x28] sm:$0xf]
    %v1003 = vld [vmem:[%s991 + $0x2c] sm:$0xf]
    %v1004 = vld [vmem:[%s991 + $0x30] sm:$0xf]
    %v1005 = vld [vmem:[%s991 + $0x34] sm:$0xf]
    %v1006 = vld [vmem:[%s991 + $0x38] sm:$0xf]
    %v1007 = vld [vmem:[%s991 + $0x3c] sm:$0xf]
    %vm1014 = vcmask 1043456
    %v1015 = vrot.slane %v954, 4
    %v1016 = vrot.slane %v958, 4
    %v1017 = vsel %vm1014, %v1015, %v1016
    %v1018 = vrot.slane %v962, 4
    %v1019 = vsel %vm1014, %v1016, %v1018
    %v1020 = vrot.slane %v966, 4
    %v1021 = vsel %vm1014, %v1018, %v1020
    %v1022 = vrot.slane %v970, 4
    %v1023 = vsel %vm1014, %v1020, %v1022
    %v1024 = vrot.slane %v973, 4
    %v1025 = vsel %vm1014, %v1022, %v1024
    %v1047 = vunpack.c.l.b16 %v992
    %v1048 = vunpack.c.l.b16 %v993
    %v1049 = vunpack.c.l.b16 %v994
    %v1050 = vunpack.c.l.b16 %v995
    %v1051 = vunpack.c.l.b16 %v996
    %v1052 = vunpack.c.l.b16 %v997
    %v1053 = vunpack.c.l.b16 %v998
    %v1054 = vunpack.c.l.b16 %v999
    %v1055 = vunpack.c.l.b16 %v1000
    %v1056 = vunpack.c.l.b16 %v1001
    %v1057 = vunpack.c.l.b16 %v1002
    %v1058 = vunpack.c.l.b16 %v1003
    %v1059 = vunpack.c.l.b16 %v1004
    %v1060 = vunpack.c.l.b16 %v1005
    %v1061 = vunpack.c.l.b16 %v1006
    %v1062 = vunpack.c.l.b16 %v1007
    %v1063 = vpack.c.b16 %v1048, %v1047
    %v1064 = vpack.c.b16 %v1050, %v1049
    %v1065 = vpack.c.b16 %v1052, %v1051
    %v1066 = vpack.c.b16 %v1054, %v1053
    %v1067 = vpack.c.b16 %v1056, %v1055
    %v1068 = vpack.c.b16 %v1058, %v1057
    %v1069 = vpack.c.b16 %v1060, %v1059
    %v1070 = vpack.c.b16 %v1062, %v1061
    %1079 = vmatprep.subr.bf16.mxu0 0
    %1080 = vmatpush1.bf16.msra.mxu0 %v1063
    %1081 = vmatprep.subr.bf16.mxu0 0
    %1082 = vmatpush1.bf16.msra.mxu0 %v1064
    %1083 = vmatprep.subr.bf16.mxu0 0
    %1084 = vmatpush1.bf16.msra.mxu0 %v1065
    %1085 = vmatprep.subr.bf16.mxu0 0
    %1086 = vmatpush1.bf16.msra.mxu0 %v1066
    %1087 = vmatprep.subr.bf16.mxu0 0
    %1088 = vmatpush1.bf16.msra.mxu0 %v1067
    %1089 = vmatprep.subr.bf16.mxu0 0
    %1090 = vmatpush1.bf16.msra.mxu0 %v1068
    %1091 = vmatprep.subr.bf16.mxu0 0
    %1092 = vmatpush1.bf16.msra.mxu0 %v1069
    %1093 = vmatprep.subr.bf16.mxu0 0
    %1094 = vmatpush1.bf16.msra.mxu0 %v1070
    %1095 = vmatprep.subr.bf16.mxu0 0
    %1096 = vmatpush1.bf16.msra.mxu0 0
    %1097 = vmatprep.subr.bf16.mxu0 0
    %1098 = vmatpush1.bf16.msra.mxu0 0
    %1099 = vmatprep.subr.bf16.mxu0 0
    %1100 = vmatpush1.bf16.msra.mxu0 0
    %1101 = vmatprep.subr.bf16.mxu0 0
    %1102 = vmatpush1.bf16.msra.mxu0 0
    %1103 = vmatprep.subr.bf16.mxu0 0
    %1104 = vmatpush1.bf16.msra.mxu0 0
    %1105 = vmatprep.subr.bf16.mxu0 0
    %1106 = vmatpush1.bf16.msra.mxu0 0
    %1107 = vmatprep.subr.bf16.mxu0 0
    %1108 = vmatpush1.bf16.msra.mxu0 0
    %1109 = vmatprep.subr.bf16.mxu0 0
    %1110 = vmatpush1.bf16.msra.mxu0 0
    %1111 = vmatprep.mubr.bf16.mxu0 0
    %1112 = vmatmul.mubr.bf16.gmra.mrb[0].mxu0 %v1017
    %v1113 = vpop.f32.mrb[0].mxu0
    %v1114 = vadd.f32 0.0, %v1113
    %v1115 = vpop.f32.mrb[0].mxu0
    %v1116 = vpop.f32.mrb[0].mxu0
    %v1117 = vadd.f32 0.0, %v1116
    %v1118 = vpop.f32.mrb[0].mxu0
    %1119 = vmatprep.mubr.bf16.mxu0 0
    %1120 = vmatmul.mubr.bf16.gmra.mrb[0].mxu0 %v1019
    %v1121 = vpop.f32.mrb[0].mxu0
    %v1122 = vadd.f32 0.0, %v1121
    %v1123 = vpop.f32.mrb[0].mxu0
    %v1124 = vpop.f32.mrb[0].mxu0
    %v1125 = vadd.f32 0.0, %v1124
    %v1126 = vpop.f32.mrb[0].mxu0
    %1127 = vmatprep.mubr.bf16.mxu0 0
    %1128 = vmatmul.mubr.bf16.gmra.mrb[0].mxu0 %v1021
    %v1129 = vpop.f32.mrb[0].mxu0
    %v1130 = vadd.f32 0.0, %v1129
    %v1131 = vpop.f32.mrb[0].mxu0
    %v1132 = vpop.f32.mrb[0].mxu0
    %v1133 = vadd.f32 0.0, %v1132
    %v1134 = vpop.f32.mrb[0].mxu0
    %1135 = vmatprep.mubr.bf16.mxu0 0
    %1136 = vmatmul.mubr.bf16.gmra.mrb[0].mxu0 %v1023
    %v1137 = vpop.f32.mrb[0].mxu0
    %v1138 = vadd.f32 0.0, %v1137
    %v1139 = vpop.f32.mrb[0].mxu0
    %v1140 = vpop.f32.mrb[0].mxu0
    %v1141 = vadd.f32 0.0, %v1140
    %v1142 = vpop.f32.mrb[0].mxu0
    %1143 = vmatprep.mubr.bf16.mxu0 0
    %1144 = vmatmul.mubr.bf16.gmra.mrb[0].mxu0 %v1025
    %v1145 = vpop.f32.mrb[0].mxu0
    %v1146 = vadd.f32 0.0, %v1145
    %v1147 = vpop.f32.mrb[0].mxu0
    %v1148 = vpop.f32.mrb[0].mxu0
    %v1149 = vadd.f32 0.0, %v1148
    %v1150 = vpop.f32.mrb[0].mxu0
    %1151 = vdwg.mxu0
    %v1168 = vunpack.c.l.b16 %v975
    %v1169 = vunpack.c.l.b16 %v976
    %v1170 = vunpack.c.l.b16 %v977
    %v1171 = vunpack.c.l.b16 %v978
    %v1172 = vunpack.c.l.b16 %v979
    %v1173 = vunpack.c.l.b16 %v980
    %v1174 = vunpack.c.l.b16 %v981
    %v1175 = vunpack.c.l.b16 %v982
    %v1176 = vunpack.c.l.b16 %v983
    %v1177 = vunpack.c.l.b16 %v984
    %v1178 = vunpack.c.l.b16 %v985
    %v1179 = vunpack.c.l.b16 %v986
    %v1180 = vunpack.c.l.b16 %v987
    %v1181 = vunpack.c.l.b16 %v988
    %v1182 = vunpack.c.l.b16 %v989
    %v1183 = vunpack.c.l.b16 %v990
    %v1184 = vpack.c.b16 %v1169, %v1168
    %v1185 = vpack.c.b16 %v1171, %v1170
    %v1186 = vpack.c.b16 %v1173, %v1172
    %v1187 = vpack.c.b16 %v1175, %v1174
    %v1188 = vpack.c.b16 %v1177, %v1176
    %v1189 = vpack.c.b16 %v1179, %v1178
    %v1190 = vpack.c.b16 %v1181, %v1180
    %v1191 = vpack.c.b16 %v1183, %v1182
    %1200 = vmatprep.subr.bf16.mxu0 0
    %1201 = vmatpush1.bf16.msra.mxu0 %v1184
    %1202 = vmatprep.subr.bf16.mxu0 0
    %1203 = vmatpush1.bf16.msra.mxu0 %v1185
    %1204 = vmatprep.subr.bf16.mxu0 0
    %1205 = vmatpush1.bf16.msra.mxu0 %v1186
    %1206 = vmatprep.subr.bf16.mxu0 0
    %1207 = vmatpush1.bf16.msra.mxu0 %v1187
    %1208 = vmatprep.subr.bf16.mxu0 0
    %1209 = vmatpush1.bf16.msra.mxu0 %v1188
    %1210 = vmatprep.subr.bf16.mxu0 0
    %1211 = vmatpush1.bf16.msra.mxu0 %v1189
    %1212 = vmatprep.subr.bf16.mxu0 0
    %1213 = vmatpush1.bf16.msra.mxu0 %v1190
    %1214 = vmatprep.subr.bf16.mxu0 0
    %1215 = vmatpush1.bf16.msra.mxu0 %v1191
    %1216 = vmatprep.subr.bf16.mxu0 0
    %1217 = vmatpush1.bf16.msra.mxu0 0
    %1218 = vmatprep.subr.bf16.mxu0 0
    %1219 = vmatpush1.bf16.msra.mxu0 0
    %1220 = vmatprep.subr.bf16.mxu0 0
    %1221 = vmatpush1.bf16.msra.mxu0 0
    %1222 = vmatprep.subr.bf16.mxu0 0
    %1223 = vmatpush1.bf16.msra.mxu0 0
    %1224 = vmatprep.subr.bf16.mxu0 0
    %1225 = vmatpush1.bf16.msra.mxu0 0
    %1226 = vmatprep.subr.bf16.mxu0 0
    %1227 = vmatpush1.bf16.msra.mxu0 0
    %1228 = vmatprep.subr.bf16.mxu0 0
    %1229 = vmatpush1.bf16.msra.mxu0 0
    %1230 = vmatprep.subr.bf16.mxu0 0
    %1231 = vmatpush1.bf16.msra.mxu0 0
    %1232 = vmatprep.mubr.bf16.mxu0 0
    %1233 = vmatmul.mubr.bf16.gmra.mrb[0].mxu0 %v954
    %v1234 = vpop.f32.mrb[0].mxu0
    %v1235 = vadd.f32 %v1114, %v1234
    %v1236 = vpop.f32.mrb[0].mxu0
    %v1237 = vpop.f32.mrb[0].mxu0
    %v1238 = vadd.f32 %v1117, %v1237
    %v1239 = vpop.f32.mrb[0].mxu0
    %1240 = vmatprep.mubr.bf16.mxu0 0
    %1241 = vmatmul.mubr.bf16.gmra.mrb[0].mxu0 %v958
    %v1242 = vpop.f32.mrb[0].mxu0
    %v1243 = vadd.f32 %v1122, %v1242
    %v1244 = vpop.f32.mrb[0].mxu0
    %v1245 = vpop.f32.mrb[0].mxu0
    %v1246 = vadd.f32 %v1125, %v1245
    %v1247 = vpop.f32.mrb[0].mxu0
    %1248 = vmatprep.mubr.bf16.mxu0 0
    %1249 = vmatmul.mubr.bf16.gmra.mrb[0].mxu0 %v962
    %v1250 = vpop.f32.mrb[0].mxu0
    %v1251 = vadd.f32 %v1130, %v1250
    %v1252 = vpop.f32.mrb[0].mxu0
    %v1253 = vpop.f32.mrb[0].mxu0
    %v1254 = vadd.f32 %v1133, %v1253
    %v1255 = vpop.f32.mrb[0].mxu0
    %1256 = vmatprep.mubr.bf16.mxu0 0
    %1257 = vmatmul.mubr.bf16.gmra.mrb[0].mxu0 %v966
    %v1258 = vpop.f32.mrb[0].mxu0
    %v1259 = vadd.f32 %v1138, %v1258
    %v1260 = vpop.f32.mrb[0].mxu0
    %v1261 = vpop.f32.mrb[0].mxu0
    %v1262 = vadd.f32 %v1141, %v1261
    %v1263 = vpop.f32.mrb[0].mxu0
    %1264 = vmatprep.mubr.bf16.mxu0 0
    %1265 = vmatmul.mubr.bf16.gmra.mrb[0].mxu0 %v970
    %v1266 = vpop.f32.mrb[0].mxu0
    %v1267 = vadd.f32 %v1146, %v1266
    %v1268 = vpop.f32.mrb[0].mxu0
    %v1269 = vpop.f32.mrb[0].mxu0
    %v1270 = vadd.f32 %v1149, %v1269
    %v1271 = vpop.f32.mrb[0].mxu0
    %1272 = vdwg.mxu0
    %s1273 = scalar_lea.vmem [#allocation4], 128
    %v1274 = vld [vmem:[%s1273] sm:$0xf]
    %v1275 = vld [vmem:[%s1273 + $0x4] sm:$0xf]
    %v1276 = vld [vmem:[%s1273 + $0x8] sm:$0xf]
    %v1277 = vld [vmem:[%s1273 + $0xc] sm:$0xf]
    %v1278 = vld [vmem:[%s1273 + $0x10] sm:$0xf]
    %v1279 = vld [vmem:[%s1273 + $0x14] sm:$0xf]
    %v1280 = vld [vmem:[%s1273 + $0x18] sm:$0xf]
    %v1281 = vld [vmem:[%s1273 + $0x1c] sm:$0xf]
    %v1282 = vld [vmem:[%s1273 + $0x20] sm:$0xf]
    %v1283 = vld [vmem:[%s1273 + $0x24] sm:$0xf]
    %v1284 = vld [vmem:[%s1273 + $0x28] sm:$0xf]
    %v1285 = vld [vmem:[%s1273 + $0x2c] sm:$0xf]
    %v1286 = vld [vmem:[%s1273 + $0x30] sm:$0xf]
    %v1287 = vld [vmem:[%s1273 + $0x34] sm:$0xf]
    %v1288 = vld [vmem:[%s1273 + $0x38] sm:$0xf]
    %v1289 = vld [vmem:[%s1273 + $0x3c] sm:$0xf]
    %v1306 = vunpack.c.l.b16 %v1274
    %v1307 = vunpack.c.l.b16 %v1275
    %v1308 = vunpack.c.l.b16 %v1276
    %v1309 = vunpack.c.l.b16 %v1277
    %v1310 = vunpack.c.l.b16 %v1278
    %v1311 = vunpack.c.l.b16 %v1279
    %v1312 = vunpack.c.l.b16 %v1280
    %v1313 = vunpack.c.l.b16 %v1281
    %v1314 = vunpack.c.l.b16 %v1282
    %v1315 = vunpack.c.l.b16 %v1283
    %v1316 = vunpack.c.l.b16 %v1284
    %v1317 = vunpack.c.l.b16 %v1285
    %v1318 = vunpack.c.l.b16 %v1286
    %v1319 = vunpack.c.l.b16 %v1287
    %v1320 = vunpack.c.l.b16 %v1288
    %v1321 = vunpack.c.l.b16 %v1289
    %v1322 = vpack.c.b16 %v1307, %v1306
    %v1323 = vpack.c.b16 %v1309, %v1308
    %v1324 = vpack.c.b16 %v1311, %v1310
    %v1325 = vpack.c.b16 %v1313, %v1312
    %v1326 = vpack.c.b16 %v1315, %v1314
    %v1327 = vpack.c.b16 %v1317, %v1316
    %v1328 = vpack.c.b16 %v1319, %v1318
    %v1329 = vpack.c.b16 %v1321, %v1320
    %1338 = vmatprep.subr.bf16.mxu0 0
    %1339 = vmatpush1.bf16.msra.mxu0 %v1322
    %1340 = vmatprep.subr.bf16.mxu0 0
    %1341 = vmatpush1.bf16.msra.mxu0 %v1323
    %1342 = vmatprep.subr.bf16.mxu0 0
    %1343 = vmatpush1.bf16.msra.mxu0 %v1324
    %1344 = vmatprep.subr.bf16.mxu0 0
    %1345 = vmatpush1.bf16.msra.mxu0 %v1325
    %1346 = vmatprep.subr.bf16.mxu0 0
    %1347 = vmatpush1.bf16.msra.mxu0 %v1326
    %1348 = vmatprep.subr.bf16.mxu0 0
    %1349 = vmatpush1.bf16.msra.mxu0 %v1327
    %1350 = vmatprep.subr.bf16.mxu0 0
    %1351 = vmatpush1.bf16.msra.mxu0 %v1328
    %1352 = vmatprep.subr.bf16.mxu0 0
    %1353 = vmatpush1.bf16.msra.mxu0 %v1329
    %1354 = vmatprep.subr.bf16.mxu0 0
    %1355 = vmatpush1.bf16.msra.mxu0 0
    %1356 = vmatprep.subr.bf16.mxu0 0
    %1357 = vmatpush1.bf16.msra.mxu0 0
    %1358 = vmatprep.subr.bf16.mxu0 0
    %1359 = vmatpush1.bf16.msra.mxu0 0
    %1360 = vmatprep.subr.bf16.mxu0 0
    %1361 = vmatpush1.bf16.msra.mxu0 0
    %1362 = vmatprep.subr.bf16.mxu0 0
    %1363 = vmatpush1.bf16.msra.mxu0 0
    %1364 = vmatprep.subr.bf16.mxu0 0
    %1365 = vmatpush1.bf16.msra.mxu0 0
    %1366 = vmatprep.subr.bf16.mxu0 0
    %1367 = vmatpush1.bf16.msra.mxu0 0
    %1368 = vmatprep.subr.bf16.mxu0 0
    %1369 = vmatpush1.bf16.msra.mxu0 0
    %1370 = vmatprep.mubr.bf16.mxu0 0
    %1371 = vmatmul.mubr.bf16.gmra.mrb[0].mxu0 %v958
    %v1372 = vpop.f32.mrb[0].mxu0
    %v1373 = vadd.f32 0.0, %v1372
    %v1374 = vpop.f32.mrb[0].mxu0
    %v1375 = vpop.f32.mrb[0].mxu0
    %v1376 = vadd.f32 0.0, %v1375
    %v1377 = vpop.f32.mrb[0].mxu0
    %1378 = vmatprep.mubr.bf16.mxu0 0
    %1379 = vmatmul.mubr.bf16.gmra.mrb[0].mxu0 %v962
    %v1380 = vpop.f32.mrb[0].mxu0
    %v1381 = vadd.f32 0.0, %v1380
    %v1382 = vpop.f32.mrb[0].mxu0
    %v1383 = vpop.f32.mrb[0].mxu0
    %v1384 = vadd.f32 0.0, %v1383
    %v1385 = vpop.f32.mrb[0].mxu0
    %1386 = vmatprep.mubr.bf16.mxu0 0
    %1387 = vmatmul.mubr.bf16.gmra.mrb[0].mxu0 %v966
    %v1388 = vpop.f32.mrb[0].mxu0
    %v1389 = vadd.f32 0.0, %v1388
    %v1390 = vpop.f32.mrb[0].mxu0
    %v1391 = vpop.f32.mrb[0].mxu0
    %v1392 = vadd.f32 0.0, %v1391
    %v1393 = vpop.f32.mrb[0].mxu0
    %1394 = vmatprep.mubr.bf16.mxu0 0
    %1395 = vmatmul.mubr.bf16.gmra.mrb[0].mxu0 %v970
    %v1396 = vpop.f32.mrb[0].mxu0
    %v1397 = vadd.f32 0.0, %v1396
    %v1398 = vpop.f32.mrb[0].mxu0
    %v1399 = vpop.f32.mrb[0].mxu0
    %v1400 = vadd.f32 0.0, %v1399
    %v1401 = vpop.f32.mrb[0].mxu0
    %1402 = vmatprep.mubr.bf16.mxu0 0
    %1403 = vmatmul.mubr.bf16.gmra.mrb[0].mxu0 %v973
    %v1404 = vpop.f32.mrb[0].mxu0
    %v1405 = vadd.f32 0.0, %v1404
    %v1406 = vpop.f32.mrb[0].mxu0
    %v1407 = vpop.f32.mrb[0].mxu0
    %v1408 = vadd.f32 0.0, %v1407
    %v1409 = vpop.f32.mrb[0].mxu0
    %1410 = vdwg.mxu0
    %v1411 = vadd.f32 %v1235, %v1373
    %v1412 = vadd.f32 %v1238, %v1376
    %v1413 = vadd.f32 %v1243, %v1381
    %v1414 = vadd.f32 %v1246, %v1384
    %v1415 = vadd.f32 %v1251, %v1389
    %v1416 = vadd.f32 %v1254, %v1392
    %v1417 = vadd.f32 %v1259, %v1397
    %v1418 = vadd.f32 %v1262, %v1400
    %v1419 = vadd.f32 %v1267, %v1405
    %v1420 = vadd.f32 %v1270, %v1408
    %v1421 = vld [vmem:[%s3] sm:$0x1]
    %v1423 = vlaneseq
    %v1424 = vshrl.u32 %v1423, 7
    %v1425 = vsub.s32 0, %v1424
    %v1426 = vrot.slane %v1421, %v1425
    %v1428 = vadd.f32 %v1411, %v1426
    %v1429 = vadd.f32 %v1412, %v1426
    %v1430 = vadd.f32 %v1413, %v1426
    %v1431 = vadd.f32 %v1414, %v1426
    %v1432 = vadd.f32 %v1415, %v1426
    %v1433 = vadd.f32 %v1416, %v1426
    %v1434 = vadd.f32 %v1417, %v1426
    %v1435 = vadd.f32 %v1418, %v1426
    %v1436 = vadd.f32 %v1419, %v1426
    %v1437 = vadd.f32 %v1420, %v1426
    %v1438 = vmax.f32 %v1428, 0.0
    %v1439 = vmax.f32 %v1429, 0.0
    %v1440 = vmax.f32 %v1430, 0.0
    %v1441 = vmax.f32 %v1431, 0.0
    %v1442 = vmax.f32 %v1432, 0.0
    %v1443 = vmax.f32 %v1433, 0.0
    %v1444 = vmax.f32 %v1434, 0.0
    %v1445 = vmax.f32 %v1435, 0.0
    %v1446 = vmax.f32 %v1436, 0.0
    %v1447 = vmax.f32 %v1437, 0.0
    %v1448 = vmax.f32 %v1438, %v1439
    %v1449 = vmax.f32 %v1448, %v1440
    %v1450 = vmax.f32 %v1449, %v1441
    %v1451 = vpack.c.bf16 %v1450, %v1450
    %v1452 = vmax.f32 %v1440, %v1441
    %v1453 = vmax.f32 %v1452, %v1442
    %v1454 = vmax.f32 %v1453, %v1443
    %v1455 = vpack.c.bf16 %v1454, %v1454
    %v1456 = vmax.f32 %v1442, %v1443
    %v1457 = vmax.f32 %v1456, %v1444
    %v1458 = vmax.f32 %v1457, %v1445
    %v1459 = vpack.c.bf16 %v1458, %v1458
    %v1460 = vmax.f32 %v1444, %v1445
    %v1461 = vmax.f32 %v1460, %v1446
    %v1462 = vmax.f32 %v1461, %v1447
    %v1463 = vpack.c.bf16 %v1462, %v1462
    %v1465 = vrot.slane %v1451, 4
    %v1467 = vrot.slane %v1459, 4
    %v1469 = vsel %vm951, 0, %v1465
    %v1473 = vsel %vm951, %v1455, %v1467
    %v1476 = vsel %vm951, %v1463, 0
    %v1478 = vld [vmem:[#allocation6] sm:$0xf]
    %v1479 = vld [vmem:[#allocation6 + $0x4] sm:$0xf]
    %v1480 = vld [vmem:[#allocation6 + $0x8] sm:$0xf]
    %v1481 = vld [vmem:[#allocation6 + $0xc] sm:$0xf]
    %v1482 = vld [vmem:[#allocation6 + $0x10] sm:$0xf]
    %v1483 = vld [vmem:[#allocation6 + $0x14] sm:$0xf]
    %v1484 = vld [vmem:[#allocation6 + $0x18] sm:$0xf]
    %v1485 = vld [vmem:[#allocation6 + $0x1c] sm:$0xf]
    %v1486 = vld [vmem:[#allocation6 + $0x20] sm:$0xf]
    %v1487 = vld [vmem:[#allocation6 + $0x24] sm:$0xf]
    %v1488 = vld [vmem:[#allocation6 + $0x28] sm:$0xf]
    %v1489 = vld [vmem:[#allocation6 + $0x2c] sm:$0xf]
    %v1490 = vld [vmem:[#allocation6 + $0x30] sm:$0xf]
    %v1491 = vld [vmem:[#allocation6 + $0x34] sm:$0xf]
    %v1492 = vld [vmem:[#allocation6 + $0x38] sm:$0xf]
    %v1493 = vld [vmem:[#allocation6 + $0x3c] sm:$0xf]
    %s1494 = scalar_lea.vmem [#allocation6], 64
    %v1495 = vld [vmem:[%s1494] sm:$0xf]
    %v1496 = vld [vmem:[%s1494 + $0x4] sm:$0xf]
    %v1497 = vld [vmem:[%s1494 + $0x8] sm:$0xf]
    %v1498 = vld [vmem:[%s1494 + $0xc] sm:$0xf]
    %v1499 = vld [vmem:[%s1494 + $0x10] sm:$0xf]
    %v1500 = vld [vmem:[%s1494 + $0x14] sm:$0xf]
    %v1501 = vld [vmem:[%s1494 + $0x18] sm:$0xf]
    %v1502 = vld [vmem:[%s1494 + $0x1c] sm:$0xf]
    %v1503 = vld [vmem:[%s1494 + $0x20] sm:$0xf]
    %v1504 = vld [vmem:[%s1494 + $0x24] sm:$0xf]
    %v1505 = vld [vmem:[%s1494 + $0x28] sm:$0xf]
    %v1506 = vld [vmem:[%s1494 + $0x2c] sm:$0xf]
    %v1507 = vld [vmem:[%s1494 + $0x30] sm:$0xf]
    %v1508 = vld [vmem:[%s1494 + $0x34] sm:$0xf]
    %v1509 = vld [vmem:[%s1494 + $0x38] sm:$0xf]
    %v1510 = vld [vmem:[%s1494 + $0x3c] sm:$0xf]
    %v1514 = vrot.slane %v1469, 4
    %v1515 = vrot.slane %v1473, 4
    %v1516 = vsel %vm1014, %v1514, %v1515
    %v1517 = vrot.slane %v1476, 4
    %v1518 = vsel %vm1014, %v1515, %v1517
    %v1537 = vunpack.c.l.b16 %v1495
    %v1538 = vunpack.c.l.b16 %v1496
    %v1539 = vunpack.c.l.b16 %v1497
    %v1540 = vunpack.c.l.b16 %v1498
    %v1541 = vunpack.c.l.b16 %v1499
    %v1542 = vunpack.c.l.b16 %v1500
    %v1543 = vunpack.c.l.b16 %v1501
    %v1544 = vunpack.c.l.b16 %v1502
    %v1545 = vunpack.c.l.b16 %v1503
    %v1546 = vunpack.c.l.b16 %v1504
    %v1547 = vunpack.c.l.b16 %v1505
    %v1548 = vunpack.c.l.b16 %v1506
    %v1549 = vunpack.c.l.b16 %v1507
    %v1550 = vunpack.c.l.b16 %v1508
    %v1551 = vunpack.c.l.b16 %v1509
    %v1552 = vunpack.c.l.b16 %v1510
    %v1553 = vpack.c.b16 %v1538, %v1537
    %v1554 = vpack.c.b16 %v1540, %v1539
    %v1555 = vpack.c.b16 %v1542, %v1541
    %v1556 = vpack.c.b16 %v1544, %v1543
    %v1557 = vpack.c.b16 %v1546, %v1545
    %v1558 = vpack.c.b16 %v1548, %v1547
    %v1559 = vpack.c.b16 %v1550, %v1549
    %v1560 = vpack.c.b16 %v1552, %v1551
    %1569 = vmatprep.subr.bf16.mxu0 0
    %1570 = vmatpush1.bf16.msra.mxu0 %v1553
    %1571 = vmatprep.subr.bf16.mxu0 0
    %1572 = vmatpush1.bf16.msra.mxu0 %v1554
    %1573 = vmatprep.subr.bf16.mxu0 0
    %1574 = vmatpush1.bf16.msra.mxu0 %v1555
    %1575 = vmatprep.subr.bf16.mxu0 0
    %1576 = vmatpush1.bf16.msra.mxu0 %v1556
    %1577 = vmatprep.subr.bf16.mxu0 0
    %1578 = vmatpush1.bf16.msra.mxu0 %v1557
    %1579 = vmatprep.subr.bf16.mxu0 0
    %1580 = vmatpush1.bf16.msra.mxu0 %v1558
    %1581 = vmatprep.subr.bf16.mxu0 0
    %1582 = vmatpush1.bf16.msra.mxu0 %v1559
    %1583 = vmatprep.subr.bf16.mxu0 0
    %1584 = vmatpush1.bf16.msra.mxu0 %v1560
    %1585 = vmatprep.subr.bf16.mxu0 0
    %1586 = vmatpush1.bf16.msra.mxu0 0
    %1587 = vmatprep.subr.bf16.mxu0 0
    %1588 = vmatpush1.bf16.msra.mxu0 0
    %1589 = vmatprep.subr.bf16.mxu0 0
    %1590 = vmatpush1.bf16.msra.mxu0 0
    %1591 = vmatprep.subr.bf16.mxu0 0
    %1592 = vmatpush1.bf16.msra.mxu0 0
    %1593 = vmatprep.subr.bf16.mxu0 0
    %1594 = vmatpush1.bf16.msra.mxu0 0
    %1595 = vmatprep.subr.bf16.mxu0 0
    %1596 = vmatpush1.bf16.msra.mxu0 0
    %1597 = vmatprep.subr.bf16.mxu0 0
    %1598 = vmatpush1.bf16.msra.mxu0 0
    %1599 = vmatprep.subr.bf16.mxu0 0
    %1600 = vmatpush1.bf16.msra.mxu0 0
    %1601 = vmatprep.mubr.bf16.mxu0 0
    %1602 = vmatmul.mubr.bf16.gmra.mrb[0].mxu0 %v1516
    %v1603 = vpop.f32.mrb[0].mxu0
    %v1604 = vadd.f32 0.0, %v1603
    %v1605 = vpop.f32.mrb[0].mxu0
    %v1606 = vpop.f32.mrb[0].mxu0
    %v1607 = vadd.f32 0.0, %v1606
    %v1608 = vpop.f32.mrb[0].mxu0
    %1609 = vmatprep.mubr.bf16.mxu0 0
    %1610 = vmatmul.mubr.bf16.gmra.mrb[0].mxu0 %v1518
    %v1611 = vpop.f32.mrb[0].mxu0
    %v1612 = vadd.f32 0.0, %v1611
    %v1613 = vpop.f32.mrb[0].mxu0
    %v1614 = vpop.f32.mrb[0].mxu0
    %v1615 = vadd.f32 0.0, %v1614
    %v1616 = vpop.f32.mrb[0].mxu0
    %1617 = vdwg.mxu0
    %v1634 = vunpack.c.l.b16 %v1478
    %v1635 = vunpack.c.l.b16 %v1479
    %v1636 = vunpack.c.l.b16 %v1480
    %v1637 = vunpack.c.l.b16 %v1481
    %v1638 = vunpack.c.l.b16 %v1482
    %v1639 = vunpack.c.l.b16 %v1483
    %v1640 = vunpack.c.l.b16 %v1484
    %v1641 = vunpack.c.l.b16 %v1485
    %v1642 = vunpack.c.l.b16 %v1486
    %v1643 = vunpack.c.l.b16 %v1487
    %v1644 = vunpack.c.l.b16 %v1488
    %v1645 = vunpack.c.l.b16 %v1489
    %v1646 = vunpack.c.l.b16 %v1490
    %v1647 = vunpack.c.l.b16 %v1491
    %v1648 = vunpack.c.l.b16 %v1492
    %v1649 = vunpack.c.l.b16 %v1493
    %v1650 = vpack.c.b16 %v1635, %v1634
    %v1651 = vpack.c.b16 %v1637, %v1636
    %v1652 = vpack.c.b16 %v1639, %v1638
    %v1653 = vpack.c.b16 %v1641, %v1640
    %v1654 = vpack.c.b16 %v1643, %v1642
    %v1655 = vpack.c.b16 %v1645, %v1644
    %v1656 = vpack.c.b16 %v1647, %v1646
    %v1657 = vpack.c.b16 %v1649, %v1648
    %1666 = vmatprep.subr.bf16.mxu0 0
    %1667 = vmatpush1.bf16.msra.mxu0 %v1650
    %1668 = vmatprep.subr.bf16.mxu0 0
    %1669 = vmatpush1.bf16.msra.mxu0 %v1651
    %1670 = vmatprep.subr.bf16.mxu0 0
    %1671 = vmatpush1.bf16.msra.mxu0 %v1652
    %1672 = vmatprep.subr.bf16.mxu0 0
    %1673 = vmatpush1.bf16.msra.mxu0 %v1653
    %1674 = vmatprep.subr.bf16.mxu0 0
    %1675 = vmatpush1.bf16.msra.mxu0 %v1654
    %1676 = vmatprep.subr.bf16.mxu0 0
    %1677 = vmatpush1.bf16.msra.mxu0 %v1655
    %1678 = vmatprep.subr.bf16.mxu0 0
    %1679 = vmatpush1.bf16.msra.mxu0 %v1656
    %1680 = vmatprep.subr.bf16.mxu0 0
    %1681 = vmatpush1.bf16.msra.mxu0 %v1657
    %1682 = vmatprep.subr.bf16.mxu0 0
    %1683 = vmatpush1.bf16.msra.mxu0 0
    %1684 = vmatprep.subr.bf16.mxu0 0
    %1685 = vmatpush1.bf16.msra.mxu0 0
    %1686 = vmatprep.subr.bf16.mxu0 0
    %1687 = vmatpush1.bf16.msra.mxu0 0
    %1688 = vmatprep.subr.bf16.mxu0 0
    %1689 = vmatpush1.bf16.msra.mxu0 0
    %1690 = vmatprep.subr.bf16.mxu0 0
    %1691 = vmatpush1.bf16.msra.mxu0 0
    %1692 = vmatprep.subr.bf16.mxu0 0
    %1693 = vmatpush1.bf16.msra.mxu0 0
    %1694 = vmatprep.subr.bf16.mxu0 0
    %1695 = vmatpush1.bf16.msra.mxu0 0
    %1696 = vmatprep.subr.bf16.mxu0 0
    %1697 = vmatpush1.bf16.msra.mxu0 0
    %1698 = vmatprep.mubr.bf16.mxu0 0
    %1699 = vmatmul.mubr.bf16.gmra.mrb[0].mxu0 %v1469
    %v1700 = vpop.f32.mrb[0].mxu0
    %v1701 = vadd.f32 %v1604, %v1700
    %v1702 = vpop.f32.mrb[0].mxu0
    %v1703 = vpop.f32.mrb[0].mxu0
    %v1704 = vadd.f32 %v1607, %v1703
    %v1705 = vpop.f32.mrb[0].mxu0
    %1706 = vmatprep.mubr.bf16.mxu0 0
    %1707 = vmatmul.mubr.bf16.gmra.mrb[0].mxu0 %v1473
    %v1708 = vpop.f32.mrb[0].mxu0
    %v1709 = vadd.f32 %v1612, %v1708
    %v1710 = vpop.f32.mrb[0].mxu0
    %v1711 = vpop.f32.mrb[0].mxu0
    %v1712 = vadd.f32 %v1615, %v1711
    %v1713 = vpop.f32.mrb[0].mxu0
    %1714 = vdwg.mxu0
    %s1715 = scalar_lea.vmem [#allocation6], 128
    %v1716 = vld [vmem:[%s1715] sm:$0xf]
    %v1717 = vld [vmem:[%s1715 + $0x4] sm:$0xf]
    %v1718 = vld [vmem:[%s1715 + $0x8] sm:$0xf]
    %v1719 = vld [vmem:[%s1715 + $0xc] sm:$0xf]
    %v1720 = vld [vmem:[%s1715 + $0x10] sm:$0xf]
    %v1721 = vld [vmem:[%s1715 + $0x14] sm:$0xf]
    %v1722 = vld [vmem:[%s1715 + $0x18] sm:$0xf]
    %v1723 = vld [vmem:[%s1715 + $0x1c] sm:$0xf]
    %v1724 = vld [vmem:[%s1715 + $0x20] sm:$0xf]
    %v1725 = vld [vmem:[%s1715 + $0x24] sm:$0xf]
    %v1726 = vld [vmem:[%s1715 + $0x28] sm:$0xf]
    %v1727 = vld [vmem:[%s1715 + $0x2c] sm:$0xf]
    %v1728 = vld [vmem:[%s1715 + $0x30] sm:$0xf]
    %v1729 = vld [vmem:[%s1715 + $0x34] sm:$0xf]
    %v1730 = vld [vmem:[%s1715 + $0x38] sm:$0xf]
    %v1731 = vld [vmem:[%s1715 + $0x3c] sm:$0xf]
    %v1748 = vunpack.c.l.b16 %v1716
    %v1749 = vunpack.c.l.b16 %v1717
    %v1750 = vunpack.c.l.b16 %v1718
    %v1751 = vunpack.c.l.b16 %v1719
    %v1752 = vunpack.c.l.b16 %v1720
    %v1753 = vunpack.c.l.b16 %v1721
    %v1754 = vunpack.c.l.b16 %v1722
    %v1755 = vunpack.c.l.b16 %v1723
    %v1756 = vunpack.c.l.b16 %v1724
    %v1757 = vunpack.c.l.b16 %v1725
    %v1758 = vunpack.c.l.b16 %v1726
    %v1759 = vunpack.c.l.b16 %v1727
    %v1760 = vunpack.c.l.b16 %v1728
    %v1761 = vunpack.c.l.b16 %v1729
    %v1762 = vunpack.c.l.b16 %v1730
    %v1763 = vunpack.c.l.b16 %v1731
    %v1764 = vpack.c.b16 %v1749, %v1748
    %v1765 = vpack.c.b16 %v1751, %v1750
    %v1766 = vpack.c.b16 %v1753, %v1752
    %v1767 = vpack.c.b16 %v1755, %v1754
    %v1768 = vpack.c.b16 %v1757, %v1756
    %v1769 = vpack.c.b16 %v1759, %v1758
    %v1770 = vpack.c.b16 %v1761, %v1760
    %v1771 = vpack.c.b16 %v1763, %v1762
    %1780 = vmatprep.subr.bf16.mxu0 0
    %1781 = vmatpush1.bf16.msra.mxu0 %v1764
    %1782 = vmatprep.subr.bf16.mxu0 0
    %1783 = vmatpush1.bf16.msra.mxu0 %v1765
    %1784 = vmatprep.subr.bf16.mxu0 0
    %1785 = vmatpush1.bf16.msra.mxu0 %v1766
    %1786 = vmatprep.subr.bf16.mxu0 0
    %1787 = vmatpush1.bf16.msra.mxu0 %v1767
    %1788 = vmatprep.subr.bf16.mxu0 0
    %1789 = vmatpush1.bf16.msra.mxu0 %v1768
    %1790 = vmatprep.subr.bf16.mxu0 0
    %1791 = vmatpush1.bf16.msra.mxu0 %v1769
    %1792 = vmatprep.subr.bf16.mxu0 0
    %1793 = vmatpush1.bf16.msra.mxu0 %v1770
    %1794 = vmatprep.subr.bf16.mxu0 0
    %1795 = vmatpush1.bf16.msra.mxu0 %v1771
    %1796 = vmatprep.subr.bf16.mxu0 0
    %1797 = vmatpush1.bf16.msra.mxu0 0
    %1798 = vmatprep.subr.bf16.mxu0 0
    %1799 = vmatpush1.bf16.msra.mxu0 0
    %1800 = vmatprep.subr.bf16.mxu0 0
    %1801 = vmatpush1.bf16.msra.mxu0 0
    %1802 = vmatprep.subr.bf16.mxu0 0
    %1803 = vmatpush1.bf16.msra.mxu0 0
    %1804 = vmatprep.subr.bf16.mxu0 0
    %1805 = vmatpush1.bf16.msra.mxu0 0
    %1806 = vmatprep.subr.bf16.mxu0 0
    %1807 = vmatpush1.bf16.msra.mxu0 0
    %1808 = vmatprep.subr.bf16.mxu0 0
    %1809 = vmatpush1.bf16.msra.mxu0 0
    %1810 = vmatprep.subr.bf16.mxu0 0
    %1811 = vmatpush1.bf16.msra.mxu0 0
    %1812 = vmatprep.mubr.bf16.mxu0 0
    %1813 = vmatmul.mubr.bf16.gmra.mrb[0].mxu0 %v1473
    %v1814 = vpop.f32.mrb[0].mxu0
    %v1815 = vadd.f32 0.0, %v1814
    %v1816 = vpop.f32.mrb[0].mxu0
    %v1817 = vpop.f32.mrb[0].mxu0
    %v1818 = vadd.f32 0.0, %v1817
    %v1819 = vpop.f32.mrb[0].mxu0
    %1820 = vmatprep.mubr.bf16.mxu0 0
    %1821 = vmatmul.mubr.bf16.gmra.mrb[0].mxu0 %v1476
    %v1822 = vpop.f32.mrb[0].mxu0
    %v1823 = vadd.f32 0.0, %v1822
    %v1824 = vpop.f32.mrb[0].mxu0
    %v1825 = vpop.f32.mrb[0].mxu0
    %v1826 = vadd.f32 0.0, %v1825
    %v1827 = vpop.f32.mrb[0].mxu0
    %1828 = vdwg.mxu0
    %v1829 = vadd.f32 %v1701, %v1815
    %v1830 = vadd.f32 %v1704, %v1818
    %v1831 = vadd.f32 %v1709, %v1823
    %v1832 = vadd.f32 %v1712, %v1826
    %v1833 = vld [vmem:[%s5] sm:$0x1]
    %v1835 = vlaneseq
    %v1836 = vshrl.u32 %v1835, 7
    %v1837 = vsub.s32 0, %v1836
    %v1838 = vrot.slane %v1833, %v1837
    %v1840 = vadd.f32 %v1829, %v1838
    %v1841 = vadd.f32 %v1830, %v1838
    %v1842 = vadd.f32 %v1831, %v1838
    %v1843 = vadd.f32 %v1832, %v1838
    %v1844 = vmax.f32 %v1840, 0.0
    %v1845 = vmax.f32 %v1841, 0.0
    %v1846 = vmax.f32 %v1842, 0.0
    %v1847 = vmax.f32 %v1843, 0.0
    %v1848 = vld [vmem:[%s6] sm:$0x1]
    %v1849 = vlaneseq
    %v1850 = vshrl.u32 %v1849, 7
    %v1851 = vsub.s32 0, %v1850
    %v1852 = vrot.slane %v1848, %v1851
    %v1853 = vmul.f32 %v1844, %v1852
    %v1854 = vld [vmem:[%s6 + $0x1] sm:$0x1]
    %v1855 = vlaneseq
    %v1856 = vshrl.u32 %v1855, 7
    %v1857 = vsub.s32 0, %v1856
    %v1858 = vrot.slane %v1854, %v1857
    %v1859 = vmul.f32 %v1845, %v1858
    %v1860 = vadd.f32 %v1853, %v1859
    %v1861 = vld [vmem:[%s6 + $0x2] sm:$0x1]
    %v1862 = vlaneseq
    %v1863 = vshrl.u32 %v1862, 7
    %v1864 = vsub.s32 0, %v1863
    %v1865 = vrot.slane %v1861, %v1864
    %v1866 = vmul.f32 %v1846, %v1865
    %v1867 = vadd.f32 %v1860, %v1866
    %v1868 = vld [vmem:[%s6 + $0x3] sm:$0x1]
    %v1869 = vlaneseq
    %v1870 = vshrl.u32 %v1869, 7
    %v1871 = vsub.s32 0, %v1870
    %v1872 = vrot.slane %v1868, %v1871
    %v1873 = vmul.f32 %v1847, %v1872
    %v1874 = vadd.f32 %v1867, %v1873
    %v1875 = vpack.c.bf16 %v1874, %v1874
    %v1876 = vld [vmem:[#allocation7] sm:$0xff]
    %v1877 = vld [vmem:[#allocation7 + $0x8] sm:$0xff]
    %v1878 = vld [vmem:[#allocation7 + $0x10] sm:$0xff]
    %v1879 = vld [vmem:[#allocation7 + $0x18] sm:$0xff]
    %v1880 = vld [vmem:[#allocation7 + $0x20] sm:$0xff]
    %v1881 = vld [vmem:[#allocation7 + $0x28] sm:$0xff]
    %v1882 = vld [vmem:[#allocation7 + $0x30] sm:$0xff]
    %v1883 = vld [vmem:[#allocation7 + $0x38] sm:$0xff]
    %v1884 = vld [vmem:[#allocation7 + $0x40] sm:$0xff]
    %v1885 = vld [vmem:[#allocation7 + $0x48] sm:$0xff]
    %v1886 = vld [vmem:[#allocation7 + $0x50] sm:$0xff]
    %v1887 = vld [vmem:[#allocation7 + $0x58] sm:$0xff]
    %v1888 = vld [vmem:[#allocation7 + $0x60] sm:$0xff]
    %v1889 = vld [vmem:[#allocation7 + $0x68] sm:$0xff]
    %v1890 = vld [vmem:[#allocation7 + $0x70] sm:$0xff]
    %v1891 = vld [vmem:[#allocation7 + $0x78] sm:$0xff]
    %v1892 = vld [vmem:[#allocation7 + $0x80] sm:$0xff]
    %v1893 = vld [vmem:[#allocation7 + $0x88] sm:$0xff]
    %v1894 = vld [vmem:[#allocation7 + $0x90] sm:$0xff]
    %v1895 = vld [vmem:[#allocation7 + $0x98] sm:$0xff]
    %v1896 = vld [vmem:[#allocation7 + $0xa0] sm:$0xff]
    %v1897 = vld [vmem:[#allocation7 + $0xa8] sm:$0xff]
    %v1898 = vld [vmem:[#allocation7 + $0xb0] sm:$0xff]
    %v1899 = vld [vmem:[#allocation7 + $0xb8] sm:$0xff]
    %v1900 = vld [vmem:[#allocation7 + $0xc0] sm:$0xff]
    %v1901 = vld [vmem:[#allocation7 + $0xc8] sm:$0xff]
    %v1902 = vld [vmem:[#allocation7 + $0xd0] sm:$0xff]
    %v1903 = vld [vmem:[#allocation7 + $0xd8] sm:$0xff]
    %v1904 = vld [vmem:[#allocation7 + $0xe0] sm:$0xff]
    %v1905 = vld [vmem:[#allocation7 + $0xe8] sm:$0xff]
    %v1906 = vld [vmem:[#allocation7 + $0xf0] sm:$0xff]
    %v1907 = vld [vmem:[#allocation7 + $0xf8] sm:$0xff]
    %v1908 = vld [vmem:[#allocation7 + $0x100] sm:$0xff]
    %v1909 = vld [vmem:[#allocation7 + $0x108] sm:$0xff]
    %v1910 = vld [vmem:[#allocation7 + $0x110] sm:$0xff]
    %v1911 = vld [vmem:[#allocation7 + $0x118] sm:$0xff]
    %v1912 = vld [vmem:[#allocation7 + $0x120] sm:$0xff]
    %v1913 = vld [vmem:[#allocation7 + $0x128] sm:$0xff]
    %v1914 = vld [vmem:[#allocation7 + $0x130] sm:$0xff]
    %v1915 = vld [vmem:[#allocation7 + $0x138] sm:$0xff]
    %v1916 = vld [vmem:[#allocation7 + $0x140] sm:$0xff]
    %v1917 = vld [vmem:[#allocation7 + $0x148] sm:$0xff]
    %v1918 = vld [vmem:[#allocation7 + $0x150] sm:$0xff]
    %v1919 = vld [vmem:[#allocation7 + $0x158] sm:$0xff]
    %v1920 = vld [vmem:[#allocation7 + $0x160] sm:$0xff]
    %v1921 = vld [vmem:[#allocation7 + $0x168] sm:$0xff]
    %v1922 = vld [vmem:[#allocation7 + $0x170] sm:$0xff]
    %v1923 = vld [vmem:[#allocation7 + $0x178] sm:$0xff]
    %v1924 = vld [vmem:[#allocation7 + $0x180] sm:$0xff]
    %v1925 = vld [vmem:[#allocation7 + $0x188] sm:$0xff]
    %v1926 = vld [vmem:[#allocation7 + $0x190] sm:$0xff]
    %v1927 = vld [vmem:[#allocation7 + $0x198] sm:$0xff]
    %v1928 = vld [vmem:[#allocation7 + $0x1a0] sm:$0xff]
    %v1929 = vld [vmem:[#allocation7 + $0x1a8] sm:$0xff]
    %v1930 = vld [vmem:[#allocation7 + $0x1b0] sm:$0xff]
    %v1931 = vld [vmem:[#allocation7 + $0x1b8] sm:$0xff]
    %v1932 = vld [vmem:[#allocation7 + $0x1c0] sm:$0xff]
    %v1933 = vld [vmem:[#allocation7 + $0x1c8] sm:$0xff]
    %v1934 = vld [vmem:[#allocation7 + $0x1d0] sm:$0xff]
    %v1935 = vld [vmem:[#allocation7 + $0x1d8] sm:$0xff]
    %v1936 = vld [vmem:[#allocation7 + $0x1e0] sm:$0xff]
    %v1937 = vld [vmem:[#allocation7 + $0x1e8] sm:$0xff]
    %v1938 = vld [vmem:[#allocation7 + $0x1f0] sm:$0xff]
    %v1939 = vld [vmem:[#allocation7 + $0x1f8] sm:$0xff]
    %v1940 = vld [vmem:[%s8] sm:$0xff]
    %v1942 = vlaneseq
    %v1943 = vshrl.u32 %v1942, 7
    %v1944 = vsub.s32 0, %v1943
    %v1945 = vrot.slane %v1940, %v1944
    %v1946 = vlaneseq
    %v1947 = vshrl.u32 %v1946, 7
    %v1948 = vsub.s32 1, %v1947
    %v1949 = vrot.slane %v1940, %v1948
    %v1950 = vlaneseq
    %v1951 = vshrl.u32 %v1950, 7
    %v1952 = vsub.s32 2, %v1951
    %v1953 = vrot.slane %v1940, %v1952
    %v1954 = vlaneseq
    %v1955 = vshrl.u32 %v1954, 7
    %v1956 = vsub.s32 3, %v1955
    %v1957 = vrot.slane %v1940, %v1956
    %v1958 = vlaneseq
    %v1959 = vshrl.u32 %v1958, 7
    %v1960 = vsub.s32 4, %v1959
    %v1961 = vrot.slane %v1940, %v1960
    %v1962 = vlaneseq
    %v1963 = vshrl.u32 %v1962, 7
    %v1964 = vsub.s32 5, %v1963
    %v1965 = vrot.slane %v1940, %v1964
    %v1966 = vlaneseq
    %v1967 = vshrl.u32 %v1966, 7
    %v1968 = vsub.s32 6, %v1967
    %v1969 = vrot.slane %v1940, %v1968
    %v1970 = vlaneseq
    %v1971 = vshrl.u32 %v1970, 7
    %v1972 = vsub.s32 7, %v1971
    %v1973 = vrot.slane %v1940, %v1972
    %v2046 = vunpack.c.l.b16 %v1876
    %v2047 = vunpack.c.h.b16 %v1876
    %v2048 = vunpack.c.l.b16 %v1877
    %v2049 = vunpack.c.h.b16 %v1877
    %v2050 = vunpack.c.l.b16 %v1878
    %v2051 = vunpack.c.h.b16 %v1878
    %v2052 = vunpack.c.l.b16 %v1879
    %v2053 = vunpack.c.h.b16 %v1879
    %v2054 = vunpack.c.l.b16 %v1880
    %v2055 = vunpack.c.h.b16 %v1880
    %v2056 = vunpack.c.l.b16 %v1881
    %v2057 = vunpack.c.h.b16 %v1881
    %v2058 = vunpack.c.l.b16 %v1882
    %v2059 = vunpack.c.h.b16 %v1882
    %v2060 = vunpack.c.l.b16 %v1883
    %v2061 = vunpack.c.h.b16 %v1883
    %v2062 = vunpack.c.l.b16 %v1884
    %v2063 = vunpack.c.h.b16 %v1884
    %v2064 = vunpack.c.l.b16 %v1885
    %v2065 = vunpack.c.h.b16 %v1885
    %v2066 = vunpack.c.l.b16 %v1886
    %v2067 = vunpack.c.h.b16 %v1886
    %v2068 = vunpack.c.l.b16 %v1887
    %v2069 = vunpack.c.h.b16 %v1887
    %v2070 = vunpack.c.l.b16 %v1888
    %v2071 = vunpack.c.h.b16 %v1888
    %v2072 = vunpack.c.l.b16 %v1889
    %v2073 = vunpack.c.h.b16 %v1889
    %v2074 = vunpack.c.l.b16 %v1890
    %v2075 = vunpack.c.h.b16 %v1890
    %v2076 = vunpack.c.l.b16 %v1891
    %v2077 = vunpack.c.h.b16 %v1891
    %v2078 = vunpack.c.l.b16 %v1892
    %v2079 = vunpack.c.h.b16 %v1892
    %v2080 = vunpack.c.l.b16 %v1893
    %v2081 = vunpack.c.h.b16 %v1893
    %v2082 = vunpack.c.l.b16 %v1894
    %v2083 = vunpack.c.h.b16 %v1894
    %v2084 = vunpack.c.l.b16 %v1895
    %v2085 = vunpack.c.h.b16 %v1895
    %v2086 = vunpack.c.l.b16 %v1896
    %v2087 = vunpack.c.h.b16 %v1896
    %v2088 = vunpack.c.l.b16 %v1897
    %v2089 = vunpack.c.h.b16 %v1897
    %v2090 = vunpack.c.l.b16 %v1898
    %v2091 = vunpack.c.h.b16 %v1898
    %v2092 = vunpack.c.l.b16 %v1899
    %v2093 = vunpack.c.h.b16 %v1899
    %v2094 = vunpack.c.l.b16 %v1900
    %v2095 = vunpack.c.h.b16 %v1900
    %v2096 = vunpack.c.l.b16 %v1901
    %v2097 = vunpack.c.h.b16 %v1901
    %v2098 = vunpack.c.l.b16 %v1902
    %v2099 = vunpack.c.h.b16 %v1902
    %v2100 = vunpack.c.l.b16 %v1903
    %v2101 = vunpack.c.h.b16 %v1903
    %v2102 = vunpack.c.l.b16 %v1904
    %v2103 = vunpack.c.h.b16 %v1904
    %v2104 = vunpack.c.l.b16 %v1905
    %v2105 = vunpack.c.h.b16 %v1905
    %v2106 = vunpack.c.l.b16 %v1906
    %v2107 = vunpack.c.h.b16 %v1906
    %v2108 = vunpack.c.l.b16 %v1907
    %v2109 = vunpack.c.h.b16 %v1907
    %v2110 = vunpack.c.l.b16 %v1908
    %v2111 = vunpack.c.h.b16 %v1908
    %v2112 = vunpack.c.l.b16 %v1909
    %v2113 = vunpack.c.h.b16 %v1909
    %v2114 = vunpack.c.l.b16 %v1910
    %v2115 = vunpack.c.h.b16 %v1910
    %v2116 = vunpack.c.l.b16 %v1911
    %v2117 = vunpack.c.h.b16 %v1911
    %v2118 = vunpack.c.l.b16 %v1912
    %v2119 = vunpack.c.h.b16 %v1912
    %v2120 = vunpack.c.l.b16 %v1913
    %v2121 = vunpack.c.h.b16 %v1913
    %v2122 = vunpack.c.l.b16 %v1914
    %v2123 = vunpack.c.h.b16 %v1914
    %v2124 = vunpack.c.l.b16 %v1915
    %v2125 = vunpack.c.h.b16 %v1915
    %v2126 = vunpack.c.l.b16 %v1916
    %v2127 = vunpack.c.h.b16 %v1916
    %v2128 = vunpack.c.l.b16 %v1917
    %v2129 = vunpack.c.h.b16 %v1917
    %v2130 = vunpack.c.l.b16 %v1918
    %v2131 = vunpack.c.h.b16 %v1918
    %v2132 = vunpack.c.l.b16 %v1919
    %v2133 = vunpack.c.h.b16 %v1919
    %v2134 = vunpack.c.l.b16 %v1920
    %v2135 = vunpack.c.h.b16 %v1920
    %v2136 = vunpack.c.l.b16 %v1921
    %v2137 = vunpack.c.h.b16 %v1921
    %v2138 = vunpack.c.l.b16 %v1922
    %v2139 = vunpack.c.h.b16 %v1922
    %v2140 = vunpack.c.l.b16 %v1923
    %v2141 = vunpack.c.h.b16 %v1923
    %v2142 = vunpack.c.l.b16 %v1924
    %v2143 = vunpack.c.h.b16 %v1924
    %v2144 = vunpack.c.l.b16 %v1925
    %v2145 = vunpack.c.h.b16 %v1925
    %v2146 = vunpack.c.l.b16 %v1926
    %v2147 = vunpack.c.h.b16 %v1926
    %v2148 = vunpack.c.l.b16 %v1927
    %v2149 = vunpack.c.h.b16 %v1927
    %v2150 = vunpack.c.l.b16 %v1928
    %v2151 = vunpack.c.h.b16 %v1928
    %v2152 = vunpack.c.l.b16 %v1929
    %v2153 = vunpack.c.h.b16 %v1929
    %v2154 = vunpack.c.l.b16 %v1930
    %v2155 = vunpack.c.h.b16 %v1930
    %v2156 = vunpack.c.l.b16 %v1931
    %v2157 = vunpack.c.h.b16 %v1931
    %v2158 = vunpack.c.l.b16 %v1932
    %v2159 = vunpack.c.h.b16 %v1932
    %v2160 = vunpack.c.l.b16 %v1933
    %v2161 = vunpack.c.h.b16 %v1933
    %v2162 = vunpack.c.l.b16 %v1934
    %v2163 = vunpack.c.h.b16 %v1934
    %v2164 = vunpack.c.l.b16 %v1935
    %v2165 = vunpack.c.h.b16 %v1935
    %v2166 = vunpack.c.l.b16 %v1936
    %v2167 = vunpack.c.h.b16 %v1936
    %v2168 = vunpack.c.l.b16 %v1937
    %v2169 = vunpack.c.h.b16 %v1937
    %v2170 = vunpack.c.l.b16 %v1938
    %v2171 = vunpack.c.h.b16 %v1938
    %v2172 = vunpack.c.l.b16 %v1939
    %v2173 = vunpack.c.h.b16 %v1939
    %v2174 = vpack.c.b16 %v2054, %v2046
    %v2175 = vpack.c.b16 %v2055, %v2047
    %v2176 = vpack.c.b16 %v2056, %v2048
    %v2177 = vpack.c.b16 %v2057, %v2049
    %v2178 = vpack.c.b16 %v2058, %v2050
    %v2179 = vpack.c.b16 %v2059, %v2051
    %v2180 = vpack.c.b16 %v2060, %v2052
    %v2181 = vpack.c.b16 %v2061, %v2053
    %v2182 = vpack.c.b16 %v2070, %v2062
    %v2183 = vpack.c.b16 %v2071, %v2063
    %v2184 = vpack.c.b16 %v2072, %v2064
    %v2185 = vpack.c.b16 %v2073, %v2065
    %v2186 = vpack.c.b16 %v2074, %v2066
    %v2187 = vpack.c.b16 %v2075, %v2067
    %v2188 = vpack.c.b16 %v2076, %v2068
    %v2189 = vpack.c.b16 %v2077, %v2069
    %v2190 = vpack.c.b16 %v2086, %v2078
    %v2191 = vpack.c.b16 %v2087, %v2079
    %v2192 = vpack.c.b16 %v2088, %v2080
    %v2193 = vpack.c.b16 %v2089, %v2081
    %v2194 = vpack.c.b16 %v2090, %v2082
    %v2195 = vpack.c.b16 %v2091, %v2083
    %v2196 = vpack.c.b16 %v2092, %v2084
    %v2197 = vpack.c.b16 %v2093, %v2085
    %v2198 = vpack.c.b16 %v2102, %v2094
    %v2199 = vpack.c.b16 %v2103, %v2095
    %v2200 = vpack.c.b16 %v2104, %v2096
    %v2201 = vpack.c.b16 %v2105, %v2097
    %v2202 = vpack.c.b16 %v2106, %v2098
    %v2203 = vpack.c.b16 %v2107, %v2099
    %v2204 = vpack.c.b16 %v2108, %v2100
    %v2205 = vpack.c.b16 %v2109, %v2101
    %v2206 = vpack.c.b16 %v2118, %v2110
    %v2207 = vpack.c.b16 %v2119, %v2111
    %v2208 = vpack.c.b16 %v2120, %v2112
    %v2209 = vpack.c.b16 %v2121, %v2113
    %v2210 = vpack.c.b16 %v2122, %v2114
    %v2211 = vpack.c.b16 %v2123, %v2115
    %v2212 = vpack.c.b16 %v2124, %v2116
    %v2213 = vpack.c.b16 %v2125, %v2117
    %v2214 = vpack.c.b16 %v2134, %v2126
    %v2215 = vpack.c.b16 %v2135, %v2127
    %v2216 = vpack.c.b16 %v2136, %v2128
    %v2217 = vpack.c.b16 %v2137, %v2129
    %v2218 = vpack.c.b16 %v2138, %v2130
    %v2219 = vpack.c.b16 %v2139, %v2131
    %v2220 = vpack.c.b16 %v2140, %v2132
    %v2221 = vpack.c.b16 %v2141, %v2133
    %v2222 = vpack.c.b16 %v2150, %v2142
    %v2223 = vpack.c.b16 %v2151, %v2143
    %v2224 = vpack.c.b16 %v2152, %v2144
    %v2225 = vpack.c.b16 %v2153, %v2145
    %v2226 = vpack.c.b16 %v2154, %v2146
    %v2227 = vpack.c.b16 %v2155, %v2147
    %v2228 = vpack.c.b16 %v2156, %v2148
    %v2229 = vpack.c.b16 %v2157, %v2149
    %v2230 = vpack.c.b16 %v2166, %v2158
    %v2231 = vpack.c.b16 %v2167, %v2159
    %v2232 = vpack.c.b16 %v2168, %v2160
    %v2233 = vpack.c.b16 %v2169, %v2161
    %v2234 = vpack.c.b16 %v2170, %v2162
    %v2235 = vpack.c.b16 %v2171, %v2163
    %v2236 = vpack.c.b16 %v2172, %v2164
    %v2237 = vpack.c.b16 %v2173, %v2165
    %2302 = vmatprep.subr.bf16.mxu0 %v2175
    %2303 = vmatpush1.bf16.msra.mxu0 %v2174
    %2304 = vmatprep.subr.bf16.mxu0 %v2183
    %2305 = vmatpush1.bf16.msra.mxu0 %v2182
    %2306 = vmatprep.subr.bf16.mxu0 %v2191
    %2307 = vmatpush1.bf16.msra.mxu0 %v2190
    %2308 = vmatprep.subr.bf16.mxu0 %v2199
    %2309 = vmatpush1.bf16.msra.mxu0 %v2198
    %2310 = vmatprep.subr.bf16.mxu0 %v2207
    %2311 = vmatpush1.bf16.msra.mxu0 %v2206
    %2312 = vmatprep.subr.bf16.mxu0 %v2215
    %2313 = vmatpush1.bf16.msra.mxu0 %v2214
    %2314 = vmatprep.subr.bf16.mxu0 %v2223
    %2315 = vmatpush1.bf16.msra.mxu0 %v2222
    %2316 = vmatprep.subr.bf16.mxu0 %v2231
    %2317 = vmatpush1.bf16.msra.mxu0 %v2230
    %2318 = vmatprep.subr.bf16.mxu0 0
    %2319 = vmatpush1.bf16.msra.mxu0 0
    %2320 = vmatprep.subr.bf16.mxu0 0
    %2321 = vmatpush1.bf16.msra.mxu0 0
    %2322 = vmatprep.subr.bf16.mxu0 0
    %2323 = vmatpush1.bf16.msra.mxu0 0
    %2324 = vmatprep.subr.bf16.mxu0 0
    %2325 = vmatpush1.bf16.msra.mxu0 0
    %2326 = vmatprep.subr.bf16.mxu0 0
    %2327 = vmatpush1.bf16.msra.mxu0 0
    %2328 = vmatprep.subr.bf16.mxu0 0
    %2329 = vmatpush1.bf16.msra.mxu0 0
    %2330 = vmatprep.subr.bf16.mxu0 0
    %2331 = vmatpush1.bf16.msra.mxu0 0
    %2332 = vmatprep.subr.bf16.mxu0 0
    %2333 = vmatpush1.bf16.msra.mxu0 0
    %2334 = vmatprep.mubr.bf16.mxu0 0
    %2335 = vmatmul.mubr.bf16.gmra.mrb[0].mxu0 %v1875
    %v2336 = vpop.f32.mrb[0].mxu0
    %v2337 = vadd.f32 %v1945, %v2336
    %v2338 = vpop.f32.mrb[0].mxu0
    %v2339 = vadd.f32 %v1949, %v2338
    %v2340 = vpop.f32.mrb[0].mxu0
    %v2341 = vpop.f32.mrb[0].mxu0
    %2342 = vdwg.mxu0
    %2343 = vmatprep.subr.bf16.mxu0 %v2177
    %2344 = vmatpush1.bf16.msra.mxu0 %v2176
    %2345 = vmatprep.subr.bf16.mxu0 %v2185
    %2346 = vmatpush1.bf16.msra.mxu0 %v2184
    %2347 = vmatprep.subr.bf16.mxu0 %v2193
    %2348 = vmatpush1.bf16.msra.mxu0 %v2192
    %2349 = vmatprep.subr.bf16.mxu0 %v2201
    %2350 = vmatpush1.bf16.msra.mxu0 %v2200
    %2351 = vmatprep.subr.bf16.mxu0 %v2209
    %2352 = vmatpush1.bf16.msra.mxu0 %v2208
    %2353 = vmatprep.subr.bf16.mxu0 %v2217
    %2354 = vmatpush1.bf16.msra.mxu0 %v2216
    %2355 = vmatprep.subr.bf16.mxu0 %v2225
    %2356 = vmatpush1.bf16.msra.mxu0 %v2224
    %2357 = vmatprep.subr.bf16.mxu0 %v2233
    %2358 = vmatpush1.bf16.msra.mxu0 %v2232
    %2359 = vmatprep.subr.bf16.mxu0 0
    %2360 = vmatpush1.bf16.msra.mxu0 0
    %2361 = vmatprep.subr.bf16.mxu0 0
    %2362 = vmatpush1.bf16.msra.mxu0 0
    %2363 = vmatprep.subr.bf16.mxu0 0
    %2364 = vmatpush1.bf16.msra.mxu0 0
    %2365 = vmatprep.subr.bf16.mxu0 0
    %2366 = vmatpush1.bf16.msra.mxu0 0
    %2367 = vmatprep.subr.bf16.mxu0 0
    %2368 = vmatpush1.bf16.msra.mxu0 0
    %2369 = vmatprep.subr.bf16.mxu0 0
    %2370 = vmatpush1.bf16.msra.mxu0 0
    %2371 = vmatprep.subr.bf16.mxu0 0
    %2372 = vmatpush1.bf16.msra.mxu0 0
    %2373 = vmatprep.subr.bf16.mxu0 0
    %2374 = vmatpush1.bf16.msra.mxu0 0
    %2375 = vmatprep.mubr.bf16.mxu0 0
    %2376 = vmatmul.mubr.bf16.gmra.mrb[0].mxu0 %v1875
    %v2377 = vpop.f32.mrb[0].mxu0
    %v2378 = vadd.f32 %v1953, %v2377
    %v2379 = vpop.f32.mrb[0].mxu0
    %v2380 = vadd.f32 %v1957, %v2379
    %v2381 = vpop.f32.mrb[0].mxu0
    %v2382 = vpop.f32.mrb[0].mxu0
    %2383 = vdwg.mxu0
    %2384 = vmatprep.subr.bf16.mxu0 %v2179
    %2385 = vmatpush1.bf16.msra.mxu0 %v2178
    %2386 = vmatprep.subr.bf16.mxu0 %v2187
    %2387 = vmatpush1.bf16.msra.mxu0 %v2186
    %2388 = vmatprep.subr.bf16.mxu0 %v2195
    %2389 = vmatpush1.bf16.msra.mxu0 %v2194
    %2390 = vmatprep.subr.bf16.mxu0 %v2203
    %2391 = vmatpush1.bf16.msra.mxu0 %v2202
    %2392 = vmatprep.subr.bf16.mxu0 %v2211
    %2393 = vmatpush1.bf16.msra.mxu0 %v2210
    %2394 = vmatprep.subr.bf16.mxu0 %v2219
    %2395 = vmatpush1.bf16.msra.mxu0 %v2218
    %2396 = vmatprep.subr.bf16.mxu0 %v2227
    %2397 = vmatpush1.bf16.msra.mxu0 %v2226
    %2398 = vmatprep.subr.bf16.mxu0 %v2235
    %2399 = vmatpush1.bf16.msra.mxu0 %v2234
    %2400 = vmatprep.subr.bf16.mxu0 0
    %2401 = vmatpush1.bf16.msra.mxu0 0
    %2402 = vmatprep.subr.bf16.mxu0 0
    %2403 = vmatpush1.bf16.msra.mxu0 0
    %2404 = vmatprep.subr.bf16.mxu0 0
    %2405 = vmatpush1.bf16.msra.mxu0 0
    %2406 = vmatprep.subr.bf16.mxu0 0
    %2407 = vmatpush1.bf16.msra.mxu0 0
    %2408 = vmatprep.subr.bf16.mxu0 0
    %2409 = vmatpush1.bf16.msra.mxu0 0
    %2410 = vmatprep.subr.bf16.mxu0 0
    %2411 = vmatpush1.bf16.msra.mxu0 0
    %2412 = vmatprep.subr.bf16.mxu0 0
    %2413 = vmatpush1.bf16.msra.mxu0 0
    %2414 = vmatprep.subr.bf16.mxu0 0
    %2415 = vmatpush1.bf16.msra.mxu0 0
    %2416 = vmatprep.mubr.bf16.mxu0 0
    %2417 = vmatmul.mubr.bf16.gmra.mrb[0].mxu0 %v1875
    %v2418 = vpop.f32.mrb[0].mxu0
    %v2419 = vadd.f32 %v1961, %v2418
    %v2420 = vpop.f32.mrb[0].mxu0
    %v2421 = vadd.f32 %v1965, %v2420
    %v2422 = vpop.f32.mrb[0].mxu0
    %v2423 = vpop.f32.mrb[0].mxu0
    %2424 = vdwg.mxu0
    %2425 = vmatprep.subr.bf16.mxu0 %v2181
    %2426 = vmatpush1.bf16.msra.mxu0 %v2180
    %2427 = vmatprep.subr.bf16.mxu0 %v2189
    %2428 = vmatpush1.bf16.msra.mxu0 %v2188
    %2429 = vmatprep.subr.bf16.mxu0 %v2197
    %2430 = vmatpush1.bf16.msra.mxu0 %v2196
    %2431 = vmatprep.subr.bf16.mxu0 %v2205
    %2432 = vmatpush1.bf16.msra.mxu0 %v2204
    %2433 = vmatprep.subr.bf16.mxu0 %v2213
    %2434 = vmatpush1.bf16.msra.mxu0 %v2212
    %2435 = vmatprep.subr.bf16.mxu0 %v2221
    %2436 = vmatpush1.bf16.msra.mxu0 %v2220
    %2437 = vmatprep.subr.bf16.mxu0 %v2229
    %2438 = vmatpush1.bf16.msra.mxu0 %v2228
    %2439 = vmatprep.subr.bf16.mxu0 %v2237
    %2440 = vmatpush1.bf16.msra.mxu0 %v2236
    %2441 = vmatprep.subr.bf16.mxu0 0
    %2442 = vmatpush1.bf16.msra.mxu0 0
    %2443 = vmatprep.subr.bf16.mxu0 0
    %2444 = vmatpush1.bf16.msra.mxu0 0
    %2445 = vmatprep.subr.bf16.mxu0 0
    %2446 = vmatpush1.bf16.msra.mxu0 0
    %2447 = vmatprep.subr.bf16.mxu0 0
    %2448 = vmatpush1.bf16.msra.mxu0 0
    %2449 = vmatprep.subr.bf16.mxu0 0
    %2450 = vmatpush1.bf16.msra.mxu0 0
    %2451 = vmatprep.subr.bf16.mxu0 0
    %2452 = vmatpush1.bf16.msra.mxu0 0
    %2453 = vmatprep.subr.bf16.mxu0 0
    %2454 = vmatpush1.bf16.msra.mxu0 0
    %2455 = vmatprep.subr.bf16.mxu0 0
    %2456 = vmatpush1.bf16.msra.mxu0 0
    %2457 = vmatprep.mubr.bf16.mxu0 0
    %2458 = vmatmul.mubr.bf16.gmra.mrb[0].mxu0 %v1875
    %v2459 = vpop.f32.mrb[0].mxu0
    %v2460 = vadd.f32 %v1969, %v2459
    %v2461 = vpop.f32.mrb[0].mxu0
    %v2462 = vadd.f32 %v1973, %v2461
    %v2463 = vpop.f32.mrb[0].mxu0
    %v2464 = vpop.f32.mrb[0].mxu0
    %2465 = vdwg.mxu0
    %v2466 = vmax.f32 %v2337, 0.0
    %v2467 = vmax.f32 %v2339, 0.0
    %v2468 = vmax.f32 %v2378, 0.0
    %v2469 = vmax.f32 %v2380, 0.0
    %v2470 = vmax.f32 %v2419, 0.0
    %v2471 = vmax.f32 %v2421, 0.0
    %v2472 = vmax.f32 %v2460, 0.0
    %v2473 = vmax.f32 %v2462, 0.0
    %v2474 = vpack.c.bf16 %v2466, %v2466
    %v2475 = vpack.c.bf16 %v2467, %v2467
    %v2476 = vpack.c.bf16 %v2468, %v2468
    %v2477 = vpack.c.bf16 %v2469, %v2469
    %v2478 = vpack.c.bf16 %v2470, %v2470
    %v2479 = vpack.c.bf16 %v2471, %v2471
    %v2480 = vpack.c.bf16 %v2472, %v2472
    %v2481 = vpack.c.bf16 %v2473, %v2473
    %v2482 = vld [vmem:[#allocation9] sm:$0xff]
    %v2483 = vld [vmem:[#allocation9 + $0x8] sm:$0xff]
    %v2484 = vld [vmem:[#allocation9 + $0x10] sm:$0xff]
    %v2485 = vld [vmem:[#allocation9 + $0x18] sm:$0xff]
    %v2486 = vld [vmem:[#allocation9 + $0x20] sm:$0xff]
    %v2487 = vld [vmem:[#allocation9 + $0x28] sm:$0xff]
    %v2488 = vld [vmem:[#allocation9 + $0x30] sm:$0xff]
    %v2489 = vld [vmem:[#allocation9 + $0x38] sm:$0xff]
    %v2490 = vld [vmem:[#allocation9 + $0x40] sm:$0xff]
    %v2491 = vld [vmem:[#allocation9 + $0x48] sm:$0xff]
    %v2492 = vld [vmem:[#allocation9 + $0x50] sm:$0xff]
    %v2493 = vld [vmem:[#allocation9 + $0x58] sm:$0xff]
    %v2494 = vld [vmem:[#allocation9 + $0x60] sm:$0xff]
    %v2495 = vld [vmem:[#allocation9 + $0x68] sm:$0xff]
    %v2496 = vld [vmem:[#allocation9 + $0x70] sm:$0xff]
    %v2497 = vld [vmem:[#allocation9 + $0x78] sm:$0xff]
    %v2498 = vld [vmem:[#allocation9 + $0x80] sm:$0xff]
    %v2499 = vld [vmem:[#allocation9 + $0x88] sm:$0xff]
    %v2500 = vld [vmem:[#allocation9 + $0x90] sm:$0xff]
    %v2501 = vld [vmem:[#allocation9 + $0x98] sm:$0xff]
    %v2502 = vld [vmem:[#allocation9 + $0xa0] sm:$0xff]
    %v2503 = vld [vmem:[#allocation9 + $0xa8] sm:$0xff]
    %v2504 = vld [vmem:[#allocation9 + $0xb0] sm:$0xff]
    %v2505 = vld [vmem:[#allocation9 + $0xb8] sm:$0xff]
    %v2506 = vld [vmem:[#allocation9 + $0xc0] sm:$0xff]
    %v2507 = vld [vmem:[#allocation9 + $0xc8] sm:$0xff]
    %v2508 = vld [vmem:[#allocation9 + $0xd0] sm:$0xff]
    %v2509 = vld [vmem:[#allocation9 + $0xd8] sm:$0xff]
    %v2510 = vld [vmem:[#allocation9 + $0xe0] sm:$0xff]
    %v2511 = vld [vmem:[#allocation9 + $0xe8] sm:$0xff]
    %v2512 = vld [vmem:[#allocation9 + $0xf0] sm:$0xff]
    %v2513 = vld [vmem:[#allocation9 + $0xf8] sm:$0xff]
    %v2514 = vld [vmem:[#allocation9 + $0x100] sm:$0xff]
    %v2515 = vld [vmem:[#allocation9 + $0x108] sm:$0xff]
    %v2516 = vld [vmem:[#allocation9 + $0x110] sm:$0xff]
    %v2517 = vld [vmem:[#allocation9 + $0x118] sm:$0xff]
    %v2518 = vld [vmem:[#allocation9 + $0x120] sm:$0xff]
    %v2519 = vld [vmem:[#allocation9 + $0x128] sm:$0xff]
    %v2520 = vld [vmem:[#allocation9 + $0x130] sm:$0xff]
    %v2521 = vld [vmem:[#allocation9 + $0x138] sm:$0xff]
    %v2522 = vld [vmem:[#allocation9 + $0x140] sm:$0xff]
    %v2523 = vld [vmem:[#allocation9 + $0x148] sm:$0xff]
    %v2524 = vld [vmem:[#allocation9 + $0x150] sm:$0xff]
    %v2525 = vld [vmem:[#allocation9 + $0x158] sm:$0xff]
    %v2526 = vld [vmem:[#allocation9 + $0x160] sm:$0xff]
    %v2527 = vld [vmem:[#allocation9 + $0x168] sm:$0xff]
    %v2528 = vld [vmem:[#allocation9 + $0x170] sm:$0xff]
    %v2529 = vld [vmem:[#allocation9 + $0x178] sm:$0xff]
    %v2530 = vld [vmem:[#allocation9 + $0x180] sm:$0xff]
    %v2531 = vld [vmem:[#allocation9 + $0x188] sm:$0xff]
    %v2532 = vld [vmem:[#allocation9 + $0x190] sm:$0xff]
    %v2533 = vld [vmem:[#allocation9 + $0x198] sm:$0xff]
    %v2534 = vld [vmem:[#allocation9 + $0x1a0] sm:$0xff]
    %v2535 = vld [vmem:[#allocation9 + $0x1a8] sm:$0xff]
    %v2536 = vld [vmem:[#allocation9 + $0x1b0] sm:$0xff]
    %v2537 = vld [vmem:[#allocation9 + $0x1b8] sm:$0xff]
    %v2538 = vld [vmem:[#allocation9 + $0x1c0] sm:$0xff]
    %v2539 = vld [vmem:[#allocation9 + $0x1c8] sm:$0xff]
    %v2540 = vld [vmem:[#allocation9 + $0x1d0] sm:$0xff]
    %v2541 = vld [vmem:[#allocation9 + $0x1d8] sm:$0xff]
    %v2542 = vld [vmem:[#allocation9 + $0x1e0] sm:$0xff]
    %v2543 = vld [vmem:[#allocation9 + $0x1e8] sm:$0xff]
    %v2544 = vld [vmem:[#allocation9 + $0x1f0] sm:$0xff]
    %v2545 = vld [vmem:[#allocation9 + $0x1f8] sm:$0xff]
    %v2546 = vld [vmem:[#allocation9 + $0x200] sm:$0xff]
    %v2547 = vld [vmem:[#allocation9 + $0x208] sm:$0xff]
    %v2548 = vld [vmem:[#allocation9 + $0x210] sm:$0xff]
    %v2549 = vld [vmem:[#allocation9 + $0x218] sm:$0xff]
    %v2550 = vld [vmem:[#allocation9 + $0x220] sm:$0xff]
    %v2551 = vld [vmem:[#allocation9 + $0x228] sm:$0xff]
    %v2552 = vld [vmem:[#allocation9 + $0x230] sm:$0xff]
    %v2553 = vld [vmem:[#allocation9 + $0x238] sm:$0xff]
    %v2554 = vld [vmem:[#allocation9 + $0x240] sm:$0xff]
    %v2555 = vld [vmem:[#allocation9 + $0x248] sm:$0xff]
    %v2556 = vld [vmem:[#allocation9 + $0x250] sm:$0xff]
    %v2557 = vld [vmem:[#allocation9 + $0x258] sm:$0xff]
    %v2558 = vld [vmem:[#allocation9 + $0x260] sm:$0xff]
    %v2559 = vld [vmem:[#allocation9 + $0x268] sm:$0xff]
    %v2560 = vld [vmem:[#allocation9 + $0x270] sm:$0xff]
    %v2561 = vld [vmem:[#allocation9 + $0x278] sm:$0xff]
    %v2562 = vld [vmem:[#allocation9 + $0x280] sm:$0xff]
    %v2563 = vld [vmem:[#allocation9 + $0x288] sm:$0xff]
    %v2564 = vld [vmem:[#allocation9 + $0x290] sm:$0xff]
    %v2565 = vld [vmem:[#allocation9 + $0x298] sm:$0xff]
    %v2566 = vld [vmem:[#allocation9 + $0x2a0] sm:$0xff]
    %v2567 = vld [vmem:[#allocation9 + $0x2a8] sm:$0xff]
    %v2568 = vld [vmem:[#allocation9 + $0x2b0] sm:$0xff]
    %v2569 = vld [vmem:[#allocation9 + $0x2b8] sm:$0xff]
    %v2570 = vld [vmem:[#allocation9 + $0x2c0] sm:$0xff]
    %v2571 = vld [vmem:[#allocation9 + $0x2c8] sm:$0xff]
    %v2572 = vld [vmem:[#allocation9 + $0x2d0] sm:$0xff]
    %v2573 = vld [vmem:[#allocation9 + $0x2d8] sm:$0xff]
    %v2574 = vld [vmem:[#allocation9 + $0x2e0] sm:$0xff]
    %v2575 = vld [vmem:[#allocation9 + $0x2e8] sm:$0xff]
    %v2576 = vld [vmem:[#allocation9 + $0x2f0] sm:$0xff]
    %v2577 = vld [vmem:[#allocation9 + $0x2f8] sm:$0xff]
    %v2578 = vld [vmem:[#allocation9 + $0x300] sm:$0xff]
    %v2579 = vld [vmem:[#allocation9 + $0x308] sm:$0xff]
    %v2580 = vld [vmem:[#allocation9 + $0x310] sm:$0xff]
    %v2581 = vld [vmem:[#allocation9 + $0x318] sm:$0xff]
    %v2582 = vld [vmem:[#allocation9 + $0x320] sm:$0xff]
    %v2583 = vld [vmem:[#allocation9 + $0x328] sm:$0xff]
    %v2584 = vld [vmem:[#allocation9 + $0x330] sm:$0xff]
    %v2585 = vld [vmem:[#allocation9 + $0x338] sm:$0xff]
    %v2586 = vld [vmem:[#allocation9 + $0x340] sm:$0xff]
    %v2587 = vld [vmem:[#allocation9 + $0x348] sm:$0xff]
    %v2588 = vld [vmem:[#allocation9 + $0x350] sm:$0xff]
    %v2589 = vld [vmem:[#allocation9 + $0x358] sm:$0xff]
    %v2590 = vld [vmem:[#allocation9 + $0x360] sm:$0xff]
    %v2591 = vld [vmem:[#allocation9 + $0x368] sm:$0xff]
    %v2592 = vld [vmem:[#allocation9 + $0x370] sm:$0xff]
    %v2593 = vld [vmem:[#allocation9 + $0x378] sm:$0xff]
    %v2594 = vld [vmem:[#allocation9 + $0x380] sm:$0xff]
    %v2595 = vld [vmem:[#allocation9 + $0x388] sm:$0xff]
    %v2596 = vld [vmem:[#allocation9 + $0x390] sm:$0xff]
    %v2597 = vld [vmem:[#allocation9 + $0x398] sm:$0xff]
    %v2598 = vld [vmem:[#allocation9 + $0x3a0] sm:$0xff]
    %v2599 = vld [vmem:[#allocation9 + $0x3a8] sm:$0xff]
    %v2600 = vld [vmem:[#allocation9 + $0x3b0] sm:$0xff]
    %v2601 = vld [vmem:[#allocation9 + $0x3b8] sm:$0xff]
    %v2602 = vld [vmem:[#allocation9 + $0x3c0] sm:$0xff]
    %v2603 = vld [vmem:[#allocation9 + $0x3c8] sm:$0xff]
    %v2604 = vld [vmem:[#allocation9 + $0x3d0] sm:$0xff]
    %v2605 = vld [vmem:[#allocation9 + $0x3d8] sm:$0xff]
    %v2606 = vld [vmem:[#allocation9 + $0x3e0] sm:$0xff]
    %v2607 = vld [vmem:[#allocation9 + $0x3e8] sm:$0xff]
    %v2608 = vld [vmem:[#allocation9 + $0x3f0] sm:$0xff]
    %v2609 = vld [vmem:[#allocation9 + $0x3f8] sm:$0xff]
    %v2610 = vld [vmem:[#allocation9 + $0x400] sm:$0xff]
    %v2611 = vld [vmem:[#allocation9 + $0x408] sm:$0xff]
    %v2612 = vld [vmem:[#allocation9 + $0x410] sm:$0xff]
    %v2613 = vld [vmem:[#allocation9 + $0x418] sm:$0xff]
    %v2614 = vld [vmem:[#allocation9 + $0x420] sm:$0xff]
    %v2615 = vld [vmem:[#allocation9 + $0x428] sm:$0xff]
    %v2616 = vld [vmem:[#allocation9 + $0x430] sm:$0xff]
    %v2617 = vld [vmem:[#allocation9 + $0x438] sm:$0xff]
    %v2618 = vld [vmem:[#allocation9 + $0x440] sm:$0xff]
    %v2619 = vld [vmem:[#allocation9 + $0x448] sm:$0xff]
    %v2620 = vld [vmem:[#allocation9 + $0x450] sm:$0xff]
    %v2621 = vld [vmem:[#allocation9 + $0x458] sm:$0xff]
    %v2622 = vld [vmem:[#allocation9 + $0x460] sm:$0xff]
    %v2623 = vld [vmem:[#allocation9 + $0x468] sm:$0xff]
    %v2624 = vld [vmem:[#allocation9 + $0x470] sm:$0xff]
    %v2625 = vld [vmem:[#allocation9 + $0x478] sm:$0xff]
    %v2626 = vld [vmem:[#allocation9 + $0x480] sm:$0xff]
    %v2627 = vld [vmem:[#allocation9 + $0x488] sm:$0xff]
    %v2628 = vld [vmem:[#allocation9 + $0x490] sm:$0xff]
    %v2629 = vld [vmem:[#allocation9 + $0x498] sm:$0xff]
    %v2630 = vld [vmem:[#allocation9 + $0x4a0] sm:$0xff]
    %v2631 = vld [vmem:[#allocation9 + $0x4a8] sm:$0xff]
    %v2632 = vld [vmem:[#allocation9 + $0x4b0] sm:$0xff]
    %v2633 = vld [vmem:[#allocation9 + $0x4b8] sm:$0xff]
    %v2634 = vld [vmem:[#allocation9 + $0x4c0] sm:$0xff]
    %v2635 = vld [vmem:[#allocation9 + $0x4c8] sm:$0xff]
    %v2636 = vld [vmem:[#allocation9 + $0x4d0] sm:$0xff]
    %v2637 = vld [vmem:[#allocation9 + $0x4d8] sm:$0xff]
    %v2638 = vld [vmem:[#allocation9 + $0x4e0] sm:$0xff]
    %v2639 = vld [vmem:[#allocation9 + $0x4e8] sm:$0xff]
    %v2640 = vld [vmem:[#allocation9 + $0x4f0] sm:$0xff]
    %v2641 = vld [vmem:[#allocation9 + $0x4f8] sm:$0xff]
    %v2642 = vld [vmem:[#allocation9 + $0x500] sm:$0xff]
    %v2643 = vld [vmem:[#allocation9 + $0x508] sm:$0xff]
    %v2644 = vld [vmem:[#allocation9 + $0x510] sm:$0xff]
    %v2645 = vld [vmem:[#allocation9 + $0x518] sm:$0xff]
    %v2646 = vld [vmem:[#allocation9 + $0x520] sm:$0xff]
    %v2647 = vld [vmem:[#allocation9 + $0x528] sm:$0xff]
    %v2648 = vld [vmem:[#allocation9 + $0x530] sm:$0xff]
    %v2649 = vld [vmem:[#allocation9 + $0x538] sm:$0xff]
    %v2650 = vld [vmem:[#allocation9 + $0x540] sm:$0xff]
    %v2651 = vld [vmem:[#allocation9 + $0x548] sm:$0xff]
    %v2652 = vld [vmem:[#allocation9 + $0x550] sm:$0xff]
    %v2653 = vld [vmem:[#allocation9 + $0x558] sm:$0xff]
    %v2654 = vld [vmem:[#allocation9 + $0x560] sm:$0xff]
    %v2655 = vld [vmem:[#allocation9 + $0x568] sm:$0xff]
    %v2656 = vld [vmem:[#allocation9 + $0x570] sm:$0xff]
    %v2657 = vld [vmem:[#allocation9 + $0x578] sm:$0xff]
    %v2658 = vld [vmem:[#allocation9 + $0x580] sm:$0xff]
    %v2659 = vld [vmem:[#allocation9 + $0x588] sm:$0xff]
    %v2660 = vld [vmem:[#allocation9 + $0x590] sm:$0xff]
    %v2661 = vld [vmem:[#allocation9 + $0x598] sm:$0xff]
    %v2662 = vld [vmem:[#allocation9 + $0x5a0] sm:$0xff]
    %v2663 = vld [vmem:[#allocation9 + $0x5a8] sm:$0xff]
    %v2664 = vld [vmem:[#allocation9 + $0x5b0] sm:$0xff]
    %v2665 = vld [vmem:[#allocation9 + $0x5b8] sm:$0xff]
    %v2666 = vld [vmem:[#allocation9 + $0x5c0] sm:$0xff]
    %v2667 = vld [vmem:[#allocation9 + $0x5c8] sm:$0xff]
    %v2668 = vld [vmem:[#allocation9 + $0x5d0] sm:$0xff]
    %v2669 = vld [vmem:[#allocation9 + $0x5d8] sm:$0xff]
    %v2670 = vld [vmem:[#allocation9 + $0x5e0] sm:$0xff]
    %v2671 = vld [vmem:[#allocation9 + $0x5e8] sm:$0xff]
    %v2672 = vld [vmem:[#allocation9 + $0x5f0] sm:$0xff]
    %v2673 = vld [vmem:[#allocation9 + $0x5f8] sm:$0xff]
    %v2674 = vld [vmem:[#allocation9 + $0x600] sm:$0xff]
    %v2675 = vld [vmem:[#allocation9 + $0x608] sm:$0xff]
    %v2676 = vld [vmem:[#allocation9 + $0x610] sm:$0xff]
    %v2677 = vld [vmem:[#allocation9 + $0x618] sm:$0xff]
    %v2678 = vld [vmem:[#allocation9 + $0x620] sm:$0xff]
    %v2679 = vld [vmem:[#allocation9 + $0x628] sm:$0xff]
    %v2680 = vld [vmem:[#allocation9 + $0x630] sm:$0xff]
    %v2681 = vld [vmem:[#allocation9 + $0x638] sm:$0xff]
    %v2682 = vld [vmem:[#allocation9 + $0x640] sm:$0xff]
    %v2683 = vld [vmem:[#allocation9 + $0x648] sm:$0xff]
    %v2684 = vld [vmem:[#allocation9 + $0x650] sm:$0xff]
    %v2685 = vld [vmem:[#allocation9 + $0x658] sm:$0xff]
    %v2686 = vld [vmem:[#allocation9 + $0x660] sm:$0xff]
    %v2687 = vld [vmem:[#allocation9 + $0x668] sm:$0xff]
    %v2688 = vld [vmem:[#allocation9 + $0x670] sm:$0xff]
    %v2689 = vld [vmem:[#allocation9 + $0x678] sm:$0xff]
    %v2690 = vld [vmem:[#allocation9 + $0x680] sm:$0xff]
    %v2691 = vld [vmem:[#allocation9 + $0x688] sm:$0xff]
    %v2692 = vld [vmem:[#allocation9 + $0x690] sm:$0xff]
    %v2693 = vld [vmem:[#allocation9 + $0x698] sm:$0xff]
    %v2694 = vld [vmem:[#allocation9 + $0x6a0] sm:$0xff]
    %v2695 = vld [vmem:[#allocation9 + $0x6a8] sm:$0xff]
    %v2696 = vld [vmem:[#allocation9 + $0x6b0] sm:$0xff]
    %v2697 = vld [vmem:[#allocation9 + $0x6b8] sm:$0xff]
    %v2698 = vld [vmem:[#allocation9 + $0x6c0] sm:$0xff]
    %v2699 = vld [vmem:[#allocation9 + $0x6c8] sm:$0xff]
    %v2700 = vld [vmem:[#allocation9 + $0x6d0] sm:$0xff]
    %v2701 = vld [vmem:[#allocation9 + $0x6d8] sm:$0xff]
    %v2702 = vld [vmem:[#allocation9 + $0x6e0] sm:$0xff]
    %v2703 = vld [vmem:[#allocation9 + $0x6e8] sm:$0xff]
    %v2704 = vld [vmem:[#allocation9 + $0x6f0] sm:$0xff]
    %v2705 = vld [vmem:[#allocation9 + $0x6f8] sm:$0xff]
    %v2706 = vld [vmem:[#allocation9 + $0x700] sm:$0xff]
    %v2707 = vld [vmem:[#allocation9 + $0x708] sm:$0xff]
    %v2708 = vld [vmem:[#allocation9 + $0x710] sm:$0xff]
    %v2709 = vld [vmem:[#allocation9 + $0x718] sm:$0xff]
    %v2710 = vld [vmem:[#allocation9 + $0x720] sm:$0xff]
    %v2711 = vld [vmem:[#allocation9 + $0x728] sm:$0xff]
    %v2712 = vld [vmem:[#allocation9 + $0x730] sm:$0xff]
    %v2713 = vld [vmem:[#allocation9 + $0x738] sm:$0xff]
    %v2714 = vld [vmem:[#allocation9 + $0x740] sm:$0xff]
    %v2715 = vld [vmem:[#allocation9 + $0x748] sm:$0xff]
    %v2716 = vld [vmem:[#allocation9 + $0x750] sm:$0xff]
    %v2717 = vld [vmem:[#allocation9 + $0x758] sm:$0xff]
    %v2718 = vld [vmem:[#allocation9 + $0x760] sm:$0xff]
    %v2719 = vld [vmem:[#allocation9 + $0x768] sm:$0xff]
    %v2720 = vld [vmem:[#allocation9 + $0x770] sm:$0xff]
    %v2721 = vld [vmem:[#allocation9 + $0x778] sm:$0xff]
    %v2722 = vld [vmem:[#allocation9 + $0x780] sm:$0xff]
    %v2723 = vld [vmem:[#allocation9 + $0x788] sm:$0xff]
    %v2724 = vld [vmem:[#allocation9 + $0x790] sm:$0xff]
    %v2725 = vld [vmem:[#allocation9 + $0x798] sm:$0xff]
    %v2726 = vld [vmem:[#allocation9 + $0x7a0] sm:$0xff]
    %v2727 = vld [vmem:[#allocation9 + $0x7a8] sm:$0xff]
    %v2728 = vld [vmem:[#allocation9 + $0x7b0] sm:$0xff]
    %v2729 = vld [vmem:[#allocation9 + $0x7b8] sm:$0xff]
    %v2730 = vld [vmem:[#allocation9 + $0x7c0] sm:$0xff]
    %v2731 = vld [vmem:[#allocation9 + $0x7c8] sm:$0xff]
    %v2732 = vld [vmem:[#allocation9 + $0x7d0] sm:$0xff]
    %v2733 = vld [vmem:[#allocation9 + $0x7d8] sm:$0xff]
    %v2734 = vld [vmem:[#allocation9 + $0x7e0] sm:$0xff]
    %v2735 = vld [vmem:[#allocation9 + $0x7e8] sm:$0xff]
    %v2736 = vld [vmem:[#allocation9 + $0x7f0] sm:$0xff]
    %v2737 = vld [vmem:[#allocation9 + $0x7f8] sm:$0xff]
    %v2738 = vld [vmem:[%s10] sm:$0xf]
    %v2740 = vlaneseq
    %v2741 = vshrl.u32 %v2740, 7
    %v2742 = vsub.s32 0, %v2741
    %v2743 = vrot.slane %v2738, %v2742
    %v2744 = vlaneseq
    %v2745 = vshrl.u32 %v2744, 7
    %v2746 = vsub.s32 1, %v2745
    %v2747 = vrot.slane %v2738, %v2746
    %v2748 = vlaneseq
    %v2749 = vshrl.u32 %v2748, 7
    %v2750 = vsub.s32 2, %v2749
    %v2751 = vrot.slane %v2738, %v2750
    %v2752 = vlaneseq
    %v2753 = vshrl.u32 %v2752, 7
    %v2754 = vsub.s32 3, %v2753
    %v2755 = vrot.slane %v2738, %v2754
    %v3016 = vunpack.c.l.b16 %v2482
    %v3017 = vunpack.c.h.b16 %v2482
    %v3018 = vunpack.c.l.b16 %v2483
    %v3019 = vunpack.c.h.b16 %v2483
    %v3020 = vunpack.c.l.b16 %v2484
    %v3021 = vunpack.c.h.b16 %v2484
    %v3022 = vunpack.c.l.b16 %v2485
    %v3023 = vunpack.c.h.b16 %v2485
    %v3024 = vunpack.c.l.b16 %v2486
    %v3025 = vunpack.c.h.b16 %v2486
    %v3026 = vunpack.c.l.b16 %v2487
    %v3027 = vunpack.c.h.b16 %v2487
    %v3028 = vunpack.c.l.b16 %v2488
    %v3029 = vunpack.c.h.b16 %v2488
    %v3030 = vunpack.c.l.b16 %v2489
    %v3031 = vunpack.c.h.b16 %v2489
    %v3032 = vunpack.c.l.b16 %v2490
    %v3033 = vunpack.c.h.b16 %v2490
    %v3034 = vunpack.c.l.b16 %v2491
    %v3035 = vunpack.c.h.b16 %v2491
    %v3036 = vunpack.c.l.b16 %v2492
    %v3037 = vunpack.c.h.b16 %v2492
    %v3038 = vunpack.c.l.b16 %v2493
    %v3039 = vunpack.c.h.b16 %v2493
    %v3040 = vunpack.c.l.b16 %v2494
    %v3041 = vunpack.c.h.b16 %v2494
    %v3042 = vunpack.c.l.b16 %v2495
    %v3043 = vunpack.c.h.b16 %v2495
    %v3044 = vunpack.c.l.b16 %v2496
    %v3045 = vunpack.c.h.b16 %v2496
    %v3046 = vunpack.c.l.b16 %v2497
    %v3047 = vunpack.c.h.b16 %v2497
    %v3048 = vunpack.c.l.b16 %v2498
    %v3049 = vunpack.c.h.b16 %v2498
    %v3050 = vunpack.c.l.b16 %v2499
    %v3051 = vunpack.c.h.b16 %v2499
    %v3052 = vunpack.c.l.b16 %v2500
    %v3053 = vunpack.c.h.b16 %v2500
    %v3054 = vunpack.c.l.b16 %v2501
    %v3055 = vunpack.c.h.b16 %v2501
    %v3056 = vunpack.c.l.b16 %v2502
    %v3057 = vunpack.c.h.b16 %v2502
    %v3058 = vunpack.c.l.b16 %v2503
    %v3059 = vunpack.c.h.b16 %v2503
    %v3060 = vunpack.c.l.b16 %v2504
    %v3061 = vunpack.c.h.b16 %v2504
    %v3062 = vunpack.c.l.b16 %v2505
    %v3063 = vunpack.c.h.b16 %v2505
    %v3064 = vunpack.c.l.b16 %v2506
    %v3065 = vunpack.c.h.b16 %v2506
    %v3066 = vunpack.c.l.b16 %v2507
    %v3067 = vunpack.c.h.b16 %v2507
    %v3068 = vunpack.c.l.b16 %v2508
    %v3069 = vunpack.c.h.b16 %v2508
    %v3070 = vunpack.c.l.b16 %v2509
    %v3071 = vunpack.c.h.b16 %v2509
    %v3072 = vunpack.c.l.b16 %v2510
    %v3073 = vunpack.c.h.b16 %v2510
    %v3074 = vunpack.c.l.b16 %v2511
    %v3075 = vunpack.c.h.b16 %v2511
    %v3076 = vunpack.c.l.b16 %v2512
    %v3077 = vunpack.c.h.b16 %v2512
    %v3078 = vunpack.c.l.b16 %v2513
    %v3079 = vunpack.c.h.b16 %v2513
    %v3080 = vunpack.c.l.b16 %v2514
    %v3081 = vunpack.c.h.b16 %v2514
    %v3082 = vunpack.c.l.b16 %v2515
    %v3083 = vunpack.c.h.b16 %v2515
    %v3084 = vunpack.c.l.b16 %v2516
    %v3085 = vunpack.c.h.b16 %v2516
    %v3086 = vunpack.c.l.b16 %v2517
    %v3087 = vunpack.c.h.b16 %v2517
    %v3088 = vunpack.c.l.b16 %v2518
    %v3089 = vunpack.c.h.b16 %v2518
    %v3090 = vunpack.c.l.b16 %v2519
    %v3091 = vunpack.c.h.b16 %v2519
    %v3092 = vunpack.c.l.b16 %v2520
    %v3093 = vunpack.c.h.b16 %v2520
    %v3094 = vunpack.c.l.b16 %v2521
    %v3095 = vunpack.c.h.b16 %v2521
    %v3096 = vunpack.c.l.b16 %v2522
    %v3097 = vunpack.c.h.b16 %v2522
    %v3098 = vunpack.c.l.b16 %v2523
    %v3099 = vunpack.c.h.b16 %v2523
    %v3100 = vunpack.c.l.b16 %v2524
    %v3101 = vunpack.c.h.b16 %v2524
    %v3102 = vunpack.c.l.b16 %v2525
    %v3103 = vunpack.c.h.b16 %v2525
    %v3104 = vunpack.c.l.b16 %v2526
    %v3105 = vunpack.c.h.b16 %v2526
    %v3106 = vunpack.c.l.b16 %v2527
    %v3107 = vunpack.c.h.b16 %v2527
    %v3108 = vunpack.c.l.b16 %v2528
    %v3109 = vunpack.c.h.b16 %v2528
    %v3110 = vunpack.c.l.b16 %v2529
    %v3111 = vunpack.c.h.b16 %v2529
    %v3112 = vunpack.c.l.b16 %v2530
    %v3113 = vunpack.c.h.b16 %v2530
    %v3114 = vunpack.c.l.b16 %v2531
    %v3115 = vunpack.c.h.b16 %v2531
    %v3116 = vunpack.c.l.b16 %v2532
    %v3117 = vunpack.c.h.b16 %v2532
    %v3118 = vunpack.c.l.b16 %v2533
    %v3119 = vunpack.c.h.b16 %v2533
    %v3120 = vunpack.c.l.b16 %v2534
    %v3121 = vunpack.c.h.b16 %v2534
    %v3122 = vunpack.c.l.b16 %v2535
    %v3123 = vunpack.c.h.b16 %v2535
    %v3124 = vunpack.c.l.b16 %v2536
    %v3125 = vunpack.c.h.b16 %v2536
    %v3126 = vunpack.c.l.b16 %v2537
    %v3127 = vunpack.c.h.b16 %v2537
    %v3128 = vunpack.c.l.b16 %v2538
    %v3129 = vunpack.c.h.b16 %v2538
    %v3130 = vunpack.c.l.b16 %v2539
    %v3131 = vunpack.c.h.b16 %v2539
    %v3132 = vunpack.c.l.b16 %v2540
    %v3133 = vunpack.c.h.b16 %v2540
    %v3134 = vunpack.c.l.b16 %v2541
    %v3135 = vunpack.c.h.b16 %v2541
    %v3136 = vunpack.c.l.b16 %v2542
    %v3137 = vunpack.c.h.b16 %v2542
    %v3138 = vunpack.c.l.b16 %v2543
    %v3139 = vunpack.c.h.b16 %v2543
    %v3140 = vunpack.c.l.b16 %v2544
    %v3141 = vunpack.c.h.b16 %v2544
    %v3142 = vunpack.c.l.b16 %v2545
    %v3143 = vunpack.c.h.b16 %v2545
    %v3144 = vunpack.c.l.b16 %v2546
    %v3145 = vunpack.c.h.b16 %v2546
    %v3146 = vunpack.c.l.b16 %v2547
    %v3147 = vunpack.c.h.b16 %v2547
    %v3148 = vunpack.c.l.b16 %v2548
    %v3149 = vunpack.c.h.b16 %v2548
    %v3150 = vunpack.c.l.b16 %v2549
    %v3151 = vunpack.c.h.b16 %v2549
    %v3152 = vunpack.c.l.b16 %v2550
    %v3153 = vunpack.c.h.b16 %v2550
    %v3154 = vunpack.c.l.b16 %v2551
    %v3155 = vunpack.c.h.b16 %v2551
    %v3156 = vunpack.c.l.b16 %v2552
    %v3157 = vunpack.c.h.b16 %v2552
    %v3158 = vunpack.c.l.b16 %v2553
    %v3159 = vunpack.c.h.b16 %v2553
    %v3160 = vunpack.c.l.b16 %v2554
    %v3161 = vunpack.c.h.b16 %v2554
    %v3162 = vunpack.c.l.b16 %v2555
    %v3163 = vunpack.c.h.b16 %v2555
    %v3164 = vunpack.c.l.b16 %v2556
    %v3165 = vunpack.c.h.b16 %v2556
    %v3166 = vunpack.c.l.b16 %v2557
    %v3167 = vunpack.c.h.b16 %v2557
    %v3168 = vunpack.c.l.b16 %v2558
    %v3169 = vunpack.c.h.b16 %v2558
    %v3170 = vunpack.c.l.b16 %v2559
    %v3171 = vunpack.c.h.b16 %v2559
    %v3172 = vunpack.c.l.b16 %v2560
    %v3173 = vunpack.c.h.b16 %v2560
    %v3174 = vunpack.c.l.b16 %v2561
    %v3175 = vunpack.c.h.b16 %v2561
    %v3176 = vunpack.c.l.b16 %v2562
    %v3177 = vunpack.c.h.b16 %v2562
    %v3178 = vunpack.c.l.b16 %v2563
    %v3179 = vunpack.c.h.b16 %v2563
    %v3180 = vunpack.c.l.b16 %v2564
    %v3181 = vunpack.c.h.b16 %v2564
    %v3182 = vunpack.c.l.b16 %v2565
    %v3183 = vunpack.c.h.b16 %v2565
    %v3184 = vunpack.c.l.b16 %v2566
    %v3185 = vunpack.c.h.b16 %v2566
    %v3186 = vunpack.c.l.b16 %v2567
    %v3187 = vunpack.c.h.b16 %v2567
    %v3188 = vunpack.c.l.b16 %v2568
    %v3189 = vunpack.c.h.b16 %v2568
    %v3190 = vunpack.c.l.b16 %v2569
    %v3191 = vunpack.c.h.b16 %v2569
    %v3192 = vunpack.c.l.b16 %v2570
    %v3193 = vunpack.c.h.b16 %v2570
    %v3194 = vunpack.c.l.b16 %v2571
    %v3195 = vunpack.c.h.b16 %v2571
    %v3196 = vunpack.c.l.b16 %v2572
    %v3197 = vunpack.c.h.b16 %v2572
    %v3198 = vunpack.c.l.b16 %v2573
    %v3199 = vunpack.c.h.b16 %v2573
    %v3200 = vunpack.c.l.b16 %v2574
    %v3201 = vunpack.c.h.b16 %v2574
    %v3202 = vunpack.c.l.b16 %v2575
    %v3203 = vunpack.c.h.b16 %v2575
    %v3204 = vunpack.c.l.b16 %v2576
    %v3205 = vunpack.c.h.b16 %v2576
    %v3206 = vunpack.c.l.b16 %v2577
    %v3207 = vunpack.c.h.b16 %v2577
    %v3208 = vunpack.c.l.b16 %v2578
    %v3209 = vunpack.c.h.b16 %v2578
    %v3210 = vunpack.c.l.b16 %v2579
    %v3211 = vunpack.c.h.b16 %v2579
    %v3212 = vunpack.c.l.b16 %v2580
    %v3213 = vunpack.c.h.b16 %v2580
    %v3214 = vunpack.c.l.b16 %v2581
    %v3215 = vunpack.c.h.b16 %v2581
    %v3216 = vunpack.c.l.b16 %v2582
    %v3217 = vunpack.c.h.b16 %v2582
    %v3218 = vunpack.c.l.b16 %v2583
    %v3219 = vunpack.c.h.b16 %v2583
    %v3220 = vunpack.c.l.b16 %v2584
    %v3221 = vunpack.c.h.b16 %v2584
    %v3222 = vunpack.c.l.b16 %v2585
    %v3223 = vunpack.c.h.b16 %v2585
    %v3224 = vunpack.c.l.b16 %v2586
    %v3225 = vunpack.c.h.b16 %v2586
    %v3226 = vunpack.c.l.b16 %v2587
    %v3227 = vunpack.c.h.b16 %v2587
    %v3228 = vunpack.c.l.b16 %v2588
    %v3229 = vunpack.c.h.b16 %v2588
    %v3230 = vunpack.c.l.b16 %v2589
    %v3231 = vunpack.c.h.b16 %v2589
    %v3232 = vunpack.c.l.b16 %v2590
    %v3233 = vunpack.c.h.b16 %v2590
    %v3234 = vunpack.c.l.b16 %v2591
    %v3235 = vunpack.c.h.b16 %v2591
    %v3236 = vunpack.c.l.b16 %v2592
    %v3237 = vunpack.c.h.b16 %v2592
    %v3238 = vunpack.c.l.b16 %v2593
    %v3239 = vunpack.c.h.b16 %v2593
    %v3240 = vunpack.c.l.b16 %v2594
    %v3241 = vunpack.c.h.b16 %v2594
    %v3242 = vunpack.c.l.b16 %v2595
    %v3243 = vunpack.c.h.b16 %v2595
    %v3244 = vunpack.c.l.b16 %v2596
    %v3245 = vunpack.c.h.b16 %v2596
    %v3246 = vunpack.c.l.b16 %v2597
    %v3247 = vunpack.c.h.b16 %v2597
    %v3248 = vunpack.c.l.b16 %v2598
    %v3249 = vunpack.c.h.b16 %v2598
    %v3250 = vunpack.c.l.b16 %v2599
    %v3251 = vunpack.c.h.b16 %v2599
    %v3252 = vunpack.c.l.b16 %v2600
    %v3253 = vunpack.c.h.b16 %v2600
    %v3254 = vunpack.c.l.b16 %v2601
    %v3255 = vunpack.c.h.b16 %v2601
    %v3256 = vunpack.c.l.b16 %v2602
    %v3257 = vunpack.c.h.b16 %v2602
    %v3258 = vunpack.c.l.b16 %v2603
    %v3259 = vunpack.c.h.b16 %v2603
    %v3260 = vunpack.c.l.b16 %v2604
    %v3261 = vunpack.c.h.b16 %v2604
    %v3262 = vunpack.c.l.b16 %v2605
    %v3263 = vunpack.c.h.b16 %v2605
    %v3264 = vunpack.c.l.b16 %v2606
    %v3265 = vunpack.c.h.b16 %v2606
    %v3266 = vunpack.c.l.b16 %v2607
    %v3267 = vunpack.c.h.b16 %v2607
    %v3268 = vunpack.c.l.b16 %v2608
    %v3269 = vunpack.c.h.b16 %v2608
    %v3270 = vunpack.c.l.b16 %v2609
    %v3271 = vunpack.c.h.b16 %v2609
    %v3272 = vunpack.c.l.b16 %v2610
    %v3273 = vunpack.c.h.b16 %v2610
    %v3274 = vunpack.c.l.b16 %v2611
    %v3275 = vunpack.c.h.b16 %v2611
    %v3276 = vunpack.c.l.b16 %v2612
    %v3277 = vunpack.c.h.b16 %v2612
    %v3278 = vunpack.c.l.b16 %v2613
    %v3279 = vunpack.c.h.b16 %v2613
    %v3280 = vunpack.c.l.b16 %v2614
    %v3281 = vunpack.c.h.b16 %v2614
    %v3282 = vunpack.c.l.b16 %v2615
    %v3283 = vunpack.c.h.b16 %v2615
    %v3284 = vunpack.c.l.b16 %v2616
    %v3285 = vunpack.c.h.b16 %v2616
    %v3286 = vunpack.c.l.b16 %v2617
    %v3287 = vunpack.c.h.b16 %v2617
    %v3288 = vunpack.c.l.b16 %v2618
    %v3289 = vunpack.c.h.b16 %v2618
    %v3290 = vunpack.c.l.b16 %v2619
    %v3291 = vunpack.c.h.b16 %v2619
    %v3292 = vunpack.c.l.b16 %v2620
    %v3293 = vunpack.c.h.b16 %v2620
    %v3294 = vunpack.c.l.b16 %v2621
    %v3295 = vunpack.c.h.b16 %v2621
    %v3296 = vunpack.c.l.b16 %v2622
    %v3297 = vunpack.c.h.b16 %v2622
    %v3298 = vunpack.c.l.b16 %v2623
    %v3299 = vunpack.c.h.b16 %v2623
    %v3300 = vunpack.c.l.b16 %v2624
    %v3301 = vunpack.c.h.b16 %v2624
    %v3302 = vunpack.c.l.b16 %v2625
    %v3303 = vunpack.c.h.b16 %v2625
    %v3304 = vunpack.c.l.b16 %v2626
    %v3305 = vunpack.c.h.b16 %v2626
    %v3306 = vunpack.c.l.b16 %v2627
    %v3307 = vunpack.c.h.b16 %v2627
    %v3308 = vunpack.c.l.b16 %v2628
    %v3309 = vunpack.c.h.b16 %v2628
    %v3310 = vunpack.c.l.b16 %v2629
    %v3311 = vunpack.c.h.b16 %v2629
    %v3312 = vunpack.c.l.b16 %v2630
    %v3313 = vunpack.c.h.b16 %v2630
    %v3314 = vunpack.c.l.b16 %v2631
    %v3315 = vunpack.c.h.b16 %v2631
    %v3316 = vunpack.c.l.b16 %v2632
    %v3317 = vunpack.c.h.b16 %v2632
    %v3318 = vunpack.c.l.b16 %v2633
    %v3319 = vunpack.c.h.b16 %v2633
    %v3320 = vunpack.c.l.b16 %v2634
    %v3321 = vunpack.c.h.b16 %v2634
    %v3322 = vunpack.c.l.b16 %v2635
    %v3323 = vunpack.c.h.b16 %v2635
    %v3324 = vunpack.c.l.b16 %v2636
    %v3325 = vunpack.c.h.b16 %v2636
    %v3326 = vunpack.c.l.b16 %v2637
    %v3327 = vunpack.c.h.b16 %v2637
    %v3328 = vunpack.c.l.b16 %v2638
    %v3329 = vunpack.c.h.b16 %v2638
    %v3330 = vunpack.c.l.b16 %v2639
    %v3331 = vunpack.c.h.b16 %v2639
    %v3332 = vunpack.c.l.b16 %v2640
    %v3333 = vunpack.c.h.b16 %v2640
    %v3334 = vunpack.c.l.b16 %v2641
    %v3335 = vunpack.c.h.b16 %v2641
    %v3336 = vunpack.c.l.b16 %v2642
    %v3337 = vunpack.c.h.b16 %v2642
    %v3338 = vunpack.c.l.b16 %v2643
    %v3339 = vunpack.c.h.b16 %v2643
    %v3340 = vunpack.c.l.b16 %v2644
    %v3341 = vunpack.c.h.b16 %v2644
    %v3342 = vunpack.c.l.b16 %v2645
    %v3343 = vunpack.c.h.b16 %v2645
    %v3344 = vunpack.c.l.b16 %v2646
    %v3345 = vunpack.c.h.b16 %v2646
    %v3346 = vunpack.c.l.b16 %v2647
    %v3347 = vunpack.c.h.b16 %v2647
    %v3348 = vunpack.c.l.b16 %v2648
    %v3349 = vunpack.c.h.b16 %v2648
    %v3350 = vunpack.c.l.b16 %v2649
    %v3351 = vunpack.c.h.b16 %v2649
    %v3352 = vunpack.c.l.b16 %v2650
    %v3353 = vunpack.c.h.b16 %v2650
    %v3354 = vunpack.c.l.b16 %v2651
    %v3355 = vunpack.c.h.b16 %v2651
    %v3356 = vunpack.c.l.b16 %v2652
    %v3357 = vunpack.c.h.b16 %v2652
    %v3358 = vunpack.c.l.b16 %v2653
    %v3359 = vunpack.c.h.b16 %v2653
    %v3360 = vunpack.c.l.b16 %v2654
    %v3361 = vunpack.c.h.b16 %v2654
    %v3362 = vunpack.c.l.b16 %v2655
    %v3363 = vunpack.c.h.b16 %v2655
    %v3364 = vunpack.c.l.b16 %v2656
    %v3365 = vunpack.c.h.b16 %v2656
    %v3366 = vunpack.c.l.b16 %v2657
    %v3367 = vunpack.c.h.b16 %v2657
    %v3368 = vunpack.c.l.b16 %v2658
    %v3369 = vunpack.c.h.b16 %v2658
    %v3370 = vunpack.c.l.b16 %v2659
    %v3371 = vunpack.c.h.b16 %v2659
    %v3372 = vunpack.c.l.b16 %v2660
    %v3373 = vunpack.c.h.b16 %v2660
    %v3374 = vunpack.c.l.b16 %v2661
    %v3375 = vunpack.c.h.b16 %v2661
    %v3376 = vunpack.c.l.b16 %v2662
    %v3377 = vunpack.c.h.b16 %v2662
    %v3378 = vunpack.c.l.b16 %v2663
    %v3379 = vunpack.c.h.b16 %v2663
    %v3380 = vunpack.c.l.b16 %v2664
    %v3381 = vunpack.c.h.b16 %v2664
    %v3382 = vunpack.c.l.b16 %v2665
    %v3383 = vunpack.c.h.b16 %v2665
    %v3384 = vunpack.c.l.b16 %v2666
    %v3385 = vunpack.c.h.b16 %v2666
    %v3386 = vunpack.c.l.b16 %v2667
    %v3387 = vunpack.c.h.b16 %v2667
    %v3388 = vunpack.c.l.b16 %v2668
    %v3389 = vunpack.c.h.b16 %v2668
    %v3390 = vunpack.c.l.b16 %v2669
    %v3391 = vunpack.c.h.b16 %v2669
    %v3392 = vunpack.c.l.b16 %v2670
    %v3393 = vunpack.c.h.b16 %v2670
    %v3394 = vunpack.c.l.b16 %v2671
    %v3395 = vunpack.c.h.b16 %v2671
    %v3396 = vunpack.c.l.b16 %v2672
    %v3397 = vunpack.c.h.b16 %v2672
    %v3398 = vunpack.c.l.b16 %v2673
    %v3399 = vunpack.c.h.b16 %v2673
    %v3400 = vunpack.c.l.b16 %v2674
    %v3401 = vunpack.c.h.b16 %v2674
    %v3402 = vunpack.c.l.b16 %v2675
    %v3403 = vunpack.c.h.b16 %v2675
    %v3404 = vunpack.c.l.b16 %v2676
    %v3405 = vunpack.c.h.b16 %v2676
    %v3406 = vunpack.c.l.b16 %v2677
    %v3407 = vunpack.c.h.b16 %v2677
    %v3408 = vunpack.c.l.b16 %v2678
    %v3409 = vunpack.c.h.b16 %v2678
    %v3410 = vunpack.c.l.b16 %v2679
    %v3411 = vunpack.c.h.b16 %v2679
    %v3412 = vunpack.c.l.b16 %v2680
    %v3413 = vunpack.c.h.b16 %v2680
    %v3414 = vunpack.c.l.b16 %v2681
    %v3415 = vunpack.c.h.b16 %v2681
    %v3416 = vunpack.c.l.b16 %v2682
    %v3417 = vunpack.c.h.b16 %v2682
    %v3418 = vunpack.c.l.b16 %v2683
    %v3419 = vunpack.c.h.b16 %v2683
    %v3420 = vunpack.c.l.b16 %v2684
    %v3421 = vunpack.c.h.b16 %v2684
    %v3422 = vunpack.c.l.b16 %v2685
    %v3423 = vunpack.c.h.b16 %v2685
    %v3424 = vunpack.c.l.b16 %v2686
    %v3425 = vunpack.c.h.b16 %v2686
    %v3426 = vunpack.c.l.b16 %v2687
    %v3427 = vunpack.c.h.b16 %v2687
    %v3428 = vunpack.c.l.b16 %v2688
    %v3429 = vunpack.c.h.b16 %v2688
    %v3430 = vunpack.c.l.b16 %v2689
    %v3431 = vunpack.c.h.b16 %v2689
    %v3432 = vunpack.c.l.b16 %v2690
    %v3433 = vunpack.c.h.b16 %v2690
    %v3434 = vunpack.c.l.b16 %v2691
    %v3435 = vunpack.c.h.b16 %v2691
    %v3436 = vunpack.c.l.b16 %v2692
    %v3437 = vunpack.c.h.b16 %v2692
    %v3438 = vunpack.c.l.b16 %v2693
    %v3439 = vunpack.c.h.b16 %v2693
    %v3440 = vunpack.c.l.b16 %v2694
    %v3441 = vunpack.c.h.b16 %v2694
    %v3442 = vunpack.c.l.b16 %v2695
    %v3443 = vunpack.c.h.b16 %v2695
    %v3444 = vunpack.c.l.b16 %v2696
    %v3445 = vunpack.c.h.b16 %v2696
    %v3446 = vunpack.c.l.b16 %v2697
    %v3447 = vunpack.c.h.b16 %v2697
    %v3448 = vunpack.c.l.b16 %v2698
    %v3449 = vunpack.c.h.b16 %v2698
    %v3450 = vunpack.c.l.b16 %v2699
    %v3451 = vunpack.c.h.b16 %v2699
    %v3452 = vunpack.c.l.b16 %v2700
    %v3453 = vunpack.c.h.b16 %v2700
    %v3454 = vunpack.c.l.b16 %v2701
    %v3455 = vunpack.c.h.b16 %v2701
    %v3456 = vunpack.c.l.b16 %v2702
    %v3457 = vunpack.c.h.b16 %v2702
    %v3458 = vunpack.c.l.b16 %v2703
    %v3459 = vunpack.c.h.b16 %v2703
    %v3460 = vunpack.c.l.b16 %v2704
    %v3461 = vunpack.c.h.b16 %v2704
    %v3462 = vunpack.c.l.b16 %v2705
    %v3463 = vunpack.c.h.b16 %v2705
    %v3464 = vunpack.c.l.b16 %v2706
    %v3465 = vunpack.c.h.b16 %v2706
    %v3466 = vunpack.c.l.b16 %v2707
    %v3467 = vunpack.c.h.b16 %v2707
    %v3468 = vunpack.c.l.b16 %v2708
    %v3469 = vunpack.c.h.b16 %v2708
    %v3470 = vunpack.c.l.b16 %v2709
    %v3471 = vunpack.c.h.b16 %v2709
    %v3472 = vunpack.c.l.b16 %v2710
    %v3473 = vunpack.c.h.b16 %v2710
    %v3474 = vunpack.c.l.b16 %v2711
    %v3475 = vunpack.c.h.b16 %v2711
    %v3476 = vunpack.c.l.b16 %v2712
    %v3477 = vunpack.c.h.b16 %v2712
    %v3478 = vunpack.c.l.b16 %v2713
    %v3479 = vunpack.c.h.b16 %v2713
    %v3480 = vunpack.c.l.b16 %v2714
    %v3481 = vunpack.c.h.b16 %v2714
    %v3482 = vunpack.c.l.b16 %v2715
    %v3483 = vunpack.c.h.b16 %v2715
    %v3484 = vunpack.c.l.b16 %v2716
    %v3485 = vunpack.c.h.b16 %v2716
    %v3486 = vunpack.c.l.b16 %v2717
    %v3487 = vunpack.c.h.b16 %v2717
    %v3488 = vunpack.c.l.b16 %v2718
    %v3489 = vunpack.c.h.b16 %v2718
    %v3490 = vunpack.c.l.b16 %v2719
    %v3491 = vunpack.c.h.b16 %v2719
    %v3492 = vunpack.c.l.b16 %v2720
    %v3493 = vunpack.c.h.b16 %v2720
    %v3494 = vunpack.c.l.b16 %v2721
    %v3495 = vunpack.c.h.b16 %v2721
    %v3496 = vunpack.c.l.b16 %v2722
    %v3497 = vunpack.c.h.b16 %v2722
    %v3498 = vunpack.c.l.b16 %v2723
    %v3499 = vunpack.c.h.b16 %v2723
    %v3500 = vunpack.c.l.b16 %v2724
    %v3501 = vunpack.c.h.b16 %v2724
    %v3502 = vunpack.c.l.b16 %v2725
    %v3503 = vunpack.c.h.b16 %v2725
    %v3504 = vunpack.c.l.b16 %v2726
    %v3505 = vunpack.c.h.b16 %v2726
    %v3506 = vunpack.c.l.b16 %v2727
    %v3507 = vunpack.c.h.b16 %v2727
    %v3508 = vunpack.c.l.b16 %v2728
    %v3509 = vunpack.c.h.b16 %v2728
    %v3510 = vunpack.c.l.b16 %v2729
    %v3511 = vunpack.c.h.b16 %v2729
    %v3512 = vunpack.c.l.b16 %v2730
    %v3513 = vunpack.c.h.b16 %v2730
    %v3514 = vunpack.c.l.b16 %v2731
    %v3515 = vunpack.c.h.b16 %v2731
    %v3516 = vunpack.c.l.b16 %v2732
    %v3517 = vunpack.c.h.b16 %v2732
    %v3518 = vunpack.c.l.b16 %v2733
    %v3519 = vunpack.c.h.b16 %v2733
    %v3520 = vunpack.c.l.b16 %v2734
    %v3521 = vunpack.c.h.b16 %v2734
    %v3522 = vunpack.c.l.b16 %v2735
    %v3523 = vunpack.c.h.b16 %v2735
    %v3524 = vunpack.c.l.b16 %v2736
    %v3525 = vunpack.c.h.b16 %v2736
    %v3526 = vunpack.c.l.b16 %v2737
    %v3527 = vunpack.c.h.b16 %v2737
    %v3528 = vpack.c.b16 %v3020, %v3016
    %v3529 = vpack.c.b16 %v3021, %v3017
    %v3530 = vpack.c.b16 %v3022, %v3018
    %v3531 = vpack.c.b16 %v3023, %v3019
    %v3532 = vpack.c.b16 %v3028, %v3024
    %v3533 = vpack.c.b16 %v3029, %v3025
    %v3534 = vpack.c.b16 %v3030, %v3026
    %v3535 = vpack.c.b16 %v3031, %v3027
    %v3536 = vpack.c.b16 %v3036, %v3032
    %v3537 = vpack.c.b16 %v3037, %v3033
    %v3538 = vpack.c.b16 %v3038, %v3034
    %v3539 = vpack.c.b16 %v3039, %v3035
    %v3540 = vpack.c.b16 %v3044, %v3040
    %v3541 = vpack.c.b16 %v3045, %v3041
    %v3542 = vpack.c.b16 %v3046, %v3042
    %v3543 = vpack.c.b16 %v3047, %v3043
    %v3544 = vpack.c.b16 %v3052, %v3048
    %v3545 = vpack.c.b16 %v3053, %v3049
    %v3546 = vpack.c.b16 %v3054, %v3050
    %v3547 = vpack.c.b16 %v3055, %v3051
    %v3548 = vpack.c.b16 %v3060, %v3056
    %v3549 = vpack.c.b16 %v3061, %v3057
    %v3550 = vpack.c.b16 %v3062, %v3058
    %v3551 = vpack.c.b16 %v3063, %v3059
    %v3552 = vpack.c.b16 %v3068, %v3064
    %v3553 = vpack.c.b16 %v3069, %v3065
    %v3554 = vpack.c.b16 %v3070, %v3066
    %v3555 = vpack.c.b16 %v3071, %v3067
    %v3556 = vpack.c.b16 %v3076, %v3072
    %v3557 = vpack.c.b16 %v3077, %v3073
    %v3558 = vpack.c.b16 %v3078, %v3074
    %v3559 = vpack.c.b16 %v3079, %v3075
    %v3560 = vpack.c.b16 %v3084, %v3080
    %v3561 = vpack.c.b16 %v3085, %v3081
    %v3562 = vpack.c.b16 %v3086, %v3082
    %v3563 = vpack.c.b16 %v3087, %v3083
    %v3564 = vpack.c.b16 %v3092, %v3088
    %v3565 = vpack.c.b16 %v3093, %v3089
    %v3566 = vpack.c.b16 %v3094, %v3090
    %v3567 = vpack.c.b16 %v3095, %v3091
    %v3568 = vpack.c.b16 %v3100, %v3096
    %v3569 = vpack.c.b16 %v3101, %v3097
    %v3570 = vpack.c.b16 %v3102, %v3098
    %v3571 = vpack.c.b16 %v3103, %v3099
    %v3572 = vpack.c.b16 %v3108, %v3104
    %v3573 = vpack.c.b16 %v3109, %v3105
    %v3574 = vpack.c.b16 %v3110, %v3106
    %v3575 = vpack.c.b16 %v3111, %v3107
    %v3576 = vpack.c.b16 %v3116, %v3112
    %v3577 = vpack.c.b16 %v3117, %v3113
    %v3578 = vpack.c.b16 %v3118, %v3114
    %v3579 = vpack.c.b16 %v3119, %v3115
    %v3580 = vpack.c.b16 %v3124, %v3120
    %v3581 = vpack.c.b16 %v3125, %v3121
    %v3582 = vpack.c.b16 %v3126, %v3122
    %v3583 = vpack.c.b16 %v3127, %v3123
    %v3584 = vpack.c.b16 %v3132, %v3128
    %v3585 = vpack.c.b16 %v3133, %v3129
    %v3586 = vpack.c.b16 %v3134, %v3130
    %v3587 = vpack.c.b16 %v3135, %v3131
    %v3588 = vpack.c.b16 %v3140, %v3136
    %v3589 = vpack.c.b16 %v3141, %v3137
    %v3590 = vpack.c.b16 %v3142, %v3138
    %v3591 = vpack.c.b16 %v3143, %v3139
    %v3592 = vpack.c.b16 %v3148, %v3144
    %v3593 = vpack.c.b16 %v3149, %v3145
    %v3594 = vpack.c.b16 %v3150, %v3146
    %v3595 = vpack.c.b16 %v3151, %v3147
    %v3596 = vpack.c.b16 %v3156, %v3152
    %v3597 = vpack.c.b16 %v3157, %v3153
    %v3598 = vpack.c.b16 %v3158, %v3154
    %v3599 = vpack.c.b16 %v3159, %v3155
    %v3600 = vpack.c.b16 %v3164, %v3160
    %v3601 = vpack.c.b16 %v3165, %v3161
    %v3602 = vpack.c.b16 %v3166, %v3162
    %v3603 = vpack.c.b16 %v3167, %v3163
    %v3604 = vpack.c.b16 %v3172, %v3168
    %v3605 = vpack.c.b16 %v3173, %v3169
    %v3606 = vpack.c.b16 %v3174, %v3170
    %v3607 = vpack.c.b16 %v3175, %v3171
    %v3608 = vpack.c.b16 %v3180, %v3176
    %v3609 = vpack.c.b16 %v3181, %v3177
    %v3610 = vpack.c.b16 %v3182, %v3178
    %v3611 = vpack.c.b16 %v3183, %v3179
    %v3612 = vpack.c.b16 %v3188, %v3184
    %v3613 = vpack.c.b16 %v3189, %v3185
    %v3614 = vpack.c.b16 %v3190, %v3186
    %v3615 = vpack.c.b16 %v3191, %v3187
    %v3616 = vpack.c.b16 %v3196, %v3192
    %v3617 = vpack.c.b16 %v3197, %v3193
    %v3618 = vpack.c.b16 %v3198, %v3194
    %v3619 = vpack.c.b16 %v3199, %v3195
    %v3620 = vpack.c.b16 %v3204, %v3200
    %v3621 = vpack.c.b16 %v3205, %v3201
    %v3622 = vpack.c.b16 %v3206, %v3202
    %v3623 = vpack.c.b16 %v3207, %v3203
    %v3624 = vpack.c.b16 %v3212, %v3208
    %v3625 = vpack.c.b16 %v3213, %v3209
    %v3626 = vpack.c.b16 %v3214, %v3210
    %v3627 = vpack.c.b16 %v3215, %v3211
    %v3628 = vpack.c.b16 %v3220, %v3216
    %v3629 = vpack.c.b16 %v3221, %v3217
    %v3630 = vpack.c.b16 %v3222, %v3218
    %v3631 = vpack.c.b16 %v3223, %v3219
    %v3632 = vpack.c.b16 %v3228, %v3224
    %v3633 = vpack.c.b16 %v3229, %v3225
    %v3634 = vpack.c.b16 %v3230, %v3226
    %v3635 = vpack.c.b16 %v3231, %v3227
    %v3636 = vpack.c.b16 %v3236, %v3232
    %v3637 = vpack.c.b16 %v3237, %v3233
    %v3638 = vpack.c.b16 %v3238, %v3234
    %v3639 = vpack.c.b16 %v3239, %v3235
    %v3640 = vpack.c.b16 %v3244, %v3240
    %v3641 = vpack.c.b16 %v3245, %v3241
    %v3642 = vpack.c.b16 %v3246, %v3242
    %v3643 = vpack.c.b16 %v3247, %v3243
    %v3644 = vpack.c.b16 %v3252, %v3248
    %v3645 = vpack.c.b16 %v3253, %v3249
    %v3646 = vpack.c.b16 %v3254, %v3250
    %v3647 = vpack.c.b16 %v3255, %v3251
    %v3648 = vpack.c.b16 %v3260, %v3256
    %v3649 = vpack.c.b16 %v3261, %v3257
    %v3650 = vpack.c.b16 %v3262, %v3258
    %v3651 = vpack.c.b16 %v3263, %v3259
    %v3652 = vpack.c.b16 %v3268, %v3264
    %v3653 = vpack.c.b16 %v3269, %v3265
    %v3654 = vpack.c.b16 %v3270, %v3266
    %v3655 = vpack.c.b16 %v3271, %v3267
    %v3656 = vpack.c.b16 %v3276, %v3272
    %v3657 = vpack.c.b16 %v3277, %v3273
    %v3658 = vpack.c.b16 %v3278, %v3274
    %v3659 = vpack.c.b16 %v3279, %v3275
    %v3660 = vpack.c.b16 %v3284, %v3280
    %v3661 = vpack.c.b16 %v3285, %v3281
    %v3662 = vpack.c.b16 %v3286, %v3282
    %v3663 = vpack.c.b16 %v3287, %v3283
    %v3664 = vpack.c.b16 %v3292, %v3288
    %v3665 = vpack.c.b16 %v3293, %v3289
    %v3666 = vpack.c.b16 %v3294, %v3290
    %v3667 = vpack.c.b16 %v3295, %v3291
    %v3668 = vpack.c.b16 %v3300, %v3296
    %v3669 = vpack.c.b16 %v3301, %v3297
    %v3670 = vpack.c.b16 %v3302, %v3298
    %v3671 = vpack.c.b16 %v3303, %v3299
    %v3672 = vpack.c.b16 %v3308, %v3304
    %v3673 = vpack.c.b16 %v3309, %v3305
    %v3674 = vpack.c.b16 %v3310, %v3306
    %v3675 = vpack.c.b16 %v3311, %v3307
    %v3676 = vpack.c.b16 %v3316, %v3312
    %v3677 = vpack.c.b16 %v3317, %v3313
    %v3678 = vpack.c.b16 %v3318, %v3314
    %v3679 = vpack.c.b16 %v3319, %v3315
    %v3680 = vpack.c.b16 %v3324, %v3320
    %v3681 = vpack.c.b16 %v3325, %v3321
    %v3682 = vpack.c.b16 %v3326, %v3322
    %v3683 = vpack.c.b16 %v3327, %v3323
    %v3684 = vpack.c.b16 %v3332, %v3328
    %v3685 = vpack.c.b16 %v3333, %v3329
    %v3686 = vpack.c.b16 %v3334, %v3330
    %v3687 = vpack.c.b16 %v3335, %v3331
    %v3688 = vpack.c.b16 %v3340, %v3336
    %v3689 = vpack.c.b16 %v3341, %v3337
    %v3690 = vpack.c.b16 %v3342, %v3338
    %v3691 = vpack.c.b16 %v3343, %v3339
    %v3692 = vpack.c.b16 %v3348, %v3344
    %v3693 = vpack.c.b16 %v3349, %v3345
    %v3694 = vpack.c.b16 %v3350, %v3346
    %v3695 = vpack.c.b16 %v3351, %v3347
    %v3696 = vpack.c.b16 %v3356, %v3352
    %v3697 = vpack.c.b16 %v3357, %v3353
    %v3698 = vpack.c.b16 %v3358, %v3354
    %v3699 = vpack.c.b16 %v3359, %v3355
    %v3700 = vpack.c.b16 %v3364, %v3360
    %v3701 = vpack.c.b16 %v3365, %v3361
    %v3702 = vpack.c.b16 %v3366, %v3362
    %v3703 = vpack.c.b16 %v3367, %v3363
    %v3704 = vpack.c.b16 %v3372, %v3368
    %v3705 = vpack.c.b16 %v3373, %v3369
    %v3706 = vpack.c.b16 %v3374, %v3370
    %v3707 = vpack.c.b16 %v3375, %v3371
    %v3708 = vpack.c.b16 %v3380, %v3376
    %v3709 = vpack.c.b16 %v3381, %v3377
    %v3710 = vpack.c.b16 %v3382, %v3378
    %v3711 = vpack.c.b16 %v3383, %v3379
    %v3712 = vpack.c.b16 %v3388, %v3384
    %v3713 = vpack.c.b16 %v3389, %v3385
    %v3714 = vpack.c.b16 %v3390, %v3386
    %v3715 = vpack.c.b16 %v3391, %v3387
    %v3716 = vpack.c.b16 %v3396, %v3392
    %v3717 = vpack.c.b16 %v3397, %v3393
    %v3718 = vpack.c.b16 %v3398, %v3394
    %v3719 = vpack.c.b16 %v3399, %v3395
    %v3720 = vpack.c.b16 %v3404, %v3400
    %v3721 = vpack.c.b16 %v3405, %v3401
    %v3722 = vpack.c.b16 %v3406, %v3402
    %v3723 = vpack.c.b16 %v3407, %v3403
    %v3724 = vpack.c.b16 %v3412, %v3408
    %v3725 = vpack.c.b16 %v3413, %v3409
    %v3726 = vpack.c.b16 %v3414, %v3410
    %v3727 = vpack.c.b16 %v3415, %v3411
    %v3728 = vpack.c.b16 %v3420, %v3416
    %v3729 = vpack.c.b16 %v3421, %v3417
    %v3730 = vpack.c.b16 %v3422, %v3418
    %v3731 = vpack.c.b16 %v3423, %v3419
    %v3732 = vpack.c.b16 %v3428, %v3424
    %v3733 = vpack.c.b16 %v3429, %v3425
    %v3734 = vpack.c.b16 %v3430, %v3426
    %v3735 = vpack.c.b16 %v3431, %v3427
    %v3736 = vpack.c.b16 %v3436, %v3432
    %v3737 = vpack.c.b16 %v3437, %v3433
    %v3738 = vpack.c.b16 %v3438, %v3434
    %v3739 = vpack.c.b16 %v3439, %v3435
    %v3740 = vpack.c.b16 %v3444, %v3440
    %v3741 = vpack.c.b16 %v3445, %v3441
    %v3742 = vpack.c.b16 %v3446, %v3442
    %v3743 = vpack.c.b16 %v3447, %v3443
    %v3744 = vpack.c.b16 %v3452, %v3448
    %v3745 = vpack.c.b16 %v3453, %v3449
    %v3746 = vpack.c.b16 %v3454, %v3450
    %v3747 = vpack.c.b16 %v3455, %v3451
    %v3748 = vpack.c.b16 %v3460, %v3456
    %v3749 = vpack.c.b16 %v3461, %v3457
    %v3750 = vpack.c.b16 %v3462, %v3458
    %v3751 = vpack.c.b16 %v3463, %v3459
    %v3752 = vpack.c.b16 %v3468, %v3464
    %v3753 = vpack.c.b16 %v3469, %v3465
    %v3754 = vpack.c.b16 %v3470, %v3466
    %v3755 = vpack.c.b16 %v3471, %v3467
    %v3756 = vpack.c.b16 %v3476, %v3472
    %v3757 = vpack.c.b16 %v3477, %v3473
    %v3758 = vpack.c.b16 %v3478, %v3474
    %v3759 = vpack.c.b16 %v3479, %v3475
    %v3760 = vpack.c.b16 %v3484, %v3480
    %v3761 = vpack.c.b16 %v3485, %v3481
    %v3762 = vpack.c.b16 %v3486, %v3482
    %v3763 = vpack.c.b16 %v3487, %v3483
    %v3764 = vpack.c.b16 %v3492, %v3488
    %v3765 = vpack.c.b16 %v3493, %v3489
    %v3766 = vpack.c.b16 %v3494, %v3490
    %v3767 = vpack.c.b16 %v3495, %v3491
    %v3768 = vpack.c.b16 %v3500, %v3496
    %v3769 = vpack.c.b16 %v3501, %v3497
    %v3770 = vpack.c.b16 %v3502, %v3498
    %v3771 = vpack.c.b16 %v3503, %v3499
    %v3772 = vpack.c.b16 %v3508, %v3504
    %v3773 = vpack.c.b16 %v3509, %v3505
    %v3774 = vpack.c.b16 %v3510, %v3506
    %v3775 = vpack.c.b16 %v3511, %v3507
    %v3776 = vpack.c.b16 %v3516, %v3512
    %v3777 = vpack.c.b16 %v3517, %v3513
    %v3778 = vpack.c.b16 %v3518, %v3514
    %v3779 = vpack.c.b16 %v3519, %v3515
    %v3780 = vpack.c.b16 %v3524, %v3520
    %v3781 = vpack.c.b16 %v3525, %v3521
    %v3782 = vpack.c.b16 %v3526, %v3522
    %v3783 = vpack.c.b16 %v3527, %v3523
    %4040 = vmatprep.subr.bf16.mxu0 %v3529
    %4041 = vmatpush1.bf16.msra.mxu0 %v3528
    %4042 = vmatprep.subr.bf16.mxu0 %v3533
    %4043 = vmatpush1.bf16.msra.mxu0 %v3532
    %4044 = vmatprep.subr.bf16.mxu0 %v3537
    %4045 = vmatpush1.bf16.msra.mxu0 %v3536
    %4046 = vmatprep.subr.bf16.mxu0 %v3541
    %4047 = vmatpush1.bf16.msra.mxu0 %v3540
    %4048 = vmatprep.subr.bf16.mxu0 %v3545
    %4049 = vmatpush1.bf16.msra.mxu0 %v3544
    %4050 = vmatprep.subr.bf16.mxu0 %v3549
    %4051 = vmatpush1.bf16.msra.mxu0 %v3548
    %4052 = vmatprep.subr.bf16.mxu0 %v3553
    %4053 = vmatpush1.bf16.msra.mxu0 %v3552
    %4054 = vmatprep.subr.bf16.mxu0 %v3557
    %4055 = vmatpush1.bf16.msra.mxu0 %v3556
    %4056 = vmatprep.subr.bf16.mxu0 %v3561
    %4057 = vmatpush1.bf16.msra.mxu0 %v3560
    %4058 = vmatprep.subr.bf16.mxu0 %v3565
    %4059 = vmatpush1.bf16.msra.mxu0 %v3564
    %4060 = vmatprep.subr.bf16.mxu0 %v3569
    %4061 = vmatpush1.bf16.msra.mxu0 %v3568
    %4062 = vmatprep.subr.bf16.mxu0 %v3573
    %4063 = vmatpush1.bf16.msra.mxu0 %v3572
    %4064 = vmatprep.subr.bf16.mxu0 %v3577
    %4065 = vmatpush1.bf16.msra.mxu0 %v3576
    %4066 = vmatprep.subr.bf16.mxu0 %v3581
    %4067 = vmatpush1.bf16.msra.mxu0 %v3580
    %4068 = vmatprep.subr.bf16.mxu0 %v3585
    %4069 = vmatpush1.bf16.msra.mxu0 %v3584
    %4070 = vmatprep.subr.bf16.mxu0 %v3589
    %4071 = vmatpush1.bf16.msra.mxu0 %v3588
    %4072 = vmatprep.mubr.bf16.mxu0 %v2475
    %4073 = vmatmul.mubr.bf16.gmra.mrb[0].mxu0 %v2474
    %v4074 = vpop.f32.mrb[0].mxu0
    %v4075 = vadd.f32 %v2743, %v4074
    %v4076 = vpop.f32.mrb[0].mxu0
    %v4077 = vadd.f32 %v2747, %v4076
    %v4078 = vpop.f32.mrb[0].mxu0
    %v4079 = vpop.f32.mrb[0].mxu0
    %4080 = vdwg.mxu0
    %4081 = vmatprep.subr.bf16.mxu0 %v3593
    %4082 = vmatpush1.bf16.msra.mxu0 %v3592
    %4083 = vmatprep.subr.bf16.mxu0 %v3597
    %4084 = vmatpush1.bf16.msra.mxu0 %v3596
    %4085 = vmatprep.subr.bf16.mxu0 %v3601
    %4086 = vmatpush1.bf16.msra.mxu0 %v3600
    %4087 = vmatprep.subr.bf16.mxu0 %v3605
    %4088 = vmatpush1.bf16.msra.mxu0 %v3604
    %4089 = vmatprep.subr.bf16.mxu0 %v3609
    %4090 = vmatpush1.bf16.msra.mxu0 %v3608
    %4091 = vmatprep.subr.bf16.mxu0 %v3613
    %4092 = vmatpush1.bf16.msra.mxu0 %v3612
    %4093 = vmatprep.subr.bf16.mxu0 %v3617
    %4094 = vmatpush1.bf16.msra.mxu0 %v3616
    %4095 = vmatprep.subr.bf16.mxu0 %v3621
    %4096 = vmatpush1.bf16.msra.mxu0 %v3620
    %4097 = vmatprep.subr.bf16.mxu0 %v3625
    %4098 = vmatpush1.bf16.msra.mxu0 %v3624
    %4099 = vmatprep.subr.bf16.mxu0 %v3629
    %4100 = vmatpush1.bf16.msra.mxu0 %v3628
    %4101 = vmatprep.subr.bf16.mxu0 %v3633
    %4102 = vmatpush1.bf16.msra.mxu0 %v3632
    %4103 = vmatprep.subr.bf16.mxu0 %v3637
    %4104 = vmatpush1.bf16.msra.mxu0 %v3636
    %4105 = vmatprep.subr.bf16.mxu0 %v3641
    %4106 = vmatpush1.bf16.msra.mxu0 %v3640
    %4107 = vmatprep.subr.bf16.mxu0 %v3645
    %4108 = vmatpush1.bf16.msra.mxu0 %v3644
    %4109 = vmatprep.subr.bf16.mxu0 %v3649
    %4110 = vmatpush1.bf16.msra.mxu0 %v3648
    %4111 = vmatprep.subr.bf16.mxu0 %v3653
    %4112 = vmatpush1.bf16.msra.mxu0 %v3652
    %4113 = vmatprep.mubr.bf16.mxu0 %v2477
    %4114 = vmatmul.mubr.bf16.gmra.mrb[0].mxu0 %v2476
    %v4115 = vpop.f32.mrb[0].mxu0
    %v4116 = vadd.f32 %v4075, %v4115
    %v4117 = vpop.f32.mrb[0].mxu0
    %v4118 = vadd.f32 %v4077, %v4117
    %v4119 = vpop.f32.mrb[0].mxu0
    %v4120 = vpop.f32.mrb[0].mxu0
    %4121 = vdwg.mxu0
    %4122 = vmatprep.subr.bf16.mxu0 %v3657
    %4123 = vmatpush1.bf16.msra.mxu0 %v3656
    %4124 = vmatprep.subr.bf16.mxu0 %v3661
    %4125 = vmatpush1.bf16.msra.mxu0 %v3660
    %4126 = vmatprep.subr.bf16.mxu0 %v3665
    %4127 = vmatpush1.bf16.msra.mxu0 %v3664
    %4128 = vmatprep.subr.bf16.mxu0 %v3669
    %4129 = vmatpush1.bf16.msra.mxu0 %v3668
    %4130 = vmatprep.subr.bf16.mxu0 %v3673
    %4131 = vmatpush1.bf16.msra.mxu0 %v3672
    %4132 = vmatprep.subr.bf16.mxu0 %v3677
    %4133 = vmatpush1.bf16.msra.mxu0 %v3676
    %4134 = vmatprep.subr.bf16.mxu0 %v3681
    %4135 = vmatpush1.bf16.msra.mxu0 %v3680
    %4136 = vmatprep.subr.bf16.mxu0 %v3685
    %4137 = vmatpush1.bf16.msra.mxu0 %v3684
    %4138 = vmatprep.subr.bf16.mxu0 %v3689
    %4139 = vmatpush1.bf16.msra.mxu0 %v3688
    %4140 = vmatprep.subr.bf16.mxu0 %v3693
    %4141 = vmatpush1.bf16.msra.mxu0 %v3692
    %4142 = vmatprep.subr.bf16.mxu0 %v3697
    %4143 = vmatpush1.bf16.msra.mxu0 %v3696
    %4144 = vmatprep.subr.bf16.mxu0 %v3701
    %4145 = vmatpush1.bf16.msra.mxu0 %v3700
    %4146 = vmatprep.subr.bf16.mxu0 %v3705
    %4147 = vmatpush1.bf16.msra.mxu0 %v3704
    %4148 = vmatprep.subr.bf16.mxu0 %v3709
    %4149 = vmatpush1.bf16.msra.mxu0 %v3708
    %4150 = vmatprep.subr.bf16.mxu0 %v3713
    %4151 = vmatpush1.bf16.msra.mxu0 %v3712
    %4152 = vmatprep.subr.bf16.mxu0 %v3717
    %4153 = vmatpush1.bf16.msra.mxu0 %v3716
    %4154 = vmatprep.mubr.bf16.mxu0 %v2479
    %4155 = vmatmul.mubr.bf16.gmra.mrb[0].mxu0 %v2478
    %v4156 = vpop.f32.mrb[0].mxu0
    %v4157 = vadd.f32 %v4116, %v4156
    %v4158 = vpop.f32.mrb[0].mxu0
    %v4159 = vadd.f32 %v4118, %v4158
    %v4160 = vpop.f32.mrb[0].mxu0
    %v4161 = vpop.f32.mrb[0].mxu0
    %4162 = vdwg.mxu0
    %4163 = vmatprep.subr.bf16.mxu0 %v3721
    %4164 = vmatpush1.bf16.msra.mxu0 %v3720
    %4165 = vmatprep.subr.bf16.mxu0 %v3725
    %4166 = vmatpush1.bf16.msra.mxu0 %v3724
    %4167 = vmatprep.subr.bf16.mxu0 %v3729
    %4168 = vmatpush1.bf16.msra.mxu0 %v3728
    %4169 = vmatprep.subr.bf16.mxu0 %v3733
    %4170 = vmatpush1.bf16.msra.mxu0 %v3732
    %4171 = vmatprep.subr.bf16.mxu0 %v3737
    %4172 = vmatpush1.bf16.msra.mxu0 %v3736
    %4173 = vmatprep.subr.bf16.mxu0 %v3741
    %4174 = vmatpush1.bf16.msra.mxu0 %v3740
    %4175 = vmatprep.subr.bf16.mxu0 %v3745
    %4176 = vmatpush1.bf16.msra.mxu0 %v3744
    %4177 = vmatprep.subr.bf16.mxu0 %v3749
    %4178 = vmatpush1.bf16.msra.mxu0 %v3748
    %4179 = vmatprep.subr.bf16.mxu0 %v3753
    %4180 = vmatpush1.bf16.msra.mxu0 %v3752
    %4181 = vmatprep.subr.bf16.mxu0 %v3757
    %4182 = vmatpush1.bf16.msra.mxu0 %v3756
    %4183 = vmatprep.subr.bf16.mxu0 %v3761
    %4184 = vmatpush1.bf16.msra.mxu0 %v3760
    %4185 = vmatprep.subr.bf16.mxu0 %v3765
    %4186 = vmatpush1.bf16.msra.mxu0 %v3764
    %4187 = vmatprep.subr.bf16.mxu0 %v3769
    %4188 = vmatpush1.bf16.msra.mxu0 %v3768
    %4189 = vmatprep.subr.bf16.mxu0 %v3773
    %4190 = vmatpush1.bf16.msra.mxu0 %v3772
    %4191 = vmatprep.subr.bf16.mxu0 %v3777
    %4192 = vmatpush1.bf16.msra.mxu0 %v3776
    %4193 = vmatprep.subr.bf16.mxu0 %v3781
    %4194 = vmatpush1.bf16.msra.mxu0 %v3780
    %4195 = vmatprep.mubr.bf16.mxu0 %v2481
    %4196 = vmatmul.mubr.bf16.gmra.mrb[0].mxu0 %v2480
    %v4197 = vpop.f32.mrb[0].mxu0
    %v4198 = vadd.f32 %v4157, %v4197
    %v4199 = vpop.f32.mrb[0].mxu0
    %v4200 = vadd.f32 %v4159, %v4199
    %v4201 = vpop.f32.mrb[0].mxu0
    %v4202 = vpop.f32.mrb[0].mxu0
    %4203 = vdwg.mxu0
    %4204 = vmatprep.subr.bf16.mxu0 %v3531
    %4205 = vmatpush1.bf16.msra.mxu0 %v3530
    %4206 = vmatprep.subr.bf16.mxu0 %v3535
    %4207 = vmatpush1.bf16.msra.mxu0 %v3534
    %4208 = vmatprep.subr.bf16.mxu0 %v3539
    %4209 = vmatpush1.bf16.msra.mxu0 %v3538
    %4210 = vmatprep.subr.bf16.mxu0 %v3543
    %4211 = vmatpush1.bf16.msra.mxu0 %v3542
    %4212 = vmatprep.subr.bf16.mxu0 %v3547
    %4213 = vmatpush1.bf16.msra.mxu0 %v3546
    %4214 = vmatprep.subr.bf16.mxu0 %v3551
    %4215 = vmatpush1.bf16.msra.mxu0 %v3550
    %4216 = vmatprep.subr.bf16.mxu0 %v3555
    %4217 = vmatpush1.bf16.msra.mxu0 %v3554
    %4218 = vmatprep.subr.bf16.mxu0 %v3559
    %4219 = vmatpush1.bf16.msra.mxu0 %v3558
    %4220 = vmatprep.subr.bf16.mxu0 %v3563
    %4221 = vmatpush1.bf16.msra.mxu0 %v3562
    %4222 = vmatprep.subr.bf16.mxu0 %v3567
    %4223 = vmatpush1.bf16.msra.mxu0 %v3566
    %4224 = vmatprep.subr.bf16.mxu0 %v3571
    %4225 = vmatpush1.bf16.msra.mxu0 %v3570
    %4226 = vmatprep.subr.bf16.mxu0 %v3575
    %4227 = vmatpush1.bf16.msra.mxu0 %v3574
    %4228 = vmatprep.subr.bf16.mxu0 %v3579
    %4229 = vmatpush1.bf16.msra.mxu0 %v3578
    %4230 = vmatprep.subr.bf16.mxu0 %v3583
    %4231 = vmatpush1.bf16.msra.mxu0 %v3582
    %4232 = vmatprep.subr.bf16.mxu0 %v3587
    %4233 = vmatpush1.bf16.msra.mxu0 %v3586
    %4234 = vmatprep.subr.bf16.mxu0 %v3591
    %4235 = vmatpush1.bf16.msra.mxu0 %v3590
    %4236 = vmatprep.mubr.bf16.mxu0 %v2475
    %4237 = vmatmul.mubr.bf16.gmra.mrb[0].mxu0 %v2474
    %v4238 = vpop.f32.mrb[0].mxu0
    %v4239 = vadd.f32 %v2751, %v4238
    %v4240 = vpop.f32.mrb[0].mxu0
    %v4241 = vadd.f32 %v2755, %v4240
    %v4242 = vpop.f32.mrb[0].mxu0
    %v4243 = vpop.f32.mrb[0].mxu0
    %4244 = vdwg.mxu0
    %4245 = vmatprep.subr.bf16.mxu0 %v3595
    %4246 = vmatpush1.bf16.msra.mxu0 %v3594
    %4247 = vmatprep.subr.bf16.mxu0 %v3599
    %4248 = vmatpush1.bf16.msra.mxu0 %v3598
    %4249 = vmatprep.subr.bf16.mxu0 %v3603
    %4250 = vmatpush1.bf16.msra.mxu0 %v3602
    %4251 = vmatprep.subr.bf16.mxu0 %v3607
    %4252 = vmatpush1.bf16.msra.mxu0 %v3606
    %4253 = vmatprep.subr.bf16.mxu0 %v3611
    %4254 = vmatpush1.bf16.msra.mxu0 %v3610
    %4255 = vmatprep.subr.bf16.mxu0 %v3615
    %4256 = vmatpush1.bf16.msra.mxu0 %v3614
    %4257 = vmatprep.subr.bf16.mxu0 %v3619
    %4258 = vmatpush1.bf16.msra.mxu0 %v3618
    %4259 = vmatprep.subr.bf16.mxu0 %v3623
    %4260 = vmatpush1.bf16.msra.mxu0 %v3622
    %4261 = vmatprep.subr.bf16.mxu0 %v3627
    %4262 = vmatpush1.bf16.msra.mxu0 %v3626
    %4263 = vmatprep.subr.bf16.mxu0 %v3631
    %4264 = vmatpush1.bf16.msra.mxu0 %v3630
    %4265 = vmatprep.subr.bf16.mxu0 %v3635
    %4266 = vmatpush1.bf16.msra.mxu0 %v3634
    %4267 = vmatprep.subr.bf16.mxu0 %v3639
    %4268 = vmatpush1.bf16.msra.mxu0 %v3638
    %4269 = vmatprep.subr.bf16.mxu0 %v3643
    %4270 = vmatpush1.bf16.msra.mxu0 %v3642
    %4271 = vmatprep.subr.bf16.mxu0 %v3647
    %4272 = vmatpush1.bf16.msra.mxu0 %v3646
    %4273 = vmatprep.subr.bf16.mxu0 %v3651
    %4274 = vmatpush1.bf16.msra.mxu0 %v3650
    %4275 = vmatprep.subr.bf16.mxu0 %v3655
    %4276 = vmatpush1.bf16.msra.mxu0 %v3654
    %4277 = vmatprep.mubr.bf16.mxu0 %v2477
    %4278 = vmatmul.mubr.bf16.gmra.mrb[0].mxu0 %v2476
    %v4279 = vpop.f32.mrb[0].mxu0
    %v4280 = vadd.f32 %v4239, %v4279
    %v4281 = vpop.f32.mrb[0].mxu0
    %v4282 = vadd.f32 %v4241, %v4281
    %v4283 = vpop.f32.mrb[0].mxu0
    %v4284 = vpop.f32.mrb[0].mxu0
    %4285 = vdwg.mxu0
    %4286 = vmatprep.subr.bf16.mxu0 %v3659
    %4287 = vmatpush1.bf16.msra.mxu0 %v3658
    %4288 = vmatprep.subr.bf16.mxu0 %v3663
    %4289 = vmatpush1.bf16.msra.mxu0 %v3662
    %4290 = vmatprep.subr.bf16.mxu0 %v3667
    %4291 = vmatpush1.bf16.msra.mxu0 %v3666
    %4292 = vmatprep.subr.bf16.mxu0 %v3671
    %4293 = vmatpush1.bf16.msra.mxu0 %v3670
    %4294 = vmatprep.subr.bf16.mxu0 %v3675
    %4295 = vmatpush1.bf16.msra.mxu0 %v3674
    %4296 = vmatprep.subr.bf16.mxu0 %v3679
    %4297 = vmatpush1.bf16.msra.mxu0 %v3678
    %4298 = vmatprep.subr.bf16.mxu0 %v3683
    %4299 = vmatpush1.bf16.msra.mxu0 %v3682
    %4300 = vmatprep.subr.bf16.mxu0 %v3687
    %4301 = vmatpush1.bf16.msra.mxu0 %v3686
    %4302 = vmatprep.subr.bf16.mxu0 %v3691
    %4303 = vmatpush1.bf16.msra.mxu0 %v3690
    %4304 = vmatprep.subr.bf16.mxu0 %v3695
    %4305 = vmatpush1.bf16.msra.mxu0 %v3694
    %4306 = vmatprep.subr.bf16.mxu0 %v3699
    %4307 = vmatpush1.bf16.msra.mxu0 %v3698
    %4308 = vmatprep.subr.bf16.mxu0 %v3703
    %4309 = vmatpush1.bf16.msra.mxu0 %v3702
    %4310 = vmatprep.subr.bf16.mxu0 %v3707
    %4311 = vmatpush1.bf16.msra.mxu0 %v3706
    %4312 = vmatprep.subr.bf16.mxu0 %v3711
    %4313 = vmatpush1.bf16.msra.mxu0 %v3710
    %4314 = vmatprep.subr.bf16.mxu0 %v3715
    %4315 = vmatpush1.bf16.msra.mxu0 %v3714
    %4316 = vmatprep.subr.bf16.mxu0 %v3719
    %4317 = vmatpush1.bf16.msra.mxu0 %v3718
    %4318 = vmatprep.mubr.bf16.mxu0 %v2479
    %4319 = vmatmul.mubr.bf16.gmra.mrb[0].mxu0 %v2478
    %v4320 = vpop.f32.mrb[0].mxu0
    %v4321 = vadd.f32 %v4280, %v4320
    %v4322 = vpop.f32.mrb[0].mxu0
    %v4323 = vadd.f32 %v4282, %v4322
    %v4324 = vpop.f32.mrb[0].mxu0
    %v4325 = vpop.f32.mrb[0].mxu0
    %4326 = vdwg.mxu0
    %4327 = vmatprep.subr.bf16.mxu0 %v3723
    %4328 = vmatpush1.bf16.msra.mxu0 %v3722
    %4329 = vmatprep.subr.bf16.mxu0 %v3727
    %4330 = vmatpush1.bf16.msra.mxu0 %v3726
    %4331 = vmatprep.subr.bf16.mxu0 %v3731
    %4332 = vmatpush1.bf16.msra.mxu0 %v3730
    %4333 = vmatprep.subr.bf16.mxu0 %v3735
    %4334 = vmatpush1.bf16.msra.mxu0 %v3734
    %4335 = vmatprep.subr.bf16.mxu0 %v3739
    %4336 = vmatpush1.bf16.msra.mxu0 %v3738
    %4337 = vmatprep.subr.bf16.mxu0 %v3743
    %4338 = vmatpush1.bf16.msra.mxu0 %v3742
    %4339 = vmatprep.subr.bf16.mxu0 %v3747
    %4340 = vmatpush1.bf16.msra.mxu0 %v3746
    %4341 = vmatprep.subr.bf16.mxu0 %v3751
    %4342 = vmatpush1.bf16.msra.mxu0 %v3750
    %4343 = vmatprep.subr.bf16.mxu0 %v3755
    %4344 = vmatpush1.bf16.msra.mxu0 %v3754
    %4345 = vmatprep.subr.bf16.mxu0 %v3759
    %4346 = vmatpush1.bf16.msra.mxu0 %v3758
    %4347 = vmatprep.subr.bf16.mxu0 %v3763
    %4348 = vmatpush1.bf16.msra.mxu0 %v3762
    %4349 = vmatprep.subr.bf16.mxu0 %v3767
    %4350 = vmatpush1.bf16.msra.mxu0 %v3766
    %4351 = vmatprep.subr.bf16.mxu0 %v3771
    %4352 = vmatpush1.bf16.msra.mxu0 %v3770
    %4353 = vmatprep.subr.bf16.mxu0 %v3775
    %4354 = vmatpush1.bf16.msra.mxu0 %v3774
    %4355 = vmatprep.subr.bf16.mxu0 %v3779
    %4356 = vmatpush1.bf16.msra.mxu0 %v3778
    %4357 = vmatprep.subr.bf16.mxu0 %v3783
    %4358 = vmatpush1.bf16.msra.mxu0 %v3782
    %4359 = vmatprep.mubr.bf16.mxu0 %v2481
    %4360 = vmatmul.mubr.bf16.gmra.mrb[0].mxu0 %v2480
    %v4361 = vpop.f32.mrb[0].mxu0
    %v4362 = vadd.f32 %v4321, %v4361
    %v4363 = vpop.f32.mrb[0].mxu0
    %v4364 = vadd.f32 %v4323, %v4363
    %v4365 = vpop.f32.mrb[0].mxu0
    %v4366 = vpop.f32.mrb[0].mxu0
    %4367 = vdwg.mxu0
    %v4368 = vmax.f32 %v4198, 0.0
    %v4369 = vmax.f32 %v4200, 0.0
    %v4370 = vmax.f32 %v4362, 0.0
    %v4371 = vmax.f32 %v4364, 0.0
    %v4372 = vpack.c.bf16 %v4368, %v4368
    %v4373 = vpack.c.bf16 %v4369, %v4369
    %v4374 = vpack.c.bf16 %v4370, %v4370
    %v4375 = vpack.c.bf16 %v4371, %v4371
    %v4376 = vld [vmem:[#allocation10] sm:$0xff]
    %v4377 = vld [vmem:[#allocation10 + $0x8] sm:$0xff]
    %v4378 = vld [vmem:[#allocation10 + $0x10] sm:$0xff]
    %v4379 = vld [vmem:[#allocation10 + $0x18] sm:$0xff]
    %v4380 = vld [vmem:[#allocation10 + $0x20] sm:$0xff]
    %v4381 = vld [vmem:[#allocation10 + $0x28] sm:$0xff]
    %v4382 = vld [vmem:[#allocation10 + $0x30] sm:$0xff]
    %v4383 = vld [vmem:[#allocation10 + $0x38] sm:$0xff]
    %v4384 = vld [vmem:[#allocation10 + $0x40] sm:$0xff]
    %v4385 = vld [vmem:[#allocation10 + $0x48] sm:$0xff]
    %v4386 = vld [vmem:[#allocation10 + $0x50] sm:$0xff]
    %v4387 = vld [vmem:[#allocation10 + $0x58] sm:$0xff]
    %v4388 = vld [vmem:[#allocation10 + $0x60] sm:$0xff]
    %v4389 = vld [vmem:[#allocation10 + $0x68] sm:$0xff]
    %v4390 = vld [vmem:[#allocation10 + $0x70] sm:$0xff]
    %v4391 = vld [vmem:[#allocation10 + $0x78] sm:$0xff]
    %v4392 = vld [vmem:[#allocation10 + $0x80] sm:$0xff]
    %v4393 = vld [vmem:[#allocation10 + $0x88] sm:$0xff]
    %v4394 = vld [vmem:[#allocation10 + $0x90] sm:$0xff]
    %v4395 = vld [vmem:[#allocation10 + $0x98] sm:$0xff]
    %v4396 = vld [vmem:[#allocation10 + $0xa0] sm:$0xff]
    %v4397 = vld [vmem:[#allocation10 + $0xa8] sm:$0xff]
    %v4398 = vld [vmem:[#allocation10 + $0xb0] sm:$0xff]
    %v4399 = vld [vmem:[#allocation10 + $0xb8] sm:$0xff]
    %v4400 = vld [vmem:[#allocation10 + $0xc0] sm:$0xff]
    %v4401 = vld [vmem:[#allocation10 + $0xc8] sm:$0xff]
    %v4402 = vld [vmem:[#allocation10 + $0xd0] sm:$0xff]
    %v4403 = vld [vmem:[#allocation10 + $0xd8] sm:$0xff]
    %v4404 = vld [vmem:[#allocation10 + $0xe0] sm:$0xff]
    %v4405 = vld [vmem:[#allocation10 + $0xe8] sm:$0xff]
    %v4406 = vld [vmem:[#allocation10 + $0xf0] sm:$0xff]
    %v4407 = vld [vmem:[#allocation10 + $0xf8] sm:$0xff]
    %v4408 = vld [vmem:[#allocation10 + $0x100] sm:$0xff]
    %v4409 = vld [vmem:[#allocation10 + $0x108] sm:$0xff]
    %v4410 = vld [vmem:[#allocation10 + $0x110] sm:$0xff]
    %v4411 = vld [vmem:[#allocation10 + $0x118] sm:$0xff]
    %v4412 = vld [vmem:[#allocation10 + $0x120] sm:$0xff]
    %v4413 = vld [vmem:[#allocation10 + $0x128] sm:$0xff]
    %v4414 = vld [vmem:[#allocation10 + $0x130] sm:$0xff]
    %v4415 = vld [vmem:[#allocation10 + $0x138] sm:$0xff]
    %v4416 = vld [vmem:[#allocation10 + $0x140] sm:$0xff]
    %v4417 = vld [vmem:[#allocation10 + $0x148] sm:$0xff]
    %v4418 = vld [vmem:[#allocation10 + $0x150] sm:$0xff]
    %v4419 = vld [vmem:[#allocation10 + $0x158] sm:$0xff]
    %v4420 = vld [vmem:[#allocation10 + $0x160] sm:$0xff]
    %v4421 = vld [vmem:[#allocation10 + $0x168] sm:$0xff]
    %v4422 = vld [vmem:[#allocation10 + $0x170] sm:$0xff]
    %v4423 = vld [vmem:[#allocation10 + $0x178] sm:$0xff]
    %v4424 = vld [vmem:[#allocation10 + $0x180] sm:$0xff]
    %v4425 = vld [vmem:[#allocation10 + $0x188] sm:$0xff]
    %v4426 = vld [vmem:[#allocation10 + $0x190] sm:$0xff]
    %v4427 = vld [vmem:[#allocation10 + $0x198] sm:$0xff]
    %v4428 = vld [vmem:[#allocation10 + $0x1a0] sm:$0xff]
    %v4429 = vld [vmem:[#allocation10 + $0x1a8] sm:$0xff]
    %v4430 = vld [vmem:[#allocation10 + $0x1b0] sm:$0xff]
    %v4431 = vld [vmem:[#allocation10 + $0x1b8] sm:$0xff]
    %v4432 = vld [vmem:[#allocation10 + $0x1c0] sm:$0xff]
    %v4433 = vld [vmem:[#allocation10 + $0x1c8] sm:$0xff]
    %v4434 = vld [vmem:[#allocation10 + $0x1d0] sm:$0xff]
    %v4435 = vld [vmem:[#allocation10 + $0x1d8] sm:$0xff]
    %v4436 = vld [vmem:[#allocation10 + $0x1e0] sm:$0xff]
    %v4437 = vld [vmem:[#allocation10 + $0x1e8] sm:$0xff]
    %v4438 = vld [vmem:[#allocation10 + $0x1f0] sm:$0xff]
    %v4439 = vld [vmem:[#allocation10 + $0x1f8] sm:$0xff]
    %v4440 = vld [vmem:[%s12] sm:$0x3]
    %v4442 = vlaneseq
    %v4443 = vshrl.u32 %v4442, 7
    %v4444 = vsub.s32 0, %v4443
    %v4445 = vrot.slane %v4440, %v4444
    %v4446 = vlaneseq
    %v4447 = vshrl.u32 %v4446, 7
    %v4448 = vsub.s32 1, %v4447
    %v4449 = vrot.slane %v4440, %v4448
    %v4516 = vunpack.c.l.b16 %v4376
    %v4517 = vunpack.c.h.b16 %v4376
    %v4518 = vunpack.c.l.b16 %v4377
    %v4519 = vunpack.c.h.b16 %v4377
    %v4520 = vunpack.c.l.b16 %v4378
    %v4521 = vunpack.c.h.b16 %v4378
    %v4522 = vunpack.c.l.b16 %v4379
    %v4523 = vunpack.c.h.b16 %v4379
    %v4524 = vunpack.c.l.b16 %v4380
    %v4525 = vunpack.c.h.b16 %v4380
    %v4526 = vunpack.c.l.b16 %v4381
    %v4527 = vunpack.c.h.b16 %v4381
    %v4528 = vunpack.c.l.b16 %v4382
    %v4529 = vunpack.c.h.b16 %v4382
    %v4530 = vunpack.c.l.b16 %v4383
    %v4531 = vunpack.c.h.b16 %v4383
    %v4532 = vunpack.c.l.b16 %v4384
    %v4533 = vunpack.c.h.b16 %v4384
    %v4534 = vunpack.c.l.b16 %v4385
    %v4535 = vunpack.c.h.b16 %v4385
    %v4536 = vunpack.c.l.b16 %v4386
    %v4537 = vunpack.c.h.b16 %v4386
    %v4538 = vunpack.c.l.b16 %v4387
    %v4539 = vunpack.c.h.b16 %v4387
    %v4540 = vunpack.c.l.b16 %v4388
    %v4541 = vunpack.c.h.b16 %v4388
    %v4542 = vunpack.c.l.b16 %v4389
    %v4543 = vunpack.c.h.b16 %v4389
    %v4544 = vunpack.c.l.b16 %v4390
    %v4545 = vunpack.c.h.b16 %v4390
    %v4546 = vunpack.c.l.b16 %v4391
    %v4547 = vunpack.c.h.b16 %v4391
    %v4548 = vunpack.c.l.b16 %v4392
    %v4549 = vunpack.c.h.b16 %v4392
    %v4550 = vunpack.c.l.b16 %v4393
    %v4551 = vunpack.c.h.b16 %v4393
    %v4552 = vunpack.c.l.b16 %v4394
    %v4553 = vunpack.c.h.b16 %v4394
    %v4554 = vunpack.c.l.b16 %v4395
    %v4555 = vunpack.c.h.b16 %v4395
    %v4556 = vunpack.c.l.b16 %v4396
    %v4557 = vunpack.c.h.b16 %v4396
    %v4558 = vunpack.c.l.b16 %v4397
    %v4559 = vunpack.c.h.b16 %v4397
    %v4560 = vunpack.c.l.b16 %v4398
    %v4561 = vunpack.c.h.b16 %v4398
    %v4562 = vunpack.c.l.b16 %v4399
    %v4563 = vunpack.c.h.b16 %v4399
    %v4564 = vunpack.c.l.b16 %v4400
    %v4565 = vunpack.c.h.b16 %v4400
    %v4566 = vunpack.c.l.b16 %v4401
    %v4567 = vunpack.c.h.b16 %v4401
    %v4568 = vunpack.c.l.b16 %v4402
    %v4569 = vunpack.c.h.b16 %v4402
    %v4570 = vunpack.c.l.b16 %v4403
    %v4571 = vunpack.c.h.b16 %v4403
    %v4572 = vunpack.c.l.b16 %v4404
    %v4573 = vunpack.c.h.b16 %v4404
    %v4574 = vunpack.c.l.b16 %v4405
    %v4575 = vunpack.c.h.b16 %v4405
    %v4576 = vunpack.c.l.b16 %v4406
    %v4577 = vunpack.c.h.b16 %v4406
    %v4578 = vunpack.c.l.b16 %v4407
    %v4579 = vunpack.c.h.b16 %v4407
    %v4580 = vunpack.c.l.b16 %v4408
    %v4581 = vunpack.c.h.b16 %v4408
    %v4582 = vunpack.c.l.b16 %v4409
    %v4583 = vunpack.c.h.b16 %v4409
    %v4584 = vunpack.c.l.b16 %v4410
    %v4585 = vunpack.c.h.b16 %v4410
    %v4586 = vunpack.c.l.b16 %v4411
    %v4587 = vunpack.c.h.b16 %v4411
    %v4588 = vunpack.c.l.b16 %v4412
    %v4589 = vunpack.c.h.b16 %v4412
    %v4590 = vunpack.c.l.b16 %v4413
    %v4591 = vunpack.c.h.b16 %v4413
    %v4592 = vunpack.c.l.b16 %v4414
    %v4593 = vunpack.c.h.b16 %v4414
    %v4594 = vunpack.c.l.b16 %v4415
    %v4595 = vunpack.c.h.b16 %v4415
    %v4596 = vunpack.c.l.b16 %v4416
    %v4597 = vunpack.c.h.b16 %v4416
    %v4598 = vunpack.c.l.b16 %v4417
    %v4599 = vunpack.c.h.b16 %v4417
    %v4600 = vunpack.c.l.b16 %v4418
    %v4601 = vunpack.c.h.b16 %v4418
    %v4602 = vunpack.c.l.b16 %v4419
    %v4603 = vunpack.c.h.b16 %v4419
    %v4604 = vunpack.c.l.b16 %v4420
    %v4605 = vunpack.c.h.b16 %v4420
    %v4606 = vunpack.c.l.b16 %v4421
    %v4607 = vunpack.c.h.b16 %v4421
    %v4608 = vunpack.c.l.b16 %v4422
    %v4609 = vunpack.c.h.b16 %v4422
    %v4610 = vunpack.c.l.b16 %v4423
    %v4611 = vunpack.c.h.b16 %v4423
    %v4612 = vunpack.c.l.b16 %v4424
    %v4613 = vunpack.c.h.b16 %v4424
    %v4614 = vunpack.c.l.b16 %v4425
    %v4615 = vunpack.c.h.b16 %v4425
    %v4616 = vunpack.c.l.b16 %v4426
    %v4617 = vunpack.c.h.b16 %v4426
    %v4618 = vunpack.c.l.b16 %v4427
    %v4619 = vunpack.c.h.b16 %v4427
    %v4620 = vunpack.c.l.b16 %v4428
    %v4621 = vunpack.c.h.b16 %v4428
    %v4622 = vunpack.c.l.b16 %v4429
    %v4623 = vunpack.c.h.b16 %v4429
    %v4624 = vunpack.c.l.b16 %v4430
    %v4625 = vunpack.c.h.b16 %v4430
    %v4626 = vunpack.c.l.b16 %v4431
    %v4627 = vunpack.c.h.b16 %v4431
    %v4628 = vunpack.c.l.b16 %v4432
    %v4629 = vunpack.c.h.b16 %v4432
    %v4630 = vunpack.c.l.b16 %v4433
    %v4631 = vunpack.c.h.b16 %v4433
    %v4632 = vunpack.c.l.b16 %v4434
    %v4633 = vunpack.c.h.b16 %v4434
    %v4634 = vunpack.c.l.b16 %v4435
    %v4635 = vunpack.c.h.b16 %v4435
    %v4636 = vunpack.c.l.b16 %v4436
    %v4637 = vunpack.c.h.b16 %v4436
    %v4638 = vunpack.c.l.b16 %v4437
    %v4639 = vunpack.c.h.b16 %v4437
    %v4640 = vunpack.c.l.b16 %v4438
    %v4641 = vunpack.c.h.b16 %v4438
    %v4642 = vunpack.c.l.b16 %v4439
    %v4643 = vunpack.c.h.b16 %v4439
    %v4644 = vpack.c.b16 %v4518, %v4516
    %v4645 = vpack.c.b16 %v4519, %v4517
    %v4646 = vpack.c.b16 %v4522, %v4520
    %v4647 = vpack.c.b16 %v4523, %v4521
    %v4648 = vpack.c.b16 %v4526, %v4524
    %v4649 = vpack.c.b16 %v4527, %v4525
    %v4650 = vpack.c.b16 %v4530, %v4528
    %v4651 = vpack.c.b16 %v4531, %v4529
    %v4652 = vpack.c.b16 %v4534, %v4532
    %v4653 = vpack.c.b16 %v4535, %v4533
    %v4654 = vpack.c.b16 %v4538, %v4536
    %v4655 = vpack.c.b16 %v4539, %v4537
    %v4656 = vpack.c.b16 %v4542, %v4540
    %v4657 = vpack.c.b16 %v4543, %v4541
    %v4658 = vpack.c.b16 %v4546, %v4544
    %v4659 = vpack.c.b16 %v4547, %v4545
    %v4660 = vpack.c.b16 %v4550, %v4548
    %v4661 = vpack.c.b16 %v4551, %v4549
    %v4662 = vpack.c.b16 %v4554, %v4552
    %v4663 = vpack.c.b16 %v4555, %v4553
    %v4664 = vpack.c.b16 %v4558, %v4556
    %v4665 = vpack.c.b16 %v4559, %v4557
    %v4666 = vpack.c.b16 %v4562, %v4560
    %v4667 = vpack.c.b16 %v4563, %v4561
    %v4668 = vpack.c.b16 %v4566, %v4564
    %v4669 = vpack.c.b16 %v4567, %v4565
    %v4670 = vpack.c.b16 %v4570, %v4568
    %v4671 = vpack.c.b16 %v4571, %v4569
    %v4672 = vpack.c.b16 %v4574, %v4572
    %v4673 = vpack.c.b16 %v4575, %v4573
    %v4674 = vpack.c.b16 %v4578, %v4576
    %v4675 = vpack.c.b16 %v4579, %v4577
    %v4676 = vpack.c.b16 %v4582, %v4580
    %v4677 = vpack.c.b16 %v4583, %v4581
    %v4678 = vpack.c.b16 %v4586, %v4584
    %v4679 = vpack.c.b16 %v4587, %v4585
    %v4680 = vpack.c.b16 %v4590, %v4588
    %v4681 = vpack.c.b16 %v4591, %v4589
    %v4682 = vpack.c.b16 %v4594, %v4592
    %v4683 = vpack.c.b16 %v4595, %v4593
    %v4684 = vpack.c.b16 %v4598, %v4596
    %v4685 = vpack.c.b16 %v4599, %v4597
    %v4686 = vpack.c.b16 %v4602, %v4600
    %v4687 = vpack.c.b16 %v4603, %v4601
    %v4688 = vpack.c.b16 %v4606, %v4604
    %v4689 = vpack.c.b16 %v4607, %v4605
    %v4690 = vpack.c.b16 %v4610, %v4608
    %v4691 = vpack.c.b16 %v4611, %v4609
    %v4692 = vpack.c.b16 %v4614, %v4612
    %v4693 = vpack.c.b16 %v4615, %v4613
    %v4694 = vpack.c.b16 %v4618, %v4616
    %v4695 = vpack.c.b16 %v4619, %v4617
    %v4696 = vpack.c.b16 %v4622, %v4620
    %v4697 = vpack.c.b16 %v4623, %v4621
    %v4698 = vpack.c.b16 %v4626, %v4624
    %v4699 = vpack.c.b16 %v4627, %v4625
    %v4700 = vpack.c.b16 %v4630, %v4628
    %v4701 = vpack.c.b16 %v4631, %v4629
    %v4702 = vpack.c.b16 %v4634, %v4632
    %v4703 = vpack.c.b16 %v4635, %v4633
    %v4704 = vpack.c.b16 %v4638, %v4636
    %v4705 = vpack.c.b16 %v4639, %v4637
    %v4706 = vpack.c.b16 %v4642, %v4640
    %v4707 = vpack.c.b16 %v4643, %v4641
    %4772 = vmatprep.subr.bf16.mxu0 %v4645
    %4773 = vmatpush1.bf16.msra.mxu0 %v4644
    %4774 = vmatprep.subr.bf16.mxu0 %v4647
    %4775 = vmatpush1.bf16.msra.mxu0 %v4646
    %4776 = vmatprep.subr.bf16.mxu0 %v4649
    %4777 = vmatpush1.bf16.msra.mxu0 %v4648
    %4778 = vmatprep.subr.bf16.mxu0 %v4651
    %4779 = vmatpush1.bf16.msra.mxu0 %v4650
    %4780 = vmatprep.subr.bf16.mxu0 %v4653
    %4781 = vmatpush1.bf16.msra.mxu0 %v4652
    %4782 = vmatprep.subr.bf16.mxu0 %v4655
    %4783 = vmatpush1.bf16.msra.mxu0 %v4654
    %4784 = vmatprep.subr.bf16.mxu0 %v4657
    %4785 = vmatpush1.bf16.msra.mxu0 %v4656
    %4786 = vmatprep.subr.bf16.mxu0 %v4659
    %4787 = vmatpush1.bf16.msra.mxu0 %v4658
    %4788 = vmatprep.subr.bf16.mxu0 %v4661
    %4789 = vmatpush1.bf16.msra.mxu0 %v4660
    %4790 = vmatprep.subr.bf16.mxu0 %v4663
    %4791 = vmatpush1.bf16.msra.mxu0 %v4662
    %4792 = vmatprep.subr.bf16.mxu0 %v4665
    %4793 = vmatpush1.bf16.msra.mxu0 %v4664
    %4794 = vmatprep.subr.bf16.mxu0 %v4667
    %4795 = vmatpush1.bf16.msra.mxu0 %v4666
    %4796 = vmatprep.subr.bf16.mxu0 %v4669
    %4797 = vmatpush1.bf16.msra.mxu0 %v4668
    %4798 = vmatprep.subr.bf16.mxu0 %v4671
    %4799 = vmatpush1.bf16.msra.mxu0 %v4670
    %4800 = vmatprep.subr.bf16.mxu0 %v4673
    %4801 = vmatpush1.bf16.msra.mxu0 %v4672
    %4802 = vmatprep.subr.bf16.mxu0 %v4675
    %4803 = vmatpush1.bf16.msra.mxu0 %v4674
    %4804 = vmatprep.mubr.bf16.mxu0 %v4373
    %4805 = vmatmul.mubr.bf16.gmra.mrb[0].mxu0 %v4372
    %v4806 = vpop.f32.mrb[0].mxu0
    %v4807 = vadd.f32 %v4445, %v4806
    %v4808 = vpop.f32.mrb[0].mxu0
    %v4809 = vadd.f32 %v4449, %v4808
    %v4810 = vpop.f32.mrb[0].mxu0
    %v4811 = vpop.f32.mrb[0].mxu0
    %4812 = vdwg.mxu0
    %4813 = vmatprep.subr.bf16.mxu0 %v4677
    %4814 = vmatpush1.bf16.msra.mxu0 %v4676
    %4815 = vmatprep.subr.bf16.mxu0 %v4679
    %4816 = vmatpush1.bf16.msra.mxu0 %v4678
    %4817 = vmatprep.subr.bf16.mxu0 %v4681
    %4818 = vmatpush1.bf16.msra.mxu0 %v4680
    %4819 = vmatprep.subr.bf16.mxu0 %v4683
    %4820 = vmatpush1.bf16.msra.mxu0 %v4682
    %4821 = vmatprep.subr.bf16.mxu0 %v4685
    %4822 = vmatpush1.bf16.msra.mxu0 %v4684
    %4823 = vmatprep.subr.bf16.mxu0 %v4687
    %4824 = vmatpush1.bf16.msra.mxu0 %v4686
    %4825 = vmatprep.subr.bf16.mxu0 %v4689
    %4826 = vmatpush1.bf16.msra.mxu0 %v4688
    %4827 = vmatprep.subr.bf16.mxu0 %v4691
    %4828 = vmatpush1.bf16.msra.mxu0 %v4690
    %4829 = vmatprep.subr.bf16.mxu0 %v4693
    %4830 = vmatpush1.bf16.msra.mxu0 %v4692
    %4831 = vmatprep.subr.bf16.mxu0 %v4695
    %4832 = vmatpush1.bf16.msra.mxu0 %v4694
    %4833 = vmatprep.subr.bf16.mxu0 %v4697
    %4834 = vmatpush1.bf16.msra.mxu0 %v4696
    %4835 = vmatprep.subr.bf16.mxu0 %v4699
    %4836 = vmatpush1.bf16.msra.mxu0 %v4698
    %4837 = vmatprep.subr.bf16.mxu0 %v4701
    %4838 = vmatpush1.bf16.msra.mxu0 %v4700
    %4839 = vmatprep.subr.bf16.mxu0 %v4703
    %4840 = vmatpush1.bf16.msra.mxu0 %v4702
    %4841 = vmatprep.subr.bf16.mxu0 %v4705
    %4842 = vmatpush1.bf16.msra.mxu0 %v4704
    %4843 = vmatprep.subr.bf16.mxu0 %v4707
    %4844 = vmatpush1.bf16.msra.mxu0 %v4706
    %4845 = vmatprep.mubr.bf16.mxu0 %v4375
    %4846 = vmatmul.mubr.bf16.gmra.mrb[0].mxu0 %v4374
    %v4847 = vpop.f32.mrb[0].mxu0
    %v4848 = vadd.f32 %v4807, %v4847
    %v4849 = vpop.f32.mrb[0].mxu0
    %v4850 = vadd.f32 %v4809, %v4849
    %v4851 = vpop.f32.mrb[0].mxu0
    %v4852 = vpop.f32.mrb[0].mxu0
    %4853 = vdwg.mxu0
    %4854 = vst [vmem:[%s13] sm:$0xff] %v4848
    %4855 = vst [vmem:[%s13 + $0x8] sm:$0xff] %v4850
    // Predicated region
    $region78: #{_forward_jit.1} parent=1 // pred_check
      _
    $region79: #{_forward_jit.1} parent=1 // pred_check_branch
      %4857 = sbr.rel (0) target = $region81
    $region80: #{_forward_jit.1} parent=1 // pred_region
      _
    $region81: #{_forward_jit.1} parent=1 // pred_fallthru
      _
    // Predicated region
    $region82: #{_forward_jit.1} parent=1 // pred_check
      _
    $region83: #{_forward_jit.1} parent=1 // pred_check_branch
      %4859 = sbr.rel (0) target = $region85
    $region84: #{_forward_jit.1} parent=1 // pred_region
      _
    $region85: #{_forward_jit.1} parent=1 // pred_fallthru
      _
    %4860 = vsyncpa [#allocation3], 1
    %4861 = vsyncpa [#allocation5], 1
    %4862 = vsyncpa [#allocation8], 1
    %4863 = vsyncpa [#allocation11], 1

</llo_original>
